<compile_context>
chip_gen: v5e
topology: v5e:2x2
jax: 0.10.0
libtpu: 0.0.40
codegen_flags: <defaults>
</compile_context>

<pallas_src>
import jax
import jax.numpy as jnp
from jax import lax
from jax.experimental import pallas as pl
from jax.experimental.pallas import tpu as pltpu

EPS = 1e-5  # PyTorch InstanceNorm2d default


def _reflect_pad_into(pad_ref, x, H, W):
    """Write reflect-pad(1) of x (H, W, C) into pad_ref (H+2, W+2, C)."""
    pad_ref[1:H + 1, 1:W + 1, :] = x
    # top / bottom rows (reflection of rows 1 and H-2)
    pad_ref[0:1, 1:W + 1, :] = x[1:2]
    pad_ref[H + 1:H + 2, 1:W + 1, :] = x[H - 2:H - 1]
    # left / right columns (reflection of padded cols 2 and W-1; covers corners)
    pad_ref[:, 0:1, :] = pad_ref[:, 2:3, :]
    pad_ref[:, W + 1:W + 2, :] = pad_ref[:, W - 1:W, :]


def _conv3x3_stacked(pad_ref, col_ref, w_ref, H, W, C):
    """3x3 'valid' conv on the padded VMEM tile -> (H*W, C) f32.

    col_ref: (H+2, W, 3C) scratch; the three kj column slabs of pad_ref are
    stacked along lanes at offsets {0, C, 2C}.  w_ref: (3, 3C, C) — one
    (kj,Cin)-stacked matrix per ki tap.  The ki shifts are free leading-axis
    slices; the MXU accumulates over K=3C internally, so only 3 dots / 2 adds
    per stage remain.
    """
    for kj in range(3):
        col_ref[:, :, kj * C:(kj + 1) * C] = pad_ref[:, kj:kj + W, :]
    dims = (((1,), (0,)), ((), ()))
    acc = lax.dot_general(col_ref[0:H].reshape(H * W, 3 * C), w_ref[0], dims,
                          preferred_element_type=jnp.float32)
    for ki in (1, 2):
        acc = acc + lax.dot_general(
            col_ref[ki:ki + H].reshape(H * W, 3 * C), w_ref[ki], dims,
            preferred_element_type=jnp.float32)
    return acc
    # Note: conv bias is intentionally omitted — a per-channel constant cancels
    # exactly in the following InstanceNorm(affine=False).


def _instance_norm(y, inv_n, relu=False):
    """Per-channel norm over axis 0 (H*W), biased variance; single read of y.

    Single-pass E[y^2]-E[y]^2 in f32 with >=0 clamp; with the bias removed the
    conv output is well centered, so cancellation is benign at these scales.
    """
    mean = jnp.sum(y, axis=0, keepdims=True) * inv_n
    var = jnp.sum(y * y, axis=0, keepdims=True) * inv_n - mean * mean
    var = jnp.maximum(var, 0.0)
    out = (y - mean) * lax.rsqrt(var + EPS)
    if relu:
        out = jnp.maximum(out, 0.0)
    return out


def resnet_block_kernel(x_ref, w1_ref, w2_ref, o_ref, pad_ref, col_ref):
    """Fused: pad->conv->IN->ReLU->pad->conv->IN->(+x), one sample per step."""
    _, H, W, C = o_ref.shape
    inv_n = 1.0 / float(H * W)
    mm_dtype = pad_ref.dtype

    # ---- stage 1: reflect-pad(x) -> conv3x3 -> IN -> ReLU (fused) ----
    _reflect_pad_into(pad_ref, x_ref[0].astype(mm_dtype), H, W)
    h = _conv3x3_stacked(pad_ref, col_ref, w1_ref, H, W, C)       # (H*W, C) f32
    h = _instance_norm(h, inv_n, relu=True)

    # TODO(synk): use_dropout=True branch (train-time Dropout(0.5)) not modeled;
    # eval-mode / use_dropout=False semantics implemented.

    # ---- stage 2: reflect-pad(h) -> conv3x3 -> IN -> residual ----
    _reflect_pad_into(pad_ref, h.reshape(H, W, C).astype(mm_dtype), H, W)
    y = _instance_norm(_conv3x3_stacked(pad_ref, col_ref, w2_ref, H, W, C),
                       inv_n)

    # Residual from the input tile still resident in VMEM (re-read, no live
    # f32 copy held across both stages).
    o_ref[0] = (x_ref[0].astype(jnp.float32)
                + y.reshape(H, W, C)).astype(o_ref.dtype)


def _vmem_limit_bytes(H, W, C, x_dtype, mm_dtype):
    """Working-set estimate (double-buffered IO + scratch + f32 temps)."""
    xb = H * W * C * jnp.dtype(x_dtype).itemsize
    mm = jnp.dtype(mm_dtype).itemsize
    scratch = (H + 2) * (W + 2) * C * mm + (H + 2) * W * 3 * C * mm
    temps = 4 * H * W * C * 4                 # f32 h / y / acc temporaries
    weights = 2 * 2 * 9 * C * C * mm          # two weights, double-buffered
    est = 2 * 2 * xb + 2 * xb + scratch + temps + weights
    try:
        cap = pltpu.get_tpu_info().vmem_capacity_bytes
    except Exception:
        cap = 64 << 20                        # assume smallest (v7x) if unknown
    return int(min(max(2 * est, 32 << 20), cap - (8 << 20)))


def resnet_block_forward_nhwc(x, params, use_bf16_matmul=True):
    """Native NHWC forward: out = x + conv_block(x). One fused pallas_call."""
    N, H, W, C = x.shape
    mm_dtype = jnp.bfloat16 if use_bf16_matmul else jnp.float32
    # HWIO (3,3,Cin,Cout) -> (3, 3*Cin, Cout): one K-stacked matrix per ki tap
    # (K index = kj*C + cin, matching the lane-stacked slab scratch).
    w1 = params["w1"].reshape(3, 3 * C, C).astype(mm_dtype)
    w2 = params["w2"].reshape(3, 3 * C, C).astype(mm_dtype)
    # b1/b2 deliberately NOT passed: bias before InstanceNorm is dead compute.

    return pl.pallas_call(
        resnet_block_kernel,
        out_shape=jax.ShapeDtypeStruct((N, H, W, C), x.dtype),
        grid=(N,),
        in_specs=[
            pl.BlockSpec((1, H, W, C), lambda n: (n, 0, 0, 0)),
            pl.BlockSpec((3, 3 * C, C), lambda n: (0, 0, 0)),
            pl.BlockSpec((3, 3 * C, C), lambda n: (0, 0, 0)),
        ],
        out_specs=pl.BlockSpec((1, H, W, C), lambda n: (n, 0, 0, 0)),
        scratch_shapes=[
            pltpu.VMEM((H + 2, W + 2, C), mm_dtype),      # reflect-pad buffer
            pltpu.VMEM((H + 2, W, 3 * C), mm_dtype),      # K-stacked kj slabs
        ],
        compiler_params=pltpu.CompilerParams(
            dimension_semantics=("parallel",),
            vmem_limit_bytes=_vmem_limit_bytes(H, W, C, x.dtype, mm_dtype)),
    )(x, w1, w2)


def resnet_block_forward(x_nchw, params, use_bf16_matmul=True):
    """NCHW wrapper (PyTorch layout parity); fast path is the NHWC entry."""
    x = jnp.transpose(x_nchw, (0, 2, 3, 1))
    y = resnet_block_forward_nhwc(x, params, use_bf16_matmul)
    return jnp.transpose(y, (0, 3, 1, 2))


def _reference_forward_nhwc(x, params):
    """Pure-JAX reference (lax conv, NHWC) matching the PyTorch module."""
    def conv3x3(x, w_hwio, b):
        xp = jnp.pad(x, ((0, 0), (1, 1), (1, 1), (0, 0)), mode="reflect")
        y = lax.conv_general_dilated(xp, w_hwio, (1, 1), "VALID",
                                     dimension_numbers=("NHWC", "HWIO", "NHWC"))
        return y + b[None, None, None, :]

    def inorm(y):
        m = jnp.mean(y, axis=(1, 2), keepdims=True)
        v = jnp.mean(jnp.square(y - m), axis=(1, 2), keepdims=True)
        return (y - m) * lax.rsqrt(v + EPS)

    h = jnp.maximum(inorm(conv3x3(x, params["w1"], params["b1"])), 0.0)
    return x + inorm(conv3x3(h, params["w2"], params["b2"]))


def init_params(key, dim, dtype=jnp.float32):
    k1, k2, k3, k4 = jax.random.split(key, 4)
    scale = 0.1
    return {
        "w1": (scale * jax.random.normal(k1, (3, 3, dim, dim))).astype(dtype),
        "b1": (scale * jax.random.normal(k2, (dim,))).astype(dtype),
        "w2": (scale * jax.random.normal(k3, (3, 3, dim, dim))).astype(dtype),
        "b2": (scale * jax.random.normal(k4, (dim,))).astype(dtype),
    }


if __name__ == "__main__":
    # NOTE: demo sizes only exercise 8/128 lanes — do not tune perf against
    # them; production CycleGAN is 64x64x256 (lane-dense C).
    key = jax.random.PRNGKey(0)
    kx, kp = jax.random.split(key)

    batch, dim, spatial = 2, 8, 16
    x = jax.random.normal(kx, (batch, spatial, spatial, dim), jnp.float32)  # NHWC
    params = init_params(kp, dim)

    ref = jax.block_until_ready(_reference_forward_nhwc(x, params))

    # f32 MXU path: strict check against the lax reference (bias cancellation
    # under InstanceNorm makes dropping b1/b2 numerically negligible).
    out_f32 = jax.block_until_ready(
        resnet_block_forward_nhwc(x, params, use_bf16_matmul=False))
    assert out_f32.shape == x.shape and out_f32.dtype == x.dtype
    assert jnp.max(jnp.abs(out_f32 - ref)) < 5e-4, "f32 path mismatch"

    # bf16 MXU fast path (default): looser tolerance (deliberate precision trade).
    out_bf16 = jax.block_until_ready(
        resnet_block_forward_nhwc(x, params, use_bf16_matmul=True))
    assert jnp.max(jnp.abs(out_bf16 - ref)) < 5e-2, "bf16 path mismatch"

    # NCHW wrapper parity (PyTorch layout convention).
    x_nchw = jnp.transpose(x, (0, 3, 1, 2))
    out_nchw = jax.block_until_ready(
        resnet_block_forward(x_nchw, params, use_bf16_matmul=False))
    assert jnp.max(jnp.abs(out_nchw - jnp.transpose(ref, (0, 3, 1, 2)))) < 5e-4

    print("KERNEL_OK")
</pallas_src>

<mosaic_0001>
module attributes {stable_mosaic.version = 11 : i64} {
  func.func @resnet_block_kernel(%arg0: i32, %arg1: memref<1x16x16x8xf32, #tpu.memory_space<vmem>>, %arg2: memref<3x24x8xf32, #tpu.memory_space<vmem>>, %arg3: memref<3x24x8xf32, #tpu.memory_space<vmem>>, %arg4: memref<1x16x16x8xf32, #tpu.memory_space<vmem>>, %arg5: memref<18x18x8xf32, #tpu.memory_space<vmem>>, %arg6: memref<18x16x24xf32, #tpu.memory_space<vmem>>) attributes {dimension_semantics = [#tpu.dimension_semantics<parallel>], iteration_bounds = array<i64: 2>, scalar_prefetch = 0 : i64, scratch_operands = 2 : i64, tpu.core_type = #tpu.core_type<tc>, window_params = [{transform_indices = @transform_0, window_bounds = array<i64: 1, 16, 16, 8>}, {pipeline_mode = #tpu.pipeline_mode<synchronous>, transform_indices = @transform_1, window_bounds = array<i64: 3, 24, 8>}, {pipeline_mode = #tpu.pipeline_mode<synchronous>, transform_indices = @transform_2, window_bounds = array<i64: 3, 24, 8>}, {transform_indices = @transform_3, window_bounds = array<i64: 1, 16, 16, 8>}]} {
    %c0 = arith.constant 0 : index
    %c0_0 = arith.constant 0 : index
    %c0_1 = arith.constant 0 : index
    %c0_2 = arith.constant 0 : index
    %0 = vector.load %arg1[%c0, %c0_0, %c0_1, %c0_2] : memref<1x16x16x8xf32, #tpu.memory_space<vmem>>, vector<1x16x16x8xf32>
    %1 = vector.shape_cast %0 : vector<1x16x16x8xf32> to vector<16x16x8xf32>
    %c1 = arith.constant 1 : index
    %c1_3 = arith.constant 1 : index
    %c0_4 = arith.constant 0 : index
    %2 = vector.load %arg5[%c1, %c1_3, %c0_4] : memref<18x18x8xf32, #tpu.memory_space<vmem>>, vector<16x16x8xf32>
    tpu.vector_store %arg5[%c1, %c1_3, %c0_4], %1 {strides = array<i32>} : memref<18x18x8xf32, #tpu.memory_space<vmem>>, vector<16x16x8xf32>,
    %3 = vector.extract_strided_slice %1 {offsets = [1, 0, 0], sizes = [1, 16, 8], strides = [1, 1, 1]} : vector<16x16x8xf32> to vector<1x16x8xf32>
    %c0_5 = arith.constant 0 : index
    %c1_6 = arith.constant 1 : index
    %c0_7 = arith.constant 0 : index
    %4 = vector.load %arg5[%c0_5, %c1_6, %c0_7] : memref<18x18x8xf32, #tpu.memory_space<vmem>>, vector<1x16x8xf32>
    tpu.vector_store %arg5[%c0_5, %c1_6, %c0_7], %3 {strides = array<i32>} : memref<18x18x8xf32, #tpu.memory_space<vmem>>, vector<1x16x8xf32>,
    %5 = vector.extract_strided_slice %1 {offsets = [14, 0, 0], sizes = [1, 16, 8], strides = [1, 1, 1]} : vector<16x16x8xf32> to vector<1x16x8xf32>
    %c17 = arith.constant 17 : index
    %c1_8 = arith.constant 1 : index
    %c0_9 = arith.constant 0 : index
    %6 = vector.load %arg5[%c17, %c1_8, %c0_9] : memref<18x18x8xf32, #tpu.memory_space<vmem>>, vector<1x16x8xf32>
    tpu.vector_store %arg5[%c17, %c1_8, %c0_9], %5 {strides = array<i32>} : memref<18x18x8xf32, #tpu.memory_space<vmem>>, vector<1x16x8xf32>,
    %c0_10 = arith.constant 0 : index
    %c2 = arith.constant 2 : index
    %c0_11 = arith.constant 0 : index
    %7 = vector.load %arg5[%c0_10, %c2, %c0_11] : memref<18x18x8xf32, #tpu.memory_space<vmem>>, vector<18x1x8xf32>
    %c0_12 = arith.constant 0 : index
    %c0_13 = arith.constant 0 : index
    %c0_14 = arith.constant 0 : index
    %8 = vector.load %arg5[%c0_12, %c0_13, %c0_14] : memref<18x18x8xf32, #tpu.memory_space<vmem>>, vector<18x1x8xf32>
    tpu.vector_store %arg5[%c0_12, %c0_13, %c0_14], %7 {strides = array<i32>} : memref<18x18x8xf32, #tpu.memory_space<vmem>>, vector<18x1x8xf32>,
    %c0_15 = arith.constant 0 : index
    %c15 = arith.constant 15 : index
    %c0_16 = arith.constant 0 : index
    %9 = vector.load %arg5[%c0_15, %c15, %c0_16] : memref<18x18x8xf32, #tpu.memory_space<vmem>>, vector<18x1x8xf32>
    %c0_17 = arith.constant 0 : index
    %c17_18 = arith.constant 17 : index
    %c0_19 = arith.constant 0 : index
    %10 = vector.load %arg5[%c0_17, %c17_18, %c0_19] : memref<18x18x8xf32, #tpu.memory_space<vmem>>, vector<18x1x8xf32>
    tpu.vector_store %arg5[%c0_17, %c17_18, %c0_19], %9 {strides = array<i32>} : memref<18x18x8xf32, #tpu.memory_space<vmem>>, vector<18x1x8xf32>,
    %c0_20 = arith.constant 0 : index
    %c0_21 = arith.constant 0 : index
    %c0_22 = arith.constant 0 : index
    %11 = vector.load %arg5[%c0_20, %c0_21, %c0_22] : memref<18x18x8xf32, #tpu.memory_space<vmem>>, vector<18x16x8xf32>
    %c0_23 = arith.constant 0 : index
    %c0_24 = arith.constant 0 : index
    %c0_25 = arith.constant 0 : index
    %12 = vector.load %arg6[%c0_23, %c0_24, %c0_25] : memref<18x16x24xf32, #tpu.memory_space<vmem>>, vector<18x16x8xf32>
    tpu.vector_store %arg6[%c0_23, %c0_24, %c0_25], %11 {strides = array<i32>} : memref<18x16x24xf32, #tpu.memory_space<vmem>>, vector<18x16x8xf32>,
    %c0_26 = arith.constant 0 : index
    %c1_27 = arith.constant 1 : index
    %c0_28 = arith.constant 0 : index
    %13 = vector.load %arg5[%c0_26, %c1_27, %c0_28] : memref<18x18x8xf32, #tpu.memory_space<vmem>>, vector<18x16x8xf32>
    %c0_29 = arith.constant 0 : index
    %c0_30 = arith.constant 0 : index
    %c8 = arith.constant 8 : index
    %14 = vector.load %arg6[%c0_29, %c0_30, %c8] : memref<18x16x24xf32, #tpu.memory_space<vmem>>, vector<18x16x8xf32>
    tpu.vector_store %arg6[%c0_29, %c0_30, %c8], %13 {strides = array<i32>} : memref<18x16x24xf32, #tpu.memory_space<vmem>>, vector<18x16x8xf32>,
    %c0_31 = arith.constant 0 : index
    %c2_32 = arith.constant 2 : index
    %c0_33 = arith.constant 0 : index
    %15 = vector.load %arg5[%c0_31, %c2_32, %c0_33] : memref<18x18x8xf32, #tpu.memory_space<vmem>>, vector<18x16x8xf32>
    %c0_34 = arith.constant 0 : index
    %c0_35 = arith.constant 0 : index
    %c16 = arith.constant 16 : index
    %16 = vector.load %arg6[%c0_34, %c0_35, %c16] : memref<18x16x24xf32, #tpu.memory_space<vmem>>, vector<18x16x8xf32>
    tpu.vector_store %arg6[%c0_34, %c0_35, %c16], %15 {strides = array<i32>} : memref<18x16x24xf32, #tpu.memory_space<vmem>>, vector<18x16x8xf32>,
    %c0_36 = arith.constant 0 : index
    %c0_37 = arith.constant 0 : index
    %c0_38 = arith.constant 0 : index
    %17 = vector.load %arg6[%c0_36, %c0_37, %c0_38] : memref<18x16x24xf32, #tpu.memory_space<vmem>>, vector<16x16x24xf32>
    %18 = vector.shape_cast %17 : vector<16x16x24xf32> to vector<256x24xf32>
    %c0_39 = arith.constant 0 : index
    %c0_40 = arith.constant 0 : index
    %c0_41 = arith.constant 0 : index
    %19 = vector.load %arg2[%c0_39, %c0_40, %c0_41] : memref<3x24x8xf32, #tpu.memory_space<vmem>>, vector<1x24x8xf32>
    %20 = vector.shape_cast %19 : vector<1x24x8xf32> to vector<24x8xf32>
    %cst = arith.constant dense<0.000000e+00> : vector<256x8xf32>
    %21 = tpu.matmul %18, %20, %cst {dimension_numbers = #tpu.dot_dimension_numbers<[1], [0], [0], [1], [0, 0, 1, 1], [], []>} : vector<256x24xf32>, vector<24x8xf32>, vector<256x8xf32> -> vector<256x8xf32>
    %c1_42 = arith.constant 1 : index
    %c0_43 = arith.constant 0 : index
    %c0_44 = arith.constant 0 : index
    %22 = vector.load %arg6[%c1_42, %c0_43, %c0_44] : memref<18x16x24xf32, #tpu.memory_space<vmem>>, vector<16x16x24xf32>
    %23 = vector.shape_cast %22 : vector<16x16x24xf32> to vector<256x24xf32>
    %c1_45 = arith.constant 1 : index
    %c0_46 = arith.constant 0 : index
    %c0_47 = arith.constant 0 : index
    %24 = vector.load %arg2[%c1_45, %c0_46, %c0_47] : memref<3x24x8xf32, #tpu.memory_space<vmem>>, vector<1x24x8xf32>
    %25 = vector.shape_cast %24 : vector<1x24x8xf32> to vector<24x8xf32>
    %cst_48 = arith.constant dense<0.000000e+00> : vector<256x8xf32>
    %26 = tpu.matmul %23, %25, %cst_48 {dimension_numbers = #tpu.dot_dimension_numbers<[1], [0], [0], [1], [0, 0, 1, 1], [], []>} : vector<256x24xf32>, vector<24x8xf32>, vector<256x8xf32> -> vector<256x8xf32>
    %27 = arith.addf %21, %26 : vector<256x8xf32>
    %c2_49 = arith.constant 2 : index
    %c0_50 = arith.constant 0 : index
    %c0_51 = arith.constant 0 : index
    %28 = vector.load %arg6[%c2_49, %c0_50, %c0_51] : memref<18x16x24xf32, #tpu.memory_space<vmem>>, vector<16x16x24xf32>
    %29 = vector.shape_cast %28 : vector<16x16x24xf32> to vector<256x24xf32>
    %c2_52 = arith.constant 2 : index
    %c0_53 = arith.constant 0 : index
    %c0_54 = arith.constant 0 : index
    %30 = vector.load %arg2[%c2_52, %c0_53, %c0_54] : memref<3x24x8xf32, #tpu.memory_space<vmem>>, vector<1x24x8xf32>
    %31 = vector.shape_cast %30 : vector<1x24x8xf32> to vector<24x8xf32>
    %cst_55 = arith.constant dense<0.000000e+00> : vector<256x8xf32>
    %32 = tpu.matmul %29, %31, %cst_55 {dimension_numbers = #tpu.dot_dimension_numbers<[1], [0], [0], [1], [0, 0, 1, 1], [], []>} : vector<256x24xf32>, vector<24x8xf32>, vector<256x8xf32> -> vector<256x8xf32>
    %33 = arith.addf %27, %32 : vector<256x8xf32>
    %cst_56 = arith.constant dense<0.000000e+00> : vector<8xf32>
    %34 = vector.multi_reduction <add>, %33, %cst_56 [0] : vector<256x8xf32> to vector<8xf32>
    %35 = vector.shape_cast %34 : vector<8xf32> to vector<1x8xf32>
    %cst_57 = arith.constant 3.906250e-03 : f32
    %36 = vector.broadcast %cst_57 : f32 to vector<1x8xf32>
    %37 = arith.mulf %35, %36 : vector<1x8xf32>
    %38 = arith.mulf %33, %33 : vector<256x8xf32>
    %cst_58 = arith.constant dense<0.000000e+00> : vector<8xf32>
    %39 = vector.multi_reduction <add>, %38, %cst_58 [0] : vector<256x8xf32> to vector<8xf32>
    %40 = vector.shape_cast %39 : vector<8xf32> to vector<1x8xf32>
    %cst_59 = arith.constant 3.906250e-03 : f32
    %41 = vector.broadcast %cst_59 : f32 to vector<1x8xf32>
    %42 = arith.mulf %40, %41 : vector<1x8xf32>
    %43 = arith.mulf %37, %37 : vector<1x8xf32>
    %44 = arith.subf %42, %43 : vector<1x8xf32>
    %cst_60 = arith.constant 0.000000e+00 : f32
    %45 = vector.broadcast %cst_60 : f32 to vector<1x8xf32>
    %46 = arith.maximumf %44, %45 : vector<1x8xf32>
    %47 = vector.broadcast %37 : vector<1x8xf32> to vector<256x8xf32>
    %48 = arith.subf %33, %47 : vector<256x8xf32>
    %cst_61 = arith.constant 9.99999974E-6 : f32
    %49 = vector.broadcast %cst_61 : f32 to vector<1x8xf32>
    %50 = arith.addf %46, %49 : vector<1x8xf32>
    %51 = math.rsqrt %50 : vector<1x8xf32>
    %52 = vector.broadcast %51 : vector<1x8xf32> to vector<256x8xf32>
    %53 = arith.mulf %48, %52 : vector<256x8xf32>
    %cst_62 = arith.constant 0.000000e+00 : f32
    %54 = vector.broadcast %cst_62 : f32 to vector<256x8xf32>
    %55 = arith.maximumf %53, %54 : vector<256x8xf32>
    %56 = vector.shape_cast %55 : vector<256x8xf32> to vector<16x16x8xf32>
    %c1_63 = arith.constant 1 : index
    %c1_64 = arith.constant 1 : index
    %c0_65 = arith.constant 0 : index
    %57 = vector.load %arg5[%c1_63, %c1_64, %c0_65] : memref<18x18x8xf32, #tpu.memory_space<vmem>>, vector<16x16x8xf32>
    tpu.vector_store %arg5[%c1_63, %c1_64, %c0_65], %56 {strides = array<i32>} : memref<18x18x8xf32, #tpu.memory_space<vmem>>, vector<16x16x8xf32>,
    %58 = vector.extract_strided_slice %56 {offsets = [1, 0, 0], sizes = [1, 16, 8], strides = [1, 1, 1]} : vector<16x16x8xf32> to vector<1x16x8xf32>
    %c0_66 = arith.constant 0 : index
    %c1_67 = arith.constant 1 : index
    %c0_68 = arith.constant 0 : index
    %59 = vector.load %arg5[%c0_66, %c1_67, %c0_68] : memref<18x18x8xf32, #tpu.memory_space<vmem>>, vector<1x16x8xf32>
    tpu.vector_store %arg5[%c0_66, %c1_67, %c0_68], %58 {strides = array<i32>} : memref<18x18x8xf32, #tpu.memory_space<vmem>>, vector<1x16x8xf32>,
    %60 = vector.extract_strided_slice %56 {offsets = [14, 0, 0], sizes = [1, 16, 8], strides = [1, 1, 1]} : vector<16x16x8xf32> to vector<1x16x8xf32>
    %c17_69 = arith.constant 17 : index
    %c1_70 = arith.constant 1 : index
    %c0_71 = arith.constant 0 : index
    %61 = vector.load %arg5[%c17_69, %c1_70, %c0_71] : memref<18x18x8xf32, #tpu.memory_space<vmem>>, vector<1x16x8xf32>
    tpu.vector_store %arg5[%c17_69, %c1_70, %c0_71], %60 {strides = array<i32>} : memref<18x18x8xf32, #tpu.memory_space<vmem>>, vector<1x16x8xf32>,
    %c0_72 = arith.constant 0 : index
    %c2_73 = arith.constant 2 : index
    %c0_74 = arith.constant 0 : index
    %62 = vector.load %arg5[%c0_72, %c2_73, %c0_74] : memref<18x18x8xf32, #tpu.memory_space<vmem>>, vector<18x1x8xf32>
    %c0_75 = arith.constant 0 : index
    %c0_76 = arith.constant 0 : index
    %c0_77 = arith.constant 0 : index
    %63 = vector.load %arg5[%c0_75, %c0_76, %c0_77] : memref<18x18x8xf32, #tpu.memory_space<vmem>>, vector<18x1x8xf32>
    tpu.vector_store %arg5[%c0_75, %c0_76, %c0_77], %62 {strides = array<i32>} : memref<18x18x8xf32, #tpu.memory_space<vmem>>, vector<18x1x8xf32>,
    %c0_78 = arith.constant 0 : index
    %c15_79 = arith.constant 15 : index
    %c0_80 = arith.constant 0 : index
    %64 = vector.load %arg5[%c0_78, %c15_79, %c0_80] : memref<18x18x8xf32, #tpu.memory_space<vmem>>, vector<18x1x8xf32>
    %c0_81 = arith.constant 0 : index
    %c17_82 = arith.constant 17 : index
    %c0_83 = arith.constant 0 : index
    %65 = vector.load %arg5[%c0_81, %c17_82, %c0_83] : memref<18x18x8xf32, #tpu.memory_space<vmem>>, vector<18x1x8xf32>
    tpu.vector_store %arg5[%c0_81, %c17_82, %c0_83], %64 {strides = array<i32>} : memref<18x18x8xf32, #tpu.memory_space<vmem>>, vector<18x1x8xf32>,
    %c0_84 = arith.constant 0 : index
    %c0_85 = arith.constant 0 : index
    %c0_86 = arith.constant 0 : index
    %66 = vector.load %arg5[%c0_84, %c0_85, %c0_86] : memref<18x18x8xf32, #tpu.memory_space<vmem>>, vector<18x16x8xf32>
    %c0_87 = arith.constant 0 : index
    %c0_88 = arith.constant 0 : index
    %c0_89 = arith.constant 0 : index
    %67 = vector.load %arg6[%c0_87, %c0_88, %c0_89] : memref<18x16x24xf32, #tpu.memory_space<vmem>>, vector<18x16x8xf32>
    tpu.vector_store %arg6[%c0_87, %c0_88, %c0_89], %66 {strides = array<i32>} : memref<18x16x24xf32, #tpu.memory_space<vmem>>, vector<18x16x8xf32>,
    %c0_90 = arith.constant 0 : index
    %c1_91 = arith.constant 1 : index
    %c0_92 = arith.constant 0 : index
    %68 = vector.load %arg5[%c0_90, %c1_91, %c0_92] : memref<18x18x8xf32, #tpu.memory_space<vmem>>, vector<18x16x8xf32>
    %c0_93 = arith.constant 0 : index
    %c0_94 = arith.constant 0 : index
    %c8_95 = arith.constant 8 : index
    %69 = vector.load %arg6[%c0_93, %c0_94, %c8_95] : memref<18x16x24xf32, #tpu.memory_space<vmem>>, vector<18x16x8xf32>
    tpu.vector_store %arg6[%c0_93, %c0_94, %c8_95], %68 {strides = array<i32>} : memref<18x16x24xf32, #tpu.memory_space<vmem>>, vector<18x16x8xf32>,
    %c0_96 = arith.constant 0 : index
    %c2_97 = arith.constant 2 : index
    %c0_98 = arith.constant 0 : index
    %70 = vector.load %arg5[%c0_96, %c2_97, %c0_98] : memref<18x18x8xf32, #tpu.memory_space<vmem>>, vector<18x16x8xf32>
    %c0_99 = arith.constant 0 : index
    %c0_100 = arith.constant 0 : index
    %c16_101 = arith.constant 16 : index
    %71 = vector.load %arg6[%c0_99, %c0_100, %c16_101] : memref<18x16x24xf32, #tpu.memory_space<vmem>>, vector<18x16x8xf32>
    tpu.vector_store %arg6[%c0_99, %c0_100, %c16_101], %70 {strides = array<i32>} : memref<18x16x24xf32, #tpu.memory_space<vmem>>, vector<18x16x8xf32>,
    %c0_102 = arith.constant 0 : index
    %c0_103 = arith.constant 0 : index
    %c0_104 = arith.constant 0 : index
    %72 = vector.load %arg6[%c0_102, %c0_103, %c0_104] : memref<18x16x24xf32, #tpu.memory_space<vmem>>, vector<16x16x24xf32>
    %73 = vector.shape_cast %72 : vector<16x16x24xf32> to vector<256x24xf32>
    %c0_105 = arith.constant 0 : index
    %c0_106 = arith.constant 0 : index
    %c0_107 = arith.constant 0 : index
    %74 = vector.load %arg3[%c0_105, %c0_106, %c0_107] : memref<3x24x8xf32, #tpu.memory_space<vmem>>, vector<1x24x8xf32>
    %75 = vector.shape_cast %74 : vector<1x24x8xf32> to vector<24x8xf32>
    %cst_108 = arith.constant dense<0.000000e+00> : vector<256x8xf32>
    %76 = tpu.matmul %73, %75, %cst_108 {dimension_numbers = #tpu.dot_dimension_numbers<[1], [0], [0], [1], [0, 0, 1, 1], [], []>} : vector<256x24xf32>, vector<24x8xf32>, vector<256x8xf32> -> vector<256x8xf32>
    %c1_109 = arith.constant 1 : index
    %c0_110 = arith.constant 0 : index
    %c0_111 = arith.constant 0 : index
    %77 = vector.load %arg6[%c1_109, %c0_110, %c0_111] : memref<18x16x24xf32, #tpu.memory_space<vmem>>, vector<16x16x24xf32>
    %78 = vector.shape_cast %77 : vector<16x16x24xf32> to vector<256x24xf32>
    %c1_112 = arith.constant 1 : index
    %c0_113 = arith.constant 0 : index
    %c0_114 = arith.constant 0 : index
    %79 = vector.load %arg3[%c1_112, %c0_113, %c0_114] : memref<3x24x8xf32, #tpu.memory_space<vmem>>, vector<1x24x8xf32>
    %80 = vector.shape_cast %79 : vector<1x24x8xf32> to vector<24x8xf32>
    %cst_115 = arith.constant dense<0.000000e+00> : vector<256x8xf32>
    %81 = tpu.matmul %78, %80, %cst_115 {dimension_numbers = #tpu.dot_dimension_numbers<[1], [0], [0], [1], [0, 0, 1, 1], [], []>} : vector<256x24xf32>, vector<24x8xf32>, vector<256x8xf32> -> vector<256x8xf32>
    %82 = arith.addf %76, %81 : vector<256x8xf32>
    %c2_116 = arith.constant 2 : index
    %c0_117 = arith.constant 0 : index
    %c0_118 = arith.constant 0 : index
    %83 = vector.load %arg6[%c2_116, %c0_117, %c0_118] : memref<18x16x24xf32, #tpu.memory_space<vmem>>, vector<16x16x24xf32>
    %84 = vector.shape_cast %83 : vector<16x16x24xf32> to vector<256x24xf32>
    %c2_119 = arith.constant 2 : index
    %c0_120 = arith.constant 0 : index
    %c0_121 = arith.constant 0 : index
    %85 = vector.load %arg3[%c2_119, %c0_120, %c0_121] : memref<3x24x8xf32, #tpu.memory_space<vmem>>, vector<1x24x8xf32>
    %86 = vector.shape_cast %85 : vector<1x24x8xf32> to vector<24x8xf32>
    %cst_122 = arith.constant dense<0.000000e+00> : vector<256x8xf32>
    %87 = tpu.matmul %84, %86, %cst_122 {dimension_numbers = #tpu.dot_dimension_numbers<[1], [0], [0], [1], [0, 0, 1, 1], [], []>} : vector<256x24xf32>, vector<24x8xf32>, vector<256x8xf32> -> vector<256x8xf32>
    %88 = arith.addf %82, %87 : vector<256x8xf32>
    %cst_123 = arith.constant dense<0.000000e+00> : vector<8xf32>
    %89 = vector.multi_reduction <add>, %88, %cst_123 [0] : vector<256x8xf32> to vector<8xf32>
    %90 = vector.shape_cast %89 : vector<8xf32> to vector<1x8xf32>
    %cst_124 = arith.constant 3.906250e-03 : f32
    %91 = vector.broadcast %cst_124 : f32 to vector<1x8xf32>
    %92 = arith.mulf %90, %91 : vector<1x8xf32>
    %93 = arith.mulf %88, %88 : vector<256x8xf32>
    %cst_125 = arith.constant dense<0.000000e+00> : vector<8xf32>
    %94 = vector.multi_reduction <add>, %93, %cst_125 [0] : vector<256x8xf32> to vector<8xf32>
    %95 = vector.shape_cast %94 : vector<8xf32> to vector<1x8xf32>
    %cst_126 = arith.constant 3.906250e-03 : f32
    %96 = vector.broadcast %cst_126 : f32 to vector<1x8xf32>
    %97 = arith.mulf %95, %96 : vector<1x8xf32>
    %98 = arith.mulf %92, %92 : vector<1x8xf32>
    %99 = arith.subf %97, %98 : vector<1x8xf32>
    %cst_127 = arith.constant 0.000000e+00 : f32
    %100 = vector.broadcast %cst_127 : f32 to vector<1x8xf32>
    %101 = arith.maximumf %99, %100 : vector<1x8xf32>
    %102 = vector.broadcast %92 : vector<1x8xf32> to vector<256x8xf32>
    %103 = arith.subf %88, %102 : vector<256x8xf32>
    %cst_128 = arith.constant 9.99999974E-6 : f32
    %104 = vector.broadcast %cst_128 : f32 to vector<1x8xf32>
    %105 = arith.addf %101, %104 : vector<1x8xf32>
    %106 = math.rsqrt %105 : vector<1x8xf32>
    %107 = vector.broadcast %106 : vector<1x8xf32> to vector<256x8xf32>
    %108 = arith.mulf %103, %107 : vector<256x8xf32>
    %c0_129 = arith.constant 0 : index
    %c0_130 = arith.constant 0 : index
    %c0_131 = arith.constant 0 : index
    %c0_132 = arith.constant 0 : index
    %109 = vector.load %arg1[%c0_129, %c0_130, %c0_131, %c0_132] : memref<1x16x16x8xf32, #tpu.memory_space<vmem>>, vector<1x16x16x8xf32>
    %110 = vector.shape_cast %109 : vector<1x16x16x8xf32> to vector<16x16x8xf32>
    %111 = vector.shape_cast %108 : vector<256x8xf32> to vector<16x16x8xf32>
    %112 = arith.addf %110, %111 : vector<16x16x8xf32>
    %c0_133 = arith.constant 0 : index
    %c0_134 = arith.constant 0 : index
    %c0_135 = arith.constant 0 : index
    %c0_136 = arith.constant 0 : index
    %113 = vector.load %arg4[%c0_133, %c0_134, %c0_135, %c0_136] : memref<1x16x16x8xf32, #tpu.memory_space<vmem>>, vector<1x16x16x8xf32>
    %114 = vector.shape_cast %113 : vector<1x16x16x8xf32> to vector<16x16x8xf32>
    %115 = vector.shape_cast %112 : vector<16x16x8xf32> to vector<1x16x16x8xf32>
    tpu.vector_store %arg4[%c0_133, %c0_134, %c0_135, %c0_136], %115 {strides = array<i32>} : memref<1x16x16x8xf32, #tpu.memory_space<vmem>>, vector<1x16x16x8xf32>,
    return
  }
  func.func @transform_0(%arg0: i32) -> (i32, i32, i32, i32) {
    %c0_i32 = arith.constant 0 : i32
    %c0_i32_0 = arith.constant 0 : i32
    %c0_i32_1 = arith.constant 0 : i32
    %c0_i32_2 = arith.constant 0 : i32
    return %arg0, %c0_i32, %c0_i32_0, %c0_i32_1 : i32, i32, i32, i32
  }
  func.func @transform_1(%arg0: i32) -> (i32, i32, i32) {
    %c0_i32 = arith.constant 0 : i32
    %c0_i32_0 = arith.constant 0 : i32
    %c0_i32_1 = arith.constant 0 : i32
    %c0_i32_2 = arith.constant 0 : i32
    return %c0_i32, %c0_i32_0, %c0_i32_1 : i32, i32, i32
  }
  func.func @transform_2(%arg0: i32) -> (i32, i32, i32) {
    %c0_i32 = arith.constant 0 : i32
    %c0_i32_0 = arith.constant 0 : i32
    %c0_i32_1 = arith.constant 0 : i32
    %c0_i32_2 = arith.constant 0 : i32
    return %c0_i32, %c0_i32_0, %c0_i32_1 : i32, i32, i32
  }
  func.func @transform_3(%arg0: i32) -> (i32, i32, i32, i32) {
    %c0_i32 = arith.constant 0 : i32
    %c0_i32_0 = arith.constant 0 : i32
    %c0_i32_1 = arith.constant 0 : i32
    %c0_i32_2 = arith.constant 0 : i32
    return %arg0, %c0_i32, %c0_i32_0, %c0_i32_1 : i32, i32, i32, i32
  }
}

</mosaic_0001>

<llo_original>
// kernel: tpu_custom_call.1
$region0: #{tpu_custom_call.1}
  #allocation0 [shape = 'u32[]', space=smem, size = 0x4, offset = 0x4, fixed_abs, tag = 'smem constant byte address 0x4 - core index']
  #allocation1 [shape = 'u32[72,128]{1,0:T(1,128)}', space=vmem, size = 0x9000, scoped, tag = 'internal scratch']
  #allocation2 [shape = 'f32[18,18,8]{2,1,0:T(8,128)}', space=vmem, size = 0x36000, scoped, tag = 'scratch operand']
  #allocation3 [shape = 'f32[18,16,24]{2,1,0:T(8,128)}', space=vmem, size = 0x24000, scoped, tag = 'scratch operand']
  %s0 = inlined_call_operand.vmem [shape: f32[2,16,16,8], index: 0, kind: input, shape index: {}]
  %s1 = inlined_call_operand.vmem [shape: f32[3,24,8], index: 1, kind: input, shape index: {}]
  %s2 = inlined_call_operand.vmem [shape: f32[3,24,8], index: 2, kind: input, shape index: {}]
  %s3 = inlined_call_operand.vmem [shape: f32[2,16,16,8], index: 3, kind: output, shape index: {}]
  %s4 = sld [smem:[#allocation0]]
  $region45: #{tpu_custom_call.1} parent=0
    _
  %s6 = ssub.s32 1, %s4
  %s7 = scalar_select 0, %s6, %s4
  loop: start=0, step=1, limit=4
  $region2: #{tpu_custom_call.1} parent=0 // loop_pre_header
    _
  $region3: #{tpu_custom_call.1} parent=0 // loop_header
    %s9 = sphi 0, %s13
    %p10 = scmp.ge.s32.totalorder %s9, 4
    %s19 = sphi 0, %s21
    %s22 = sphi 0, %s19
    %s23 = sphi 0, %s22
    %s39 = sphi 0, %s23
    %s43 = sphi 0, %s43
    %s45 = sphi 0, %s43
    %s46 = sphi 0, %s45
    %s60 = sphi 0, %s46
    %s64 = sphi 0, %s64
    %s66 = sphi 0, %s64
    %s67 = sphi 0, %s66
    %s81 = sphi 0, %s67
    %s87 = sphi 0, %s89
    %s90 = sphi 0, %s87
    %s91 = sphi 0, %s90
    %s107 = sphi 0, %s91
  $region4: #{tpu_custom_call.1} parent=0 // loop_header_branch
    %12 = sbr.rel (%p10) target = $region8
  $region5: #{tpu_custom_call.1} parent=0 // loop_body
    %s14 = ssub.s32 %s9, 1
    %s15 = ssub.s32 %s9, 2
    %s16 = sadd.s32 %s9, 1
    %s17 = ssub.s32 %s9, %s16
    %p18 = scmp.eq.s32.totalorder %s17, 0
    %s20 = sadd.s32 %s19, 1
    %s21 = scalar_select %p18, %s19, %s20
    %p24 = pneg %p18
    %p25 = scmp.eq.s32.totalorder %s9, 1
    %p26 = por %p24, %p25
    %p27 = scmp.ne.s32.totalorder %s19, %s22
    %p28 = scmp.eq.s32.totalorder %s9, 0
    %p29 = por %p27, %p28
    %p30 = scmp.ne.s32.totalorder %s19, %s22
    %p31 = scmp.eq.s32.totalorder %s14, 1
    %p32 = por %p30, %p31
    %p33 = scmp.ne.s32.totalorder %s22, %s23
    %p34 = scmp.eq.s32.totalorder %s14, 0
    %p35 = por %p33, %p34
    %p36 = scmp.ne.s32.totalorder %s22, %s23
    %p37 = scmp.eq.s32.totalorder %s15, 1
    %p38 = por %p36, %p37
    %p40 = scmp.ne.s32.totalorder %s23, %s39
    %p41 = scmp.eq.s32.totalorder %s15, 0
    %p42 = por %p40, %p41
    %s44 = sadd.s32 %s43, 1
    %p47 = scmp.eq.s32.totalorder %s9, 1
    %p48 = scmp.ne.s32.totalorder %s43, %s45
    %p49 = scmp.eq.s32.totalorder %s9, 0
    %p50 = por %p48, %p49
    %p51 = scmp.ne.s32.totalorder %s43, %s45
    %p52 = scmp.eq.s32.totalorder %s14, 1
    %p53 = por %p51, %p52
    %p54 = scmp.ne.s32.totalorder %s45, %s46
    %p55 = scmp.eq.s32.totalorder %s14, 0
    %p56 = por %p54, %p55
    %p57 = scmp.ne.s32.totalorder %s45, %s46
    %p58 = scmp.eq.s32.totalorder %s15, 1
    %p59 = por %p57, %p58
    %p61 = scmp.ne.s32.totalorder %s46, %s60
    %p62 = scmp.eq.s32.totalorder %s15, 0
    %p63 = por %p61, %p62
    %s65 = sadd.s32 %s64, 1
    %p68 = scmp.eq.s32.totalorder %s9, 1
    %p69 = scmp.ne.s32.totalorder %s64, %s66
    %p70 = scmp.eq.s32.totalorder %s9, 0
    %p71 = por %p69, %p70
    %p72 = scmp.ne.s32.totalorder %s64, %s66
    %p73 = scmp.eq.s32.totalorder %s14, 1
    %p74 = por %p72, %p73
    %p75 = scmp.ne.s32.totalorder %s66, %s67
    %p76 = scmp.eq.s32.totalorder %s14, 0
    %p77 = por %p75, %p76
    %p78 = scmp.ne.s32.totalorder %s66, %s67
    %p79 = scmp.eq.s32.totalorder %s15, 1
    %p80 = por %p78, %p79
    %p82 = scmp.ne.s32.totalorder %s67, %s81
    %p83 = scmp.eq.s32.totalorder %s15, 0
    %p84 = por %p82, %p83
    %s85 = ssub.s32 %s9, %s16
    %p86 = scmp.eq.s32.totalorder %s85, 0
    %s88 = sadd.s32 %s87, 1
    %s89 = scalar_select %p86, %s87, %s88
    %p92 = pneg %p86
    %p93 = scmp.eq.s32.totalorder %s9, 1
    %p94 = por %p92, %p93
    %p95 = scmp.ne.s32.totalorder %s87, %s90
    %p96 = scmp.eq.s32.totalorder %s9, 0
    %p97 = por %p95, %p96
    %p98 = scmp.ne.s32.totalorder %s87, %s90
    %p99 = scmp.eq.s32.totalorder %s14, 1
    %p100 = por %p98, %p99
    %p101 = scmp.ne.s32.totalorder %s90, %s91
    %p102 = scmp.eq.s32.totalorder %s14, 0
    %p103 = por %p101, %p102
    %p104 = scmp.ne.s32.totalorder %s90, %s91
    %p105 = scmp.eq.s32.totalorder %s15, 1
    %p106 = por %p104, %p105
    %p108 = scmp.ne.s32.totalorder %s91, %s107
    %p109 = scmp.eq.s32.totalorder %s15, 0
    %p110 = por %p108, %p109
    %p111 = scmp.le.s32.totalorder 1, %s9
    %p112 = scmp.lt.s32.totalorder %s9, 3
    %p113 = pnand %p111, %p112
    %p114 = pneg %p113
    // Predicated region
    $region9: #{tpu_custom_call.1} parent=5 // pred_check
      _
    $region10: #{tpu_custom_call.1} parent=5 // pred_check_branch
      %116 = sbr.rel (%p113) target = $region12
    $region11: #{tpu_custom_call.1} parent=5 // pred_region
      %s117 = ssub.s32 %s9, 1
      // Predicated region
      $region13: #{tpu_custom_call.1} parent=11 // pred_check
        %p118 = pneg %p56
      $region14: #{tpu_custom_call.1} parent=11 // pred_check_branch
        %120 = sbr.rel (%p118) target = $region16
      $region15: #{tpu_custom_call.1} parent=11 // pred_region
        _
      $region16: #{tpu_custom_call.1} parent=11 // pred_fallthru
        _
      // Predicated region
      $region17: #{tpu_custom_call.1} parent=11 // pred_check
        %p121 = pneg %p77
      $region18: #{tpu_custom_call.1} parent=11 // pred_check_branch
        %123 = sbr.rel (%p121) target = $region20
      $region19: #{tpu_custom_call.1} parent=11 // pred_region
        _
      $region20: #{tpu_custom_call.1} parent=11 // pred_fallthru
        _
    $region12: #{tpu_custom_call.1} parent=5 // pred_fallthru
      _
    %p124 = scmp.lt.s32.totalorder %s9, 2
    // Predicated region
    $region21: #{tpu_custom_call.1} parent=5 // pred_check
      %p125 = pneg %p124
    $region22: #{tpu_custom_call.1} parent=5 // pred_check_branch
      %127 = sbr.rel (%p125) target = $region24
    $region23: #{tpu_custom_call.1} parent=5 // pred_region
      // Predicated region
      $region25: #{tpu_custom_call.1} parent=23 // pred_check
        %p128 = pneg %p29
      $region26: #{tpu_custom_call.1} parent=23 // pred_check_branch
        %130 = sbr.rel (%p128) target = $region28
      $region27: #{tpu_custom_call.1} parent=23 // pred_region
        %p131 = scmp.lt.s32.totalorder %s9, 1
        %s132 = scalar_select %p131, %s9, 1
        %s133 = smul.addr %s132, 32
        %s134 = smul.addr %s133, 8
        %s135 = scalar_lea.vmem %s0, %s134
      $region28: #{tpu_custom_call.1} parent=23 // pred_fallthru
        _
    $region24: #{tpu_custom_call.1} parent=5 // pred_fallthru
      _
    %p136 = scmp.le.s32.totalorder 1, %s9
    %p137 = scmp.lt.s32.totalorder %s9, 3
    %p138 = pnand %p136, %p137
    %p139 = pneg %p138
    // Predicated region
    $region29: #{tpu_custom_call.1} parent=5 // pred_check
      _
    $region30: #{tpu_custom_call.1} parent=5 // pred_check_branch
      %141 = sbr.rel (%p138) target = $region32
    $region31: #{tpu_custom_call.1} parent=5 // pred_region
      %s142 = ssub.s32 %s9, 1
      %p143 = scmp.lt.s32.totalorder %s14, 1
      %s144 = scalar_select %p143, %s14, 1
      %s145 = smul.addr %s144, 32
      %s146 = smul.addr %s145, 8
      %s147 = scalar_lea.vmem %s0, %s146
      %p148 = pneg %p35
      %p149 = pneg %p32
      %p150 = pneg %p56
      %p151 = pneg %p53
      %p152 = pneg %p77
      %p153 = pneg %p74
      %p154 = pneg %p103
      %p155 = pneg %p100
      %p156 = scmp.lt.s32.totalorder %s14, 1
      %s157 = scalar_select %p156, %s14, 1
      %s158 = smul.addr %s157, 32
      %s159 = smul.addr %s158, 8
      %s160 = scalar_lea.vmem %s3, %s159
      %p161 = scmp.lt.s32.totalorder %s14, 1
      %s162 = scalar_select %p161, %s14, 1
      %s163 = smul.addr %s162, 32
      %s164 = smul.addr %s163, 8
      %s165 = scalar_lea.vmem %s0, %s164
      %p166 = scmp.lt.s32.totalorder %s14, 1
      %s167 = scalar_select %p166, %s14, 1
      %s168 = smul.addr %s167, 32
      %s169 = smul.addr %s168, 8
      %s170 = scalar_lea.vmem %s3, %s169
      %v171 = vld [vmem:[%s165] sm:$0xff]
      %v172 = vld [vmem:[%s165 + $0x8] sm:$0xff]
      %v173 = vld [vmem:[%s165 + $0x10] sm:$0xff]
      %v174 = vld [vmem:[%s165 + $0x18] sm:$0xff]
      %v175 = vld [vmem:[%s165 + $0x20] sm:$0xff]
      %v176 = vld [vmem:[%s165 + $0x28] sm:$0xff]
      %v177 = vld [vmem:[%s165 + $0x30] sm:$0xff]
      %v178 = vld [vmem:[%s165 + $0x38] sm:$0xff]
      %v179 = vld [vmem:[%s165 + $0x40] sm:$0xff]
      %v180 = vld [vmem:[%s165 + $0x48] sm:$0xff]
      %v181 = vld [vmem:[%s165 + $0x50] sm:$0xff]
      %v182 = vld [vmem:[%s165 + $0x58] sm:$0xff]
      %v183 = vld [vmem:[%s165 + $0x60] sm:$0xff]
      %v184 = vld [vmem:[%s165 + $0x68] sm:$0xff]
      %v185 = vld [vmem:[%s165 + $0x70] sm:$0xff]
      %v186 = vld [vmem:[%s165 + $0x78] sm:$0xff]
      %v187 = vld [vmem:[%s165 + $0x80] sm:$0xff]
      %v188 = vld [vmem:[%s165 + $0x88] sm:$0xff]
      %v189 = vld [vmem:[%s165 + $0x90] sm:$0xff]
      %v190 = vld [vmem:[%s165 + $0x98] sm:$0xff]
      %v191 = vld [vmem:[%s165 + $0xa0] sm:$0xff]
      %v192 = vld [vmem:[%s165 + $0xa8] sm:$0xff]
      %v193 = vld [vmem:[%s165 + $0xb0] sm:$0xff]
      %v194 = vld [vmem:[%s165 + $0xb8] sm:$0xff]
      %v195 = vld [vmem:[%s165 + $0xc0] sm:$0xff]
      %v196 = vld [vmem:[%s165 + $0xc8] sm:$0xff]
      %v197 = vld [vmem:[%s165 + $0xd0] sm:$0xff]
      %v198 = vld [vmem:[%s165 + $0xd8] sm:$0xff]
      %v199 = vld [vmem:[%s165 + $0xe0] sm:$0xff]
      %v200 = vld [vmem:[%s165 + $0xe8] sm:$0xff]
      %v201 = vld [vmem:[%s165 + $0xf0] sm:$0xff]
      %v202 = vld [vmem:[%s165 + $0xf8] sm:$0xff]
      %s203 = scalar_lea.vmem [#allocation2], 24
      %vm204 = vcmask 64512
      %205 = vst.msk [vmem:[%s203 + $0x1] sm:$0xff] %vm204, %v171
      %206 = vst.msk [vmem:[%s203 + $0x9] sm:$0xff] %vm204, %v172
      %207 = vst.msk [vmem:[%s203 + $0x19] sm:$0xff] %vm204, %v173
      %208 = vst.msk [vmem:[%s203 + $0x21] sm:$0xff] %vm204, %v174
      %209 = vst.msk [vmem:[%s203 + $0x31] sm:$0xff] %vm204, %v175
      %210 = vst.msk [vmem:[%s203 + $0x39] sm:$0xff] %vm204, %v176
      %211 = vst.msk [vmem:[%s203 + $0x49] sm:$0xff] %vm204, %v177
      %212 = vst.msk [vmem:[%s203 + $0x51] sm:$0xff] %vm204, %v178
      %213 = vst.msk [vmem:[%s203 + $0x61] sm:$0xff] %vm204, %v179
      %214 = vst.msk [vmem:[%s203 + $0x69] sm:$0xff] %vm204, %v180
      %215 = vst.msk [vmem:[%s203 + $0x79] sm:$0xff] %vm204, %v181
      %216 = vst.msk [vmem:[%s203 + $0x81] sm:$0xff] %vm204, %v182
      %217 = vst.msk [vmem:[%s203 + $0x91] sm:$0xff] %vm204, %v183
      %218 = vst.msk [vmem:[%s203 + $0x99] sm:$0xff] %vm204, %v184
      %219 = vst.msk [vmem:[%s203 + $0xa9] sm:$0xff] %vm204, %v185
      %220 = vst.msk [vmem:[%s203 + $0xb1] sm:$0xff] %vm204, %v186
      %221 = vst.msk [vmem:[%s203 + $0xc1] sm:$0xff] %vm204, %v187
      %222 = vst.msk [vmem:[%s203 + $0xc9] sm:$0xff] %vm204, %v188
      %223 = vst.msk [vmem:[%s203 + $0xd9] sm:$0xff] %vm204, %v189
      %224 = vst.msk [vmem:[%s203 + $0xe1] sm:$0xff] %vm204, %v190
      %225 = vst.msk [vmem:[%s203 + $0xf1] sm:$0xff] %vm204, %v191
      %226 = vst.msk [vmem:[%s203 + $0xf9] sm:$0xff] %vm204, %v192
      %227 = vst.msk [vmem:[%s203 + $0x109] sm:$0xff] %vm204, %v193
      %228 = vst.msk [vmem:[%s203 + $0x111] sm:$0xff] %vm204, %v194
      %229 = vst.msk [vmem:[%s203 + $0x121] sm:$0xff] %vm204, %v195
      %230 = vst.msk [vmem:[%s203 + $0x129] sm:$0xff] %vm204, %v196
      %231 = vst.msk [vmem:[%s203 + $0x139] sm:$0xff] %vm204, %v197
      %232 = vst.msk [vmem:[%s203 + $0x141] sm:$0xff] %vm204, %v198
      %233 = vst.msk [vmem:[%s203 + $0x151] sm:$0xff] %vm204, %v199
      %234 = vst.msk [vmem:[%s203 + $0x159] sm:$0xff] %vm204, %v200
      %235 = vst.msk [vmem:[%s203 + $0x169] sm:$0xff] %vm204, %v201
      %236 = vst.msk [vmem:[%s203 + $0x171] sm:$0xff] %vm204, %v202
      %237 = vst.msk [vmem:[#allocation2 + $0x1] sm:$0xff] %vm204, %v173
      %238 = vst.msk [vmem:[#allocation2 + $0x9] sm:$0xff] %vm204, %v174
      %s239 = scalar_lea.vmem [#allocation2], 408
      %240 = vst.msk [vmem:[%s239 + $0x1] sm:$0xff] %vm204, %v199
      %241 = vst.msk [vmem:[%s239 + $0x9] sm:$0xff] %vm204, %v200
      %v242 = vld [vmem:[#allocation2 + $0x2] sm:$0x1]
      %v243 = vld [vmem:[#allocation2 + $0x1a] sm:$0x1]
      %v244 = vld [vmem:[#allocation2 + $0x32] sm:$0x1]
      %v245 = vld [vmem:[#allocation2 + $0x4a] sm:$0x1]
      %v246 = vld [vmem:[#allocation2 + $0x62] sm:$0x1]
      %v247 = vld [vmem:[#allocation2 + $0x7a] sm:$0x1]
      %v248 = vld [vmem:[#allocation2 + $0x92] sm:$0x1]
      %v249 = vld [vmem:[#allocation2 + $0xaa] sm:$0x1]
      %v250 = vld [vmem:[#allocation2 + $0xc2] sm:$0x1]
      %v251 = vld [vmem:[#allocation2 + $0xda] sm:$0x1]
      %v252 = vld [vmem:[#allocation2 + $0xf2] sm:$0x1]
      %v253 = vld [vmem:[#allocation2 + $0x10a] sm:$0x1]
      %v254 = vld [vmem:[#allocation2 + $0x122] sm:$0x1]
      %v255 = vld [vmem:[#allocation2 + $0x13a] sm:$0x1]
      %v256 = vld [vmem:[#allocation2 + $0x152] sm:$0x1]
      %v257 = vld [vmem:[#allocation2 + $0x16a] sm:$0x1]
      %v258 = vld [vmem:[#allocation2 + $0x182] sm:$0x1]
      %v259 = vld [vmem:[#allocation2 + $0x19a] sm:$0x1]
      %vm260 = vcmask 57344
      %261 = vst.msk [vmem:[#allocation2] sm:$0x1] %vm260, %v242
      %262 = vst.msk [vmem:[#allocation2 + $0x18] sm:$0x1] %vm260, %v243
      %263 = vst.msk [vmem:[#allocation2 + $0x30] sm:$0x1] %vm260, %v244
      %264 = vst.msk [vmem:[#allocation2 + $0x48] sm:$0x1] %vm260, %v245
      %265 = vst.msk [vmem:[#allocation2 + $0x60] sm:$0x1] %vm260, %v246
      %266 = vst.msk [vmem:[#allocation2 + $0x78] sm:$0x1] %vm260, %v247
      %267 = vst.msk [vmem:[#allocation2 + $0x90] sm:$0x1] %vm260, %v248
      %268 = vst.msk [vmem:[#allocation2 + $0xa8] sm:$0x1] %vm260, %v249
      %269 = vst.msk [vmem:[#allocation2 + $0xc0] sm:$0x1] %vm260, %v250
      %270 = vst.msk [vmem:[#allocation2 + $0xd8] sm:$0x1] %vm260, %v251
      %271 = vst.msk [vmem:[#allocation2 + $0xf0] sm:$0x1] %vm260, %v252
      %272 = vst.msk [vmem:[#allocation2 + $0x108] sm:$0x1] %vm260, %v253
      %273 = vst.msk [vmem:[#allocation2 + $0x120] sm:$0x1] %vm260, %v254
      %274 = vst.msk [vmem:[#allocation2 + $0x138] sm:$0x1] %vm260, %v255
      %275 = vst.msk [vmem:[#allocation2 + $0x150] sm:$0x1] %vm260, %v256
      %276 = vst.msk [vmem:[#allocation2 + $0x168] sm:$0x1] %vm260, %v257
      %277 = vst.msk [vmem:[#allocation2 + $0x180] sm:$0x1] %vm260, %v258
      %278 = vst.msk [vmem:[#allocation2 + $0x198] sm:$0x1] %vm260, %v259
      %v279 = vld [vmem:[#allocation2 + $0xf] sm:$0x1]
      %v280 = vld [vmem:[#allocation2 + $0x27] sm:$0x1]
      %v281 = vld [vmem:[#allocation2 + $0x3f] sm:$0x1]
      %v282 = vld [vmem:[#allocation2 + $0x57] sm:$0x1]
      %v283 = vld [vmem:[#allocation2 + $0x6f] sm:$0x1]
      %v284 = vld [vmem:[#allocation2 + $0x87] sm:$0x1]
      %v285 = vld [vmem:[#allocation2 + $0x9f] sm:$0x1]
      %v286 = vld [vmem:[#allocation2 + $0xb7] sm:$0x1]
      %v287 = vld [vmem:[#allocation2 + $0xcf] sm:$0x1]
      %v288 = vld [vmem:[#allocation2 + $0xe7] sm:$0x1]
      %v289 = vld [vmem:[#allocation2 + $0xff] sm:$0x1]
      %v290 = vld [vmem:[#allocation2 + $0x117] sm:$0x1]
      %v291 = vld [vmem:[#allocation2 + $0x12f] sm:$0x1]
      %v292 = vld [vmem:[#allocation2 + $0x147] sm:$0x1]
      %v293 = vld [vmem:[#allocation2 + $0x15f] sm:$0x1]
      %v294 = vld [vmem:[#allocation2 + $0x177] sm:$0x1]
      %v295 = vld [vmem:[#allocation2 + $0x18f] sm:$0x1]
      %v296 = vld [vmem:[#allocation2 + $0x1a7] sm:$0x1]
      %297 = vst.msk [vmem:[#allocation2 + $0x11] sm:$0x1] %vm260, %v279
      %298 = vst.msk [vmem:[#allocation2 + $0x29] sm:$0x1] %vm260, %v280
      %299 = vst.msk [vmem:[#allocation2 + $0x41] sm:$0x1] %vm260, %v281
      %300 = vst.msk [vmem:[#allocation2 + $0x59] sm:$0x1] %vm260, %v282
      %301 = vst.msk [vmem:[#allocation2 + $0x71] sm:$0x1] %vm260, %v283
      %302 = vst.msk [vmem:[#allocation2 + $0x89] sm:$0x1] %vm260, %v284
      %303 = vst.msk [vmem:[#allocation2 + $0xa1] sm:$0x1] %vm260, %v285
      %304 = vst.msk [vmem:[#allocation2 + $0xb9] sm:$0x1] %vm260, %v286
      %305 = vst.msk [vmem:[#allocation2 + $0xd1] sm:$0x1] %vm260, %v287
      %306 = vst.msk [vmem:[#allocation2 + $0xe9] sm:$0x1] %vm260, %v288
      %307 = vst.msk [vmem:[#allocation2 + $0x101] sm:$0x1] %vm260, %v289
      %308 = vst.msk [vmem:[#allocation2 + $0x119] sm:$0x1] %vm260, %v290
      %309 = vst.msk [vmem:[#allocation2 + $0x131] sm:$0x1] %vm260, %v291
      %310 = vst.msk [vmem:[#allocation2 + $0x149] sm:$0x1] %vm260, %v292
      %311 = vst.msk [vmem:[#allocation2 + $0x161] sm:$0x1] %vm260, %v293
      %312 = vst.msk [vmem:[#allocation2 + $0x179] sm:$0x1] %vm260, %v294
      %313 = vst.msk [vmem:[#allocation2 + $0x191] sm:$0x1] %vm260, %v295
      %314 = vst.msk [vmem:[#allocation2 + $0x1a9] sm:$0x1] %vm260, %v296
      %v315 = vld [vmem:[#allocation2] sm:$0xff]
      %v316 = vld [vmem:[#allocation2 + $0x8] sm:$0xff]
      %v317 = vld [vmem:[#allocation2 + $0x18] sm:$0xff]
      %v318 = vld [vmem:[#allocation2 + $0x20] sm:$0xff]
      %v319 = vld [vmem:[#allocation2 + $0x30] sm:$0xff]
      %v320 = vld [vmem:[#allocation2 + $0x38] sm:$0xff]
      %v321 = vld [vmem:[#allocation2 + $0x48] sm:$0xff]
      %v322 = vld [vmem:[#allocation2 + $0x50] sm:$0xff]
      %v323 = vld [vmem:[#allocation2 + $0x60] sm:$0xff]
      %v324 = vld [vmem:[#allocation2 + $0x68] sm:$0xff]
      %v325 = vld [vmem:[#allocation2 + $0x78] sm:$0xff]
      %v326 = vld [vmem:[#allocation2 + $0x80] sm:$0xff]
      %v327 = vld [vmem:[#allocation2 + $0x90] sm:$0xff]
      %v328 = vld [vmem:[#allocation2 + $0x98] sm:$0xff]
      %v329 = vld [vmem:[#allocation2 + $0xa8] sm:$0xff]
      %v330 = vld [vmem:[#allocation2 + $0xb0] sm:$0xff]
      %v331 = vld [vmem:[#allocation2 + $0xc0] sm:$0xff]
      %v332 = vld [vmem:[#allocation2 + $0xc8] sm:$0xff]
      %v333 = vld [vmem:[#allocation2 + $0xd8] sm:$0xff]
      %v334 = vld [vmem:[#allocation2 + $0xe0] sm:$0xff]
      %v335 = vld [vmem:[#allocation2 + $0xf0] sm:$0xff]
      %v336 = vld [vmem:[#allocation2 + $0xf8] sm:$0xff]
      %v337 = vld [vmem:[#allocation2 + $0x108] sm:$0xff]
      %v338 = vld [vmem:[#allocation2 + $0x110] sm:$0xff]
      %v339 = vld [vmem:[#allocation2 + $0x120] sm:$0xff]
      %v340 = vld [vmem:[#allocation2 + $0x128] sm:$0xff]
      %v341 = vld [vmem:[#allocation2 + $0x138] sm:$0xff]
      %v342 = vld [vmem:[#allocation2 + $0x140] sm:$0xff]
      %v343 = vld [vmem:[#allocation2 + $0x150] sm:$0xff]
      %v344 = vld [vmem:[#allocation2 + $0x158] sm:$0xff]
      %v345 = vld [vmem:[#allocation2 + $0x168] sm:$0xff]
      %v346 = vld [vmem:[#allocation2 + $0x170] sm:$0xff]
      %v347 = vld [vmem:[#allocation2 + $0x180] sm:$0xff]
      %v348 = vld [vmem:[#allocation2 + $0x188] sm:$0xff]
      %v349 = vld [vmem:[#allocation2 + $0x198] sm:$0xff]
      %v350 = vld [vmem:[#allocation2 + $0x1a0] sm:$0xff]
      %351 = vst.msk [vmem:[#allocation3] sm:$0xff] %vm204, %v315
      %352 = vst.msk [vmem:[#allocation3 + $0x8] sm:$0xff] %vm204, %v316
      %353 = vst.msk [vmem:[#allocation3 + $0x10] sm:$0xff] %vm204, %v317
      %354 = vst.msk [vmem:[#allocation3 + $0x18] sm:$0xff] %vm204, %v318
      %355 = vst.msk [vmem:[#allocation3 + $0x20] sm:$0xff] %vm204, %v319
      %356 = vst.msk [vmem:[#allocation3 + $0x28] sm:$0xff] %vm204, %v320
      %357 = vst.msk [vmem:[#allocation3 + $0x30] sm:$0xff] %vm204, %v321
      %358 = vst.msk [vmem:[#allocation3 + $0x38] sm:$0xff] %vm204, %v322
      %359 = vst.msk [vmem:[#allocation3 + $0x40] sm:$0xff] %vm204, %v323
      %360 = vst.msk [vmem:[#allocation3 + $0x48] sm:$0xff] %vm204, %v324
      %361 = vst.msk [vmem:[#allocation3 + $0x50] sm:$0xff] %vm204, %v325
      %362 = vst.msk [vmem:[#allocation3 + $0x58] sm:$0xff] %vm204, %v326
      %363 = vst.msk [vmem:[#allocation3 + $0x60] sm:$0xff] %vm204, %v327
      %364 = vst.msk [vmem:[#allocation3 + $0x68] sm:$0xff] %vm204, %v328
      %365 = vst.msk [vmem:[#allocation3 + $0x70] sm:$0xff] %vm204, %v329
      %366 = vst.msk [vmem:[#allocation3 + $0x78] sm:$0xff] %vm204, %v330
      %367 = vst.msk [vmem:[#allocation3 + $0x80] sm:$0xff] %vm204, %v331
      %368 = vst.msk [vmem:[#allocation3 + $0x88] sm:$0xff] %vm204, %v332
      %369 = vst.msk [vmem:[#allocation3 + $0x90] sm:$0xff] %vm204, %v333
      %370 = vst.msk [vmem:[#allocation3 + $0x98] sm:$0xff] %vm204, %v334
      %371 = vst.msk [vmem:[#allocation3 + $0xa0] sm:$0xff] %vm204, %v335
      %372 = vst.msk [vmem:[#allocation3 + $0xa8] sm:$0xff] %vm204, %v336
      %373 = vst.msk [vmem:[#allocation3 + $0xb0] sm:$0xff] %vm204, %v337
      %374 = vst.msk [vmem:[#allocation3 + $0xb8] sm:$0xff] %vm204, %v338
      %375 = vst.msk [vmem:[#allocation3 + $0xc0] sm:$0xff] %vm204, %v339
      %376 = vst.msk [vmem:[#allocation3 + $0xc8] sm:$0xff] %vm204, %v340
      %377 = vst.msk [vmem:[#allocation3 + $0xd0] sm:$0xff] %vm204, %v341
      %378 = vst.msk [vmem:[#allocation3 + $0xd8] sm:$0xff] %vm204, %v342
      %379 = vst.msk [vmem:[#allocation3 + $0xe0] sm:$0xff] %vm204, %v343
      %380 = vst.msk [vmem:[#allocation3 + $0xe8] sm:$0xff] %vm204, %v344
      %381 = vst.msk [vmem:[#allocation3 + $0xf0] sm:$0xff] %vm204, %v345
      %382 = vst.msk [vmem:[#allocation3 + $0xf8] sm:$0xff] %vm204, %v346
      %383 = vst.msk [vmem:[#allocation3 + $0x100] sm:$0xff] %vm204, %v347
      %384 = vst.msk [vmem:[#allocation3 + $0x108] sm:$0xff] %vm204, %v348
      %385 = vst.msk [vmem:[#allocation3 + $0x110] sm:$0xff] %vm204, %v349
      %386 = vst.msk [vmem:[#allocation3 + $0x118] sm:$0xff] %vm204, %v350
      %v387 = vld [vmem:[#allocation2 + $0x1] sm:$0xff]
      %v388 = vld [vmem:[#allocation2 + $0x9] sm:$0xff]
      %v389 = vld [vmem:[#allocation2 + $0x19] sm:$0xff]
      %v390 = vld [vmem:[#allocation2 + $0x21] sm:$0xff]
      %v391 = vld [vmem:[#allocation2 + $0x31] sm:$0xff]
      %v392 = vld [vmem:[#allocation2 + $0x39] sm:$0xff]
      %v393 = vld [vmem:[#allocation2 + $0x49] sm:$0xff]
      %v394 = vld [vmem:[#allocation2 + $0x51] sm:$0xff]
      %v395 = vld [vmem:[#allocation2 + $0x61] sm:$0xff]
      %v396 = vld [vmem:[#allocation2 + $0x69] sm:$0xff]
      %v397 = vld [vmem:[#allocation2 + $0x79] sm:$0xff]
      %v398 = vld [vmem:[#allocation2 + $0x81] sm:$0xff]
      %v399 = vld [vmem:[#allocation2 + $0x91] sm:$0xff]
      %v400 = vld [vmem:[#allocation2 + $0x99] sm:$0xff]
      %v401 = vld [vmem:[#allocation2 + $0xa9] sm:$0xff]
      %v402 = vld [vmem:[#allocation2 + $0xb1] sm:$0xff]
      %v403 = vld [vmem:[#allocation2 + $0xc1] sm:$0xff]
      %v404 = vld [vmem:[#allocation2 + $0xc9] sm:$0xff]
      %v405 = vld [vmem:[#allocation2 + $0xd9] sm:$0xff]
      %v406 = vld [vmem:[#allocation2 + $0xe1] sm:$0xff]
      %v407 = vld [vmem:[#allocation2 + $0xf1] sm:$0xff]
      %v408 = vld [vmem:[#allocation2 + $0xf9] sm:$0xff]
      %v409 = vld [vmem:[#allocation2 + $0x109] sm:$0xff]
      %v410 = vld [vmem:[#allocation2 + $0x111] sm:$0xff]
      %v411 = vld [vmem:[#allocation2 + $0x121] sm:$0xff]
      %v412 = vld [vmem:[#allocation2 + $0x129] sm:$0xff]
      %v413 = vld [vmem:[#allocation2 + $0x139] sm:$0xff]
      %v414 = vld [vmem:[#allocation2 + $0x141] sm:$0xff]
      %v415 = vld [vmem:[#allocation2 + $0x151] sm:$0xff]
      %v416 = vld [vmem:[#allocation2 + $0x159] sm:$0xff]
      %v417 = vld [vmem:[#allocation2 + $0x169] sm:$0xff]
      %v418 = vld [vmem:[#allocation2 + $0x171] sm:$0xff]
      %v419 = vld [vmem:[#allocation2 + $0x181] sm:$0xff]
      %v420 = vld [vmem:[#allocation2 + $0x189] sm:$0xff]
      %v421 = vld [vmem:[#allocation2 + $0x199] sm:$0xff]
      %v422 = vld [vmem:[#allocation2 + $0x1a1] sm:$0xff]
      %459 = vrot.lane.b32.xlu0 %v387, 8
      %v460 = vpop.permute.xlu0 %459
      %461 = vrot.lane.b32.xlu0 %v388, 8
      %v462 = vpop.permute.xlu0 %461
      %463 = vrot.lane.b32.xlu0 %v389, 8
      %v464 = vpop.permute.xlu0 %463
      %465 = vrot.lane.b32.xlu0 %v390, 8
      %v466 = vpop.permute.xlu0 %465
      %467 = vrot.lane.b32.xlu0 %v391, 8
      %v468 = vpop.permute.xlu0 %467
      %469 = vrot.lane.b32.xlu0 %v392, 8
      %v470 = vpop.permute.xlu0 %469
      %471 = vrot.lane.b32.xlu0 %v393, 8
      %v472 = vpop.permute.xlu0 %471
      %473 = vrot.lane.b32.xlu0 %v394, 8
      %v474 = vpop.permute.xlu0 %473
      %475 = vrot.lane.b32.xlu0 %v395, 8
      %v476 = vpop.permute.xlu0 %475
      %477 = vrot.lane.b32.xlu0 %v396, 8
      %v478 = vpop.permute.xlu0 %477
      %479 = vrot.lane.b32.xlu0 %v397, 8
      %v480 = vpop.permute.xlu0 %479
      %481 = vrot.lane.b32.xlu0 %v398, 8
      %v482 = vpop.permute.xlu0 %481
      %483 = vrot.lane.b32.xlu0 %v399, 8
      %v484 = vpop.permute.xlu0 %483
      %485 = vrot.lane.b32.xlu0 %v400, 8
      %v486 = vpop.permute.xlu0 %485
      %487 = vrot.lane.b32.xlu0 %v401, 8
      %v488 = vpop.permute.xlu0 %487
      %489 = vrot.lane.b32.xlu0 %v402, 8
      %v490 = vpop.permute.xlu0 %489
      %491 = vrot.lane.b32.xlu0 %v403, 8
      %v492 = vpop.permute.xlu0 %491
      %493 = vrot.lane.b32.xlu0 %v404, 8
      %v494 = vpop.permute.xlu0 %493
      %495 = vrot.lane.b32.xlu0 %v405, 8
      %v496 = vpop.permute.xlu0 %495
      %497 = vrot.lane.b32.xlu0 %v406, 8
      %v498 = vpop.permute.xlu0 %497
      %499 = vrot.lane.b32.xlu0 %v407, 8
      %v500 = vpop.permute.xlu0 %499
      %501 = vrot.lane.b32.xlu0 %v408, 8
      %v502 = vpop.permute.xlu0 %501
      %503 = vrot.lane.b32.xlu0 %v409, 8
      %v504 = vpop.permute.xlu0 %503
      %505 = vrot.lane.b32.xlu0 %v410, 8
      %v506 = vpop.permute.xlu0 %505
      %507 = vrot.lane.b32.xlu0 %v411, 8
      %v508 = vpop.permute.xlu0 %507
      %509 = vrot.lane.b32.xlu0 %v412, 8
      %v510 = vpop.permute.xlu0 %509
      %511 = vrot.lane.b32.xlu0 %v413, 8
      %v512 = vpop.permute.xlu0 %511
      %513 = vrot.lane.b32.xlu0 %v414, 8
      %v514 = vpop.permute.xlu0 %513
      %515 = vrot.lane.b32.xlu0 %v415, 8
      %v516 = vpop.permute.xlu0 %515
      %517 = vrot.lane.b32.xlu0 %v416, 8
      %v518 = vpop.permute.xlu0 %517
      %519 = vrot.lane.b32.xlu0 %v417, 8
      %v520 = vpop.permute.xlu0 %519
      %521 = vrot.lane.b32.xlu0 %v418, 8
      %v522 = vpop.permute.xlu0 %521
      %523 = vrot.lane.b32.xlu0 %v419, 8
      %v524 = vpop.permute.xlu0 %523
      %525 = vrot.lane.b32.xlu0 %v420, 8
      %v526 = vpop.permute.xlu0 %525
      %527 = vrot.lane.b32.xlu0 %v421, 8
      %v528 = vpop.permute.xlu0 %527
      %529 = vrot.lane.b32.xlu0 %v422, 8
      %v530 = vpop.permute.xlu0 %529
      %vm567 = vcmask 130112
      %568 = vst.msk [vmem:[#allocation3] sm:$0xff] %vm567, %v460
      %569 = vst.msk [vmem:[#allocation3 + $0x8] sm:$0xff] %vm567, %v462
      %570 = vst.msk [vmem:[#allocation3 + $0x10] sm:$0xff] %vm567, %v464
      %571 = vst.msk [vmem:[#allocation3 + $0x18] sm:$0xff] %vm567, %v466
      %572 = vst.msk [vmem:[#allocation3 + $0x20] sm:$0xff] %vm567, %v468
      %573 = vst.msk [vmem:[#allocation3 + $0x28] sm:$0xff] %vm567, %v470
      %574 = vst.msk [vmem:[#allocation3 + $0x30] sm:$0xff] %vm567, %v472
      %575 = vst.msk [vmem:[#allocation3 + $0x38] sm:$0xff] %vm567, %v474
      %576 = vst.msk [vmem:[#allocation3 + $0x40] sm:$0xff] %vm567, %v476
      %577 = vst.msk [vmem:[#allocation3 + $0x48] sm:$0xff] %vm567, %v478
      %578 = vst.msk [vmem:[#allocation3 + $0x50] sm:$0xff] %vm567, %v480
      %579 = vst.msk [vmem:[#allocation3 + $0x58] sm:$0xff] %vm567, %v482
      %580 = vst.msk [vmem:[#allocation3 + $0x60] sm:$0xff] %vm567, %v484
      %581 = vst.msk [vmem:[#allocation3 + $0x68] sm:$0xff] %vm567, %v486
      %582 = vst.msk [vmem:[#allocation3 + $0x70] sm:$0xff] %vm567, %v488
      %583 = vst.msk [vmem:[#allocation3 + $0x78] sm:$0xff] %vm567, %v490
      %584 = vst.msk [vmem:[#allocation3 + $0x80] sm:$0xff] %vm567, %v492
      %585 = vst.msk [vmem:[#allocation3 + $0x88] sm:$0xff] %vm567, %v494
      %586 = vst.msk [vmem:[#allocation3 + $0x90] sm:$0xff] %vm567, %v496
      %587 = vst.msk [vmem:[#allocation3 + $0x98] sm:$0xff] %vm567, %v498
      %588 = vst.msk [vmem:[#allocation3 + $0xa0] sm:$0xff] %vm567, %v500
      %589 = vst.msk [vmem:[#allocation3 + $0xa8] sm:$0xff] %vm567, %v502
      %590 = vst.msk [vmem:[#allocation3 + $0xb0] sm:$0xff] %vm567, %v504
      %591 = vst.msk [vmem:[#allocation3 + $0xb8] sm:$0xff] %vm567, %v506
      %592 = vst.msk [vmem:[#allocation3 + $0xc0] sm:$0xff] %vm567, %v508
      %593 = vst.msk [vmem:[#allocation3 + $0xc8] sm:$0xff] %vm567, %v510
      %594 = vst.msk [vmem:[#allocation3 + $0xd0] sm:$0xff] %vm567, %v512
      %595 = vst.msk [vmem:[#allocation3 + $0xd8] sm:$0xff] %vm567, %v514
      %596 = vst.msk [vmem:[#allocation3 + $0xe0] sm:$0xff] %vm567, %v516
      %597 = vst.msk [vmem:[#allocation3 + $0xe8] sm:$0xff] %vm567, %v518
      %598 = vst.msk [vmem:[#allocation3 + $0xf0] sm:$0xff] %vm567, %v520
      %599 = vst.msk [vmem:[#allocation3 + $0xf8] sm:$0xff] %vm567, %v522
      %600 = vst.msk [vmem:[#allocation3 + $0x100] sm:$0xff] %vm567, %v524
      %601 = vst.msk [vmem:[#allocation3 + $0x108] sm:$0xff] %vm567, %v526
      %602 = vst.msk [vmem:[#allocation3 + $0x110] sm:$0xff] %vm567, %v528
      %603 = vst.msk [vmem:[#allocation3 + $0x118] sm:$0xff] %vm567, %v530
      %v604 = vld [vmem:[#allocation2 + $0x2] sm:$0xff]
      %v605 = vld [vmem:[#allocation2 + $0xa] sm:$0xff]
      %v606 = vld [vmem:[#allocation2 + $0x1a] sm:$0xff]
      %v607 = vld [vmem:[#allocation2 + $0x22] sm:$0xff]
      %v608 = vld [vmem:[#allocation2 + $0x32] sm:$0xff]
      %v609 = vld [vmem:[#allocation2 + $0x3a] sm:$0xff]
      %v610 = vld [vmem:[#allocation2 + $0x4a] sm:$0xff]
      %v611 = vld [vmem:[#allocation2 + $0x52] sm:$0xff]
      %v612 = vld [vmem:[#allocation2 + $0x62] sm:$0xff]
      %v613 = vld [vmem:[#allocation2 + $0x6a] sm:$0xff]
      %v614 = vld [vmem:[#allocation2 + $0x7a] sm:$0xff]
      %v615 = vld [vmem:[#allocation2 + $0x82] sm:$0xff]
      %v616 = vld [vmem:[#allocation2 + $0x92] sm:$0xff]
      %v617 = vld [vmem:[#allocation2 + $0x9a] sm:$0xff]
      %v618 = vld [vmem:[#allocation2 + $0xaa] sm:$0xff]
      %v619 = vld [vmem:[#allocation2 + $0xb2] sm:$0xff]
      %v620 = vld [vmem:[#allocation2 + $0xc2] sm:$0xff]
      %v621 = vld [vmem:[#allocation2 + $0xca] sm:$0xff]
      %v622 = vld [vmem:[#allocation2 + $0xda] sm:$0xff]
      %v623 = vld [vmem:[#allocation2 + $0xe2] sm:$0xff]
      %v624 = vld [vmem:[#allocation2 + $0xf2] sm:$0xff]
      %v625 = vld [vmem:[#allocation2 + $0xfa] sm:$0xff]
      %v626 = vld [vmem:[#allocation2 + $0x10a] sm:$0xff]
      %v627 = vld [vmem:[#allocation2 + $0x112] sm:$0xff]
      %v628 = vld [vmem:[#allocation2 + $0x122] sm:$0xff]
      %v629 = vld [vmem:[#allocation2 + $0x12a] sm:$0xff]
      %v630 = vld [vmem:[#allocation2 + $0x13a] sm:$0xff]
      %v631 = vld [vmem:[#allocation2 + $0x142] sm:$0xff]
      %v632 = vld [vmem:[#allocation2 + $0x152] sm:$0xff]
      %v633 = vld [vmem:[#allocation2 + $0x15a] sm:$0xff]
      %v634 = vld [vmem:[#allocation2 + $0x16a] sm:$0xff]
      %v635 = vld [vmem:[#allocation2 + $0x172] sm:$0xff]
      %v636 = vld [vmem:[#allocation2 + $0x182] sm:$0xff]
      %v637 = vld [vmem:[#allocation2 + $0x18a] sm:$0xff]
      %v638 = vld [vmem:[#allocation2 + $0x19a] sm:$0xff]
      %v639 = vld [vmem:[#allocation2 + $0x1a2] sm:$0xff]
      %676 = vrot.lane.b32.xlu0 %v604, 16
      %v677 = vpop.permute.xlu0 %676
      %678 = vrot.lane.b32.xlu0 %v605, 16
      %v679 = vpop.permute.xlu0 %678
      %680 = vrot.lane.b32.xlu0 %v606, 16
      %v681 = vpop.permute.xlu0 %680
      %682 = vrot.lane.b32.xlu0 %v607, 16
      %v683 = vpop.permute.xlu0 %682
      %684 = vrot.lane.b32.xlu0 %v608, 16
      %v685 = vpop.permute.xlu0 %684
      %686 = vrot.lane.b32.xlu0 %v609, 16
      %v687 = vpop.permute.xlu0 %686
      %688 = vrot.lane.b32.xlu0 %v610, 16
      %v689 = vpop.permute.xlu0 %688
      %690 = vrot.lane.b32.xlu0 %v611, 16
      %v691 = vpop.permute.xlu0 %690
      %692 = vrot.lane.b32.xlu0 %v612, 16
      %v693 = vpop.permute.xlu0 %692
      %694 = vrot.lane.b32.xlu0 %v613, 16
      %v695 = vpop.permute.xlu0 %694
      %696 = vrot.lane.b32.xlu0 %v614, 16
      %v697 = vpop.permute.xlu0 %696
      %698 = vrot.lane.b32.xlu0 %v615, 16
      %v699 = vpop.permute.xlu0 %698
      %700 = vrot.lane.b32.xlu0 %v616, 16
      %v701 = vpop.permute.xlu0 %700
      %702 = vrot.lane.b32.xlu0 %v617, 16
      %v703 = vpop.permute.xlu0 %702
      %704 = vrot.lane.b32.xlu0 %v618, 16
      %v705 = vpop.permute.xlu0 %704
      %706 = vrot.lane.b32.xlu0 %v619, 16
      %v707 = vpop.permute.xlu0 %706
      %708 = vrot.lane.b32.xlu0 %v620, 16
      %v709 = vpop.permute.xlu0 %708
      %710 = vrot.lane.b32.xlu0 %v621, 16
      %v711 = vpop.permute.xlu0 %710
      %712 = vrot.lane.b32.xlu0 %v622, 16
      %v713 = vpop.permute.xlu0 %712
      %714 = vrot.lane.b32.xlu0 %v623, 16
      %v715 = vpop.permute.xlu0 %714
      %716 = vrot.lane.b32.xlu0 %v624, 16
      %v717 = vpop.permute.xlu0 %716
      %718 = vrot.lane.b32.xlu0 %v625, 16
      %v719 = vpop.permute.xlu0 %718
      %720 = vrot.lane.b32.xlu0 %v626, 16
      %v721 = vpop.permute.xlu0 %720
      %722 = vrot.lane.b32.xlu0 %v627, 16
      %v723 = vpop.permute.xlu0 %722
      %724 = vrot.lane.b32.xlu0 %v628, 16
      %v725 = vpop.permute.xlu0 %724
      %726 = vrot.lane.b32.xlu0 %v629, 16
      %v727 = vpop.permute.xlu0 %726
      %728 = vrot.lane.b32.xlu0 %v630, 16
      %v729 = vpop.permute.xlu0 %728
      %730 = vrot.lane.b32.xlu0 %v631, 16
      %v731 = vpop.permute.xlu0 %730
      %732 = vrot.lane.b32.xlu0 %v632, 16
      %v733 = vpop.permute.xlu0 %732
      %734 = vrot.lane.b32.xlu0 %v633, 16
      %v735 = vpop.permute.xlu0 %734
      %736 = vrot.lane.b32.xlu0 %v634, 16
      %v737 = vpop.permute.xlu0 %736
      %738 = vrot.lane.b32.xlu0 %v635, 16
      %v739 = vpop.permute.xlu0 %738
      %740 = vrot.lane.b32.xlu0 %v636, 16
      %v741 = vpop.permute.xlu0 %740
      %742 = vrot.lane.b32.xlu0 %v637, 16
      %v743 = vpop.permute.xlu0 %742
      %744 = vrot.lane.b32.xlu0 %v638, 16
      %v745 = vpop.permute.xlu0 %744
      %746 = vrot.lane.b32.xlu0 %v639, 16
      %v747 = vpop.permute.xlu0 %746
      %vm784 = vcmask 195712
      %785 = vst.msk [vmem:[#allocation3] sm:$0xff] %vm784, %v677
      %786 = vst.msk [vmem:[#allocation3 + $0x8] sm:$0xff] %vm784, %v679
      %787 = vst.msk [vmem:[#allocation3 + $0x10] sm:$0xff] %vm784, %v681
      %788 = vst.msk [vmem:[#allocation3 + $0x18] sm:$0xff] %vm784, %v683
      %789 = vst.msk [vmem:[#allocation3 + $0x20] sm:$0xff] %vm784, %v685
      %790 = vst.msk [vmem:[#allocation3 + $0x28] sm:$0xff] %vm784, %v687
      %791 = vst.msk [vmem:[#allocation3 + $0x30] sm:$0xff] %vm784, %v689
      %792 = vst.msk [vmem:[#allocation3 + $0x38] sm:$0xff] %vm784, %v691
      %793 = vst.msk [vmem:[#allocation3 + $0x40] sm:$0xff] %vm784, %v693
      %794 = vst.msk [vmem:[#allocation3 + $0x48] sm:$0xff] %vm784, %v695
      %795 = vst.msk [vmem:[#allocation3 + $0x50] sm:$0xff] %vm784, %v697
      %796 = vst.msk [vmem:[#allocation3 + $0x58] sm:$0xff] %vm784, %v699
      %797 = vst.msk [vmem:[#allocation3 + $0x60] sm:$0xff] %vm784, %v701
      %798 = vst.msk [vmem:[#allocation3 + $0x68] sm:$0xff] %vm784, %v703
      %799 = vst.msk [vmem:[#allocation3 + $0x70] sm:$0xff] %vm784, %v705
      %800 = vst.msk [vmem:[#allocation3 + $0x78] sm:$0xff] %vm784, %v707
      %801 = vst.msk [vmem:[#allocation3 + $0x80] sm:$0xff] %vm784, %v709
      %802 = vst.msk [vmem:[#allocation3 + $0x88] sm:$0xff] %vm784, %v711
      %803 = vst.msk [vmem:[#allocation3 + $0x90] sm:$0xff] %vm784, %v713
      %804 = vst.msk [vmem:[#allocation3 + $0x98] sm:$0xff] %vm784, %v715
      %805 = vst.msk [vmem:[#allocation3 + $0xa0] sm:$0xff] %vm784, %v717
      %806 = vst.msk [vmem:[#allocation3 + $0xa8] sm:$0xff] %vm784, %v719
      %807 = vst.msk [vmem:[#allocation3 + $0xb0] sm:$0xff] %vm784, %v721
      %808 = vst.msk [vmem:[#allocation3 + $0xb8] sm:$0xff] %vm784, %v723
      %809 = vst.msk [vmem:[#allocation3 + $0xc0] sm:$0xff] %vm784, %v725
      %810 = vst.msk [vmem:[#allocation3 + $0xc8] sm:$0xff] %vm784, %v727
      %811 = vst.msk [vmem:[#allocation3 + $0xd0] sm:$0xff] %vm784, %v729
      %812 = vst.msk [vmem:[#allocation3 + $0xd8] sm:$0xff] %vm784, %v731
      %813 = vst.msk [vmem:[#allocation3 + $0xe0] sm:$0xff] %vm784, %v733
      %814 = vst.msk [vmem:[#allocation3 + $0xe8] sm:$0xff] %vm784, %v735
      %815 = vst.msk [vmem:[#allocation3 + $0xf0] sm:$0xff] %vm784, %v737
      %816 = vst.msk [vmem:[#allocation3 + $0xf8] sm:$0xff] %vm784, %v739
      %817 = vst.msk [vmem:[#allocation3 + $0x100] sm:$0xff] %vm784, %v741
      %818 = vst.msk [vmem:[#allocation3 + $0x108] sm:$0xff] %vm784, %v743
      %819 = vst.msk [vmem:[#allocation3 + $0x110] sm:$0xff] %vm784, %v745
      %820 = vst.msk [vmem:[#allocation3 + $0x118] sm:$0xff] %vm784, %v747
      %v821 = vld [vmem:[#allocation3] sm:$0xff]
      %v822 = vld [vmem:[#allocation3 + $0x8] sm:$0xff]
      %v823 = vld [vmem:[#allocation3 + $0x10] sm:$0xff]
      %v824 = vld [vmem:[#allocation3 + $0x18] sm:$0xff]
      %v825 = vld [vmem:[#allocation3 + $0x20] sm:$0xff]
      %v826 = vld [vmem:[#allocation3 + $0x28] sm:$0xff]
      %v827 = vld [vmem:[#allocation3 + $0x30] sm:$0xff]
      %v828 = vld [vmem:[#allocation3 + $0x38] sm:$0xff]
      %v829 = vld [vmem:[#allocation3 + $0x40] sm:$0xff]
      %v830 = vld [vmem:[#allocation3 + $0x48] sm:$0xff]
      %v831 = vld [vmem:[#allocation3 + $0x50] sm:$0xff]
      %v832 = vld [vmem:[#allocation3 + $0x58] sm:$0xff]
      %v833 = vld [vmem:[#allocation3 + $0x60] sm:$0xff]
      %v834 = vld [vmem:[#allocation3 + $0x68] sm:$0xff]
      %v835 = vld [vmem:[#allocation3 + $0x70] sm:$0xff]
      %v836 = vld [vmem:[#allocation3 + $0x78] sm:$0xff]
      %v837 = vld [vmem:[#allocation3 + $0x80] sm:$0xff]
      %v838 = vld [vmem:[#allocation3 + $0x88] sm:$0xff]
      %v839 = vld [vmem:[#allocation3 + $0x90] sm:$0xff]
      %v840 = vld [vmem:[#allocation3 + $0x98] sm:$0xff]
      %v841 = vld [vmem:[#allocation3 + $0xa0] sm:$0xff]
      %v842 = vld [vmem:[#allocation3 + $0xa8] sm:$0xff]
      %v843 = vld [vmem:[#allocation3 + $0xb0] sm:$0xff]
      %v844 = vld [vmem:[#allocation3 + $0xb8] sm:$0xff]
      %v845 = vld [vmem:[#allocation3 + $0xc0] sm:$0xff]
      %v846 = vld [vmem:[#allocation3 + $0xc8] sm:$0xff]
      %v847 = vld [vmem:[#allocation3 + $0xd0] sm:$0xff]
      %v848 = vld [vmem:[#allocation3 + $0xd8] sm:$0xff]
      %v849 = vld [vmem:[#allocation3 + $0xe0] sm:$0xff]
      %v850 = vld [vmem:[#allocation3 + $0xe8] sm:$0xff]
      %v851 = vld [vmem:[#allocation3 + $0xf0] sm:$0xff]
      %v852 = vld [vmem:[#allocation3 + $0xf8] sm:$0xff]
      %v853 = vld [vmem:[%s1] sm:$0xff]
      %v854 = vld [vmem:[%s1 + $0x8] sm:$0xff]
      %v855 = vld [vmem:[%s1 + $0x10] sm:$0xff]
      %s856 = scalar_lea.vmem [#allocation3], 16
      %v857 = vld [vmem:[%s856] sm:$0xff]
      %v858 = vld [vmem:[%s856 + $0x8] sm:$0xff]
      %v859 = vld [vmem:[%s856 + $0x10] sm:$0xff]
      %v860 = vld [vmem:[%s856 + $0x18] sm:$0xff]
      %v861 = vld [vmem:[%s856 + $0x20] sm:$0xff]
      %v862 = vld [vmem:[%s856 + $0x28] sm:$0xff]
      %v863 = vld [vmem:[%s856 + $0x30] sm:$0xff]
      %v864 = vld [vmem:[%s856 + $0x38] sm:$0xff]
      %v865 = vld [vmem:[%s856 + $0x40] sm:$0xff]
      %v866 = vld [vmem:[%s856 + $0x48] sm:$0xff]
      %v867 = vld [vmem:[%s856 + $0x50] sm:$0xff]
      %v868 = vld [vmem:[%s856 + $0x58] sm:$0xff]
      %v869 = vld [vmem:[%s856 + $0x60] sm:$0xff]
      %v870 = vld [vmem:[%s856 + $0x68] sm:$0xff]
      %v871 = vld [vmem:[%s856 + $0x70] sm:$0xff]
      %v872 = vld [vmem:[%s856 + $0x78] sm:$0xff]
      %v873 = vld [vmem:[%s856 + $0x80] sm:$0xff]
      %v874 = vld [vmem:[%s856 + $0x88] sm:$0xff]
      %v875 = vld [vmem:[%s856 + $0x90] sm:$0xff]
      %v876 = vld [vmem:[%s856 + $0x98] sm:$0xff]
      %v877 = vld [vmem:[%s856 + $0xa0] sm:$0xff]
      %v878 = vld [vmem:[%s856 + $0xa8] sm:$0xff]
      %v879 = vld [vmem:[%s856 + $0xb0] sm:$0xff]
      %v880 = vld [vmem:[%s856 + $0xb8] sm:$0xff]
      %v881 = vld [vmem:[%s856 + $0xc0] sm:$0xff]
      %v882 = vld [vmem:[%s856 + $0xc8] sm:$0xff]
      %v883 = vld [vmem:[%s856 + $0xd0] sm:$0xff]
      %v884 = vld [vmem:[%s856 + $0xd8] sm:$0xff]
      %v885 = vld [vmem:[%s856 + $0xe0] sm:$0xff]
      %v886 = vld [vmem:[%s856 + $0xe8] sm:$0xff]
      %v887 = vld [vmem:[%s856 + $0xf0] sm:$0xff]
      %v888 = vld [vmem:[%s856 + $0xf8] sm:$0xff]
      %s889 = scalar_lea.vmem %s1, 24
      %v890 = vld [vmem:[%s889] sm:$0xff]
      %v891 = vld [vmem:[%s889 + $0x8] sm:$0xff]
      %v892 = vld [vmem:[%s889 + $0x10] sm:$0xff]
      %vm893 = vcmask 195584
      %v895 = vsel %vm893, %v857, 0
      %v898 = vsel %vm893, %v858, 0
      %v901 = vsel %vm893, %v859, 0
      %v904 = vsel %vm893, %v860, 0
      %v907 = vsel %vm893, %v861, 0
      %v910 = vsel %vm893, %v862, 0
      %v913 = vsel %vm893, %v863, 0
      %v916 = vsel %vm893, %v864, 0
      %v919 = vsel %vm893, %v865, 0
      %v922 = vsel %vm893, %v866, 0
      %v925 = vsel %vm893, %v867, 0
      %v928 = vsel %vm893, %v868, 0
      %v931 = vsel %vm893, %v869, 0
      %v934 = vsel %vm893, %v870, 0
      %v937 = vsel %vm893, %v871, 0
      %v940 = vsel %vm893, %v872, 0
      %v943 = vsel %vm893, %v873, 0
      %v946 = vsel %vm893, %v874, 0
      %v949 = vsel %vm893, %v875, 0
      %v952 = vsel %vm893, %v876, 0
      %v955 = vsel %vm893, %v877, 0
      %v958 = vsel %vm893, %v878, 0
      %v961 = vsel %vm893, %v879, 0
      %v964 = vsel %vm893, %v880, 0
      %v967 = vsel %vm893, %v881, 0
      %v970 = vsel %vm893, %v882, 0
      %v973 = vsel %vm893, %v883, 0
      %v976 = vsel %vm893, %v884, 0
      %v979 = vsel %vm893, %v885, 0
      %v982 = vsel %vm893, %v886, 0
      %v985 = vsel %vm893, %v887, 0
      %v988 = vsel %vm893, %v888, 0
      %990 = vmatpush.msra.mxu0 0.0
      %991 = vmatpush.msra.mxu0 0.0
      %992 = vmatpush.msra.mxu0 0.0
      %993 = vmatpush.msra.mxu0 0.0
      %994 = vmatpush.msra.mxu0 0.0
      %995 = vmatpush.msra.mxu0 0.0
      %996 = vmatpush.msra.mxu0 0.0
      %997 = vmatpush.msra.mxu0 0.0
      %998 = vmatpush.msra.mxu0 0.0
      %999 = vmatpush.msra.mxu0 0.0
      %1000 = vmatpush.msra.mxu0 0.0
      %1001 = vmatpush.msra.mxu0 0.0
      %1002 = vmatpush.msra.mxu0 0.0
      %1003 = vmatpush.msra.mxu0 %v892
      %1004 = vmatpush.msra.mxu0 %v891
      %1005 = vmatpush.msra.mxu0 %v890
      %1006 = vmatmul.f32.gmra.mxu0 %v895
      %v1007 = vpop.f32.mrf.mxu0
      %v1008 = vadd.f32 0.0, %v1007
      %1009 = vmatmul.f32.gmra.mxu0 %v898
      %v1010 = vpop.f32.mrf.mxu0
      %v1011 = vadd.f32 0.0, %v1010
      %1012 = vmatmul.f32.gmra.mxu0 %v901
      %v1013 = vpop.f32.mrf.mxu0
      %v1014 = vadd.f32 0.0, %v1013
      %1015 = vmatmul.f32.gmra.mxu0 %v904
      %v1016 = vpop.f32.mrf.mxu0
      %v1017 = vadd.f32 0.0, %v1016
      %1018 = vmatmul.f32.gmra.mxu0 %v907
      %v1019 = vpop.f32.mrf.mxu0
      %v1020 = vadd.f32 0.0, %v1019
      %1021 = vmatmul.f32.gmra.mxu0 %v910
      %v1022 = vpop.f32.mrf.mxu0
      %v1023 = vadd.f32 0.0, %v1022
      %1024 = vmatmul.f32.gmra.mxu0 %v913
      %v1025 = vpop.f32.mrf.mxu0
      %v1026 = vadd.f32 0.0, %v1025
      %1027 = vmatmul.f32.gmra.mxu0 %v916
      %v1028 = vpop.f32.mrf.mxu0
      %v1029 = vadd.f32 0.0, %v1028
      %1030 = vmatmul.f32.gmra.mxu0 %v919
      %v1031 = vpop.f32.mrf.mxu0
      %v1032 = vadd.f32 0.0, %v1031
      %1033 = vmatmul.f32.gmra.mxu0 %v922
      %v1034 = vpop.f32.mrf.mxu0
      %v1035 = vadd.f32 0.0, %v1034
      %1036 = vmatmul.f32.gmra.mxu0 %v925
      %v1037 = vpop.f32.mrf.mxu0
      %v1038 = vadd.f32 0.0, %v1037
      %1039 = vmatmul.f32.gmra.mxu0 %v928
      %v1040 = vpop.f32.mrf.mxu0
      %v1041 = vadd.f32 0.0, %v1040
      %1042 = vmatmul.f32.gmra.mxu0 %v931
      %v1043 = vpop.f32.mrf.mxu0
      %v1044 = vadd.f32 0.0, %v1043
      %1045 = vmatmul.f32.gmra.mxu0 %v934
      %v1046 = vpop.f32.mrf.mxu0
      %v1047 = vadd.f32 0.0, %v1046
      %1048 = vmatmul.f32.gmra.mxu0 %v937
      %v1049 = vpop.f32.mrf.mxu0
      %v1050 = vadd.f32 0.0, %v1049
      %1051 = vmatmul.f32.gmra.mxu0 %v940
      %v1052 = vpop.f32.mrf.mxu0
      %v1053 = vadd.f32 0.0, %v1052
      %1054 = vmatmul.f32.gmra.mxu0 %v943
      %v1055 = vpop.f32.mrf.mxu0
      %v1056 = vadd.f32 0.0, %v1055
      %1057 = vmatmul.f32.gmra.mxu0 %v946
      %v1058 = vpop.f32.mrf.mxu0
      %v1059 = vadd.f32 0.0, %v1058
      %1060 = vmatmul.f32.gmra.mxu0 %v949
      %v1061 = vpop.f32.mrf.mxu0
      %v1062 = vadd.f32 0.0, %v1061
      %1063 = vmatmul.f32.gmra.mxu0 %v952
      %v1064 = vpop.f32.mrf.mxu0
      %v1065 = vadd.f32 0.0, %v1064
      %1066 = vmatmul.f32.gmra.mxu0 %v955
      %v1067 = vpop.f32.mrf.mxu0
      %v1068 = vadd.f32 0.0, %v1067
      %1069 = vmatmul.f32.gmra.mxu0 %v958
      %v1070 = vpop.f32.mrf.mxu0
      %v1071 = vadd.f32 0.0, %v1070
      %1072 = vmatmul.f32.gmra.mxu0 %v961
      %v1073 = vpop.f32.mrf.mxu0
      %v1074 = vadd.f32 0.0, %v1073
      %1075 = vmatmul.f32.gmra.mxu0 %v964
      %v1076 = vpop.f32.mrf.mxu0
      %v1077 = vadd.f32 0.0, %v1076
      %1078 = vmatmul.f32.gmra.mxu0 %v967
      %v1079 = vpop.f32.mrf.mxu0
      %v1080 = vadd.f32 0.0, %v1079
      %1081 = vmatmul.f32.gmra.mxu0 %v970
      %v1082 = vpop.f32.mrf.mxu0
      %v1083 = vadd.f32 0.0, %v1082
      %1084 = vmatmul.f32.gmra.mxu0 %v973
      %v1085 = vpop.f32.mrf.mxu0
      %v1086 = vadd.f32 0.0, %v1085
      %1087 = vmatmul.f32.gmra.mxu0 %v976
      %v1088 = vpop.f32.mrf.mxu0
      %v1089 = vadd.f32 0.0, %v1088
      %1090 = vmatmul.f32.gmra.mxu0 %v979
      %v1091 = vpop.f32.mrf.mxu0
      %v1092 = vadd.f32 0.0, %v1091
      %1093 = vmatmul.f32.gmra.mxu0 %v982
      %v1094 = vpop.f32.mrf.mxu0
      %v1095 = vadd.f32 0.0, %v1094
      %1096 = vmatmul.f32.gmra.mxu0 %v985
      %v1097 = vpop.f32.mrf.mxu0
      %v1098 = vadd.f32 0.0, %v1097
      %1099 = vmatmul.f32.gmra.mxu0 %v988
      %v1100 = vpop.f32.mrf.mxu0
      %v1101 = vadd.f32 0.0, %v1100
      %1102 = vdwg.mxu0
      %v1104 = vsel %vm893, %v821, 0
      %v1107 = vsel %vm893, %v822, 0
      %v1110 = vsel %vm893, %v823, 0
      %v1113 = vsel %vm893, %v824, 0
      %v1116 = vsel %vm893, %v825, 0
      %v1119 = vsel %vm893, %v826, 0
      %v1122 = vsel %vm893, %v827, 0
      %v1125 = vsel %vm893, %v828, 0
      %v1128 = vsel %vm893, %v829, 0
      %v1131 = vsel %vm893, %v830, 0
      %v1134 = vsel %vm893, %v831, 0
      %v1137 = vsel %vm893, %v832, 0
      %v1140 = vsel %vm893, %v833, 0
      %v1143 = vsel %vm893, %v834, 0
      %v1146 = vsel %vm893, %v835, 0
      %v1149 = vsel %vm893, %v836, 0
      %v1152 = vsel %vm893, %v837, 0
      %v1155 = vsel %vm893, %v838, 0
      %v1158 = vsel %vm893, %v839, 0
      %v1161 = vsel %vm893, %v840, 0
      %v1164 = vsel %vm893, %v841, 0
      %v1167 = vsel %vm893, %v842, 0
      %v1170 = vsel %vm893, %v843, 0
      %v1173 = vsel %vm893, %v844, 0
      %v1176 = vsel %vm893, %v845, 0
      %v1179 = vsel %vm893, %v846, 0
      %v1182 = vsel %vm893, %v847, 0
      %v1185 = vsel %vm893, %v848, 0
      %v1188 = vsel %vm893, %v849, 0
      %v1191 = vsel %vm893, %v850, 0
      %v1194 = vsel %vm893, %v851, 0
      %v1197 = vsel %vm893, %v852, 0
      %1199 = vmatpush.msra.mxu0 0.0
      %1200 = vmatpush.msra.mxu0 0.0
      %1201 = vmatpush.msra.mxu0 0.0
      %1202 = vmatpush.msra.mxu0 0.0
      %1203 = vmatpush.msra.mxu0 0.0
      %1204 = vmatpush.msra.mxu0 0.0
      %1205 = vmatpush.msra.mxu0 0.0
      %1206 = vmatpush.msra.mxu0 0.0
      %1207 = vmatpush.msra.mxu0 0.0
      %1208 = vmatpush.msra.mxu0 0.0
      %1209 = vmatpush.msra.mxu0 0.0
      %1210 = vmatpush.msra.mxu0 0.0
      %1211 = vmatpush.msra.mxu0 0.0
      %1212 = vmatpush.msra.mxu0 %v855
      %1213 = vmatpush.msra.mxu0 %v854
      %1214 = vmatpush.msra.mxu0 %v853
      %1215 = vmatmul.f32.gmra.mxu0 %v1104
      %v1216 = vpop.f32.mrf.mxu0
      %v1217 = vadd.f32 %v1008, %v1216
      %1218 = vmatmul.f32.gmra.mxu0 %v1107
      %v1219 = vpop.f32.mrf.mxu0
      %v1220 = vadd.f32 %v1011, %v1219
      %1221 = vmatmul.f32.gmra.mxu0 %v1110
      %v1222 = vpop.f32.mrf.mxu0
      %v1223 = vadd.f32 %v1014, %v1222
      %1224 = vmatmul.f32.gmra.mxu0 %v1113
      %v1225 = vpop.f32.mrf.mxu0
      %v1226 = vadd.f32 %v1017, %v1225
      %1227 = vmatmul.f32.gmra.mxu0 %v1116
      %v1228 = vpop.f32.mrf.mxu0
      %v1229 = vadd.f32 %v1020, %v1228
      %1230 = vmatmul.f32.gmra.mxu0 %v1119
      %v1231 = vpop.f32.mrf.mxu0
      %v1232 = vadd.f32 %v1023, %v1231
      %1233 = vmatmul.f32.gmra.mxu0 %v1122
      %v1234 = vpop.f32.mrf.mxu0
      %v1235 = vadd.f32 %v1026, %v1234
      %1236 = vmatmul.f32.gmra.mxu0 %v1125
      %v1237 = vpop.f32.mrf.mxu0
      %v1238 = vadd.f32 %v1029, %v1237
      %1239 = vmatmul.f32.gmra.mxu0 %v1128
      %v1240 = vpop.f32.mrf.mxu0
      %v1241 = vadd.f32 %v1032, %v1240
      %1242 = vmatmul.f32.gmra.mxu0 %v1131
      %v1243 = vpop.f32.mrf.mxu0
      %v1244 = vadd.f32 %v1035, %v1243
      %1245 = vmatmul.f32.gmra.mxu0 %v1134
      %v1246 = vpop.f32.mrf.mxu0
      %v1247 = vadd.f32 %v1038, %v1246
      %1248 = vmatmul.f32.gmra.mxu0 %v1137
      %v1249 = vpop.f32.mrf.mxu0
      %v1250 = vadd.f32 %v1041, %v1249
      %1251 = vmatmul.f32.gmra.mxu0 %v1140
      %v1252 = vpop.f32.mrf.mxu0
      %v1253 = vadd.f32 %v1044, %v1252
      %1254 = vmatmul.f32.gmra.mxu0 %v1143
      %v1255 = vpop.f32.mrf.mxu0
      %v1256 = vadd.f32 %v1047, %v1255
      %1257 = vmatmul.f32.gmra.mxu0 %v1146
      %v1258 = vpop.f32.mrf.mxu0
      %v1259 = vadd.f32 %v1050, %v1258
      %1260 = vmatmul.f32.gmra.mxu0 %v1149
      %v1261 = vpop.f32.mrf.mxu0
      %v1262 = vadd.f32 %v1053, %v1261
      %1263 = vmatmul.f32.gmra.mxu0 %v1152
      %v1264 = vpop.f32.mrf.mxu0
      %v1265 = vadd.f32 %v1056, %v1264
      %1266 = vmatmul.f32.gmra.mxu0 %v1155
      %v1267 = vpop.f32.mrf.mxu0
      %v1268 = vadd.f32 %v1059, %v1267
      %1269 = vmatmul.f32.gmra.mxu0 %v1158
      %v1270 = vpop.f32.mrf.mxu0
      %v1271 = vadd.f32 %v1062, %v1270
      %1272 = vmatmul.f32.gmra.mxu0 %v1161
      %v1273 = vpop.f32.mrf.mxu0
      %v1274 = vadd.f32 %v1065, %v1273
      %1275 = vmatmul.f32.gmra.mxu0 %v1164
      %v1276 = vpop.f32.mrf.mxu0
      %v1277 = vadd.f32 %v1068, %v1276
      %1278 = vmatmul.f32.gmra.mxu0 %v1167
      %v1279 = vpop.f32.mrf.mxu0
      %v1280 = vadd.f32 %v1071, %v1279
      %1281 = vmatmul.f32.gmra.mxu0 %v1170
      %v1282 = vpop.f32.mrf.mxu0
      %v1283 = vadd.f32 %v1074, %v1282
      %1284 = vmatmul.f32.gmra.mxu0 %v1173
      %v1285 = vpop.f32.mrf.mxu0
      %v1286 = vadd.f32 %v1077, %v1285
      %1287 = vmatmul.f32.gmra.mxu0 %v1176
      %v1288 = vpop.f32.mrf.mxu0
      %v1289 = vadd.f32 %v1080, %v1288
      %1290 = vmatmul.f32.gmra.mxu0 %v1179
      %v1291 = vpop.f32.mrf.mxu0
      %v1292 = vadd.f32 %v1083, %v1291
      %1293 = vmatmul.f32.gmra.mxu0 %v1182
      %v1294 = vpop.f32.mrf.mxu0
      %v1295 = vadd.f32 %v1086, %v1294
      %1296 = vmatmul.f32.gmra.mxu0 %v1185
      %v1297 = vpop.f32.mrf.mxu0
      %v1298 = vadd.f32 %v1089, %v1297
      %1299 = vmatmul.f32.gmra.mxu0 %v1188
      %v1300 = vpop.f32.mrf.mxu0
      %v1301 = vadd.f32 %v1092, %v1300
      %1302 = vmatmul.f32.gmra.mxu0 %v1191
      %v1303 = vpop.f32.mrf.mxu0
      %v1304 = vadd.f32 %v1095, %v1303
      %1305 = vmatmul.f32.gmra.mxu0 %v1194
      %v1306 = vpop.f32.mrf.mxu0
      %v1307 = vadd.f32 %v1098, %v1306
      %1308 = vmatmul.f32.gmra.mxu0 %v1197
      %v1309 = vpop.f32.mrf.mxu0
      %v1310 = vadd.f32 %v1101, %v1309
      %1311 = vdwg.mxu0
      %s1312 = scalar_lea.vmem [#allocation3], 32
      %v1313 = vld [vmem:[%s1312] sm:$0xff]
      %v1314 = vld [vmem:[%s1312 + $0x8] sm:$0xff]
      %v1315 = vld [vmem:[%s1312 + $0x10] sm:$0xff]
      %v1316 = vld [vmem:[%s1312 + $0x18] sm:$0xff]
      %v1317 = vld [vmem:[%s1312 + $0x20] sm:$0xff]
      %v1318 = vld [vmem:[%s1312 + $0x28] sm:$0xff]
      %v1319 = vld [vmem:[%s1312 + $0x30] sm:$0xff]
      %v1320 = vld [vmem:[%s1312 + $0x38] sm:$0xff]
      %v1321 = vld [vmem:[%s1312 + $0x40] sm:$0xff]
      %v1322 = vld [vmem:[%s1312 + $0x48] sm:$0xff]
      %v1323 = vld [vmem:[%s1312 + $0x50] sm:$0xff]
      %v1324 = vld [vmem:[%s1312 + $0x58] sm:$0xff]
      %v1325 = vld [vmem:[%s1312 + $0x60] sm:$0xff]
      %v1326 = vld [vmem:[%s1312 + $0x68] sm:$0xff]
      %v1327 = vld [vmem:[%s1312 + $0x70] sm:$0xff]
      %v1328 = vld [vmem:[%s1312 + $0x78] sm:$0xff]
      %v1329 = vld [vmem:[%s1312 + $0x80] sm:$0xff]
      %v1330 = vld [vmem:[%s1312 + $0x88] sm:$0xff]
      %v1331 = vld [vmem:[%s1312 + $0x90] sm:$0xff]
      %v1332 = vld [vmem:[%s1312 + $0x98] sm:$0xff]
      %v1333 = vld [vmem:[%s1312 + $0xa0] sm:$0xff]
      %v1334 = vld [vmem:[%s1312 + $0xa8] sm:$0xff]
      %v1335 = vld [vmem:[%s1312 + $0xb0] sm:$0xff]
      %v1336 = vld [vmem:[%s1312 + $0xb8] sm:$0xff]
      %v1337 = vld [vmem:[%s1312 + $0xc0] sm:$0xff]
      %v1338 = vld [vmem:[%s1312 + $0xc8] sm:$0xff]
      %v1339 = vld [vmem:[%s1312 + $0xd0] sm:$0xff]
      %v1340 = vld [vmem:[%s1312 + $0xd8] sm:$0xff]
      %v1341 = vld [vmem:[%s1312 + $0xe0] sm:$0xff]
      %v1342 = vld [vmem:[%s1312 + $0xe8] sm:$0xff]
      %v1343 = vld [vmem:[%s1312 + $0xf0] sm:$0xff]
      %v1344 = vld [vmem:[%s1312 + $0xf8] sm:$0xff]
      %s1345 = scalar_lea.vmem %s1, 48
      %v1346 = vld [vmem:[%s1345] sm:$0xff]
      %v1347 = vld [vmem:[%s1345 + $0x8] sm:$0xff]
      %v1348 = vld [vmem:[%s1345 + $0x10] sm:$0xff]
      %v1350 = vsel %vm893, %v1313, 0
      %v1353 = vsel %vm893, %v1314, 0
      %v1356 = vsel %vm893, %v1315, 0
      %v1359 = vsel %vm893, %v1316, 0
      %v1362 = vsel %vm893, %v1317, 0
      %v1365 = vsel %vm893, %v1318, 0
      %v1368 = vsel %vm893, %v1319, 0
      %v1371 = vsel %vm893, %v1320, 0
      %v1374 = vsel %vm893, %v1321, 0
      %v1377 = vsel %vm893, %v1322, 0
      %v1380 = vsel %vm893, %v1323, 0
      %v1383 = vsel %vm893, %v1324, 0
      %v1386 = vsel %vm893, %v1325, 0
      %v1389 = vsel %vm893, %v1326, 0
      %v1392 = vsel %vm893, %v1327, 0
      %v1395 = vsel %vm893, %v1328, 0
      %v1398 = vsel %vm893, %v1329, 0
      %v1401 = vsel %vm893, %v1330, 0
      %v1404 = vsel %vm893, %v1331, 0
      %v1407 = vsel %vm893, %v1332, 0
      %v1410 = vsel %vm893, %v1333, 0
      %v1413 = vsel %vm893, %v1334, 0
      %v1416 = vsel %vm893, %v1335, 0
      %v1419 = vsel %vm893, %v1336, 0
      %v1422 = vsel %vm893, %v1337, 0
      %v1425 = vsel %vm893, %v1338, 0
      %v1428 = vsel %vm893, %v1339, 0
      %v1431 = vsel %vm893, %v1340, 0
      %v1434 = vsel %vm893, %v1341, 0
      %v1437 = vsel %vm893, %v1342, 0
      %v1440 = vsel %vm893, %v1343, 0
      %v1443 = vsel %vm893, %v1344, 0
      %1445 = vmatpush.msra.mxu0 0.0
      %1446 = vmatpush.msra.mxu0 0.0
      %1447 = vmatpush.msra.mxu0 0.0
      %1448 = vmatpush.msra.mxu0 0.0
      %1449 = vmatpush.msra.mxu0 0.0
      %1450 = vmatpush.msra.mxu0 0.0
      %1451 = vmatpush.msra.mxu0 0.0
      %1452 = vmatpush.msra.mxu0 0.0
      %1453 = vmatpush.msra.mxu0 0.0
      %1454 = vmatpush.msra.mxu0 0.0
      %1455 = vmatpush.msra.mxu0 0.0
      %1456 = vmatpush.msra.mxu0 0.0
      %1457 = vmatpush.msra.mxu0 0.0
      %1458 = vmatpush.msra.mxu0 %v1348
      %1459 = vmatpush.msra.mxu0 %v1347
      %1460 = vmatpush.msra.mxu0 %v1346
      %1461 = vmatmul.f32.gmra.mxu0 %v1350
      %v1462 = vpop.f32.mrf.mxu0
      %v1463 = vadd.f32 0.0, %v1462
      %1464 = vmatmul.f32.gmra.mxu0 %v1353
      %v1465 = vpop.f32.mrf.mxu0
      %v1466 = vadd.f32 0.0, %v1465
      %1467 = vmatmul.f32.gmra.mxu0 %v1356
      %v1468 = vpop.f32.mrf.mxu0
      %v1469 = vadd.f32 0.0, %v1468
      %1470 = vmatmul.f32.gmra.mxu0 %v1359
      %v1471 = vpop.f32.mrf.mxu0
      %v1472 = vadd.f32 0.0, %v1471
      %1473 = vmatmul.f32.gmra.mxu0 %v1362
      %v1474 = vpop.f32.mrf.mxu0
      %v1475 = vadd.f32 0.0, %v1474
      %1476 = vmatmul.f32.gmra.mxu0 %v1365
      %v1477 = vpop.f32.mrf.mxu0
      %v1478 = vadd.f32 0.0, %v1477
      %1479 = vmatmul.f32.gmra.mxu0 %v1368
      %v1480 = vpop.f32.mrf.mxu0
      %v1481 = vadd.f32 0.0, %v1480
      %1482 = vmatmul.f32.gmra.mxu0 %v1371
      %v1483 = vpop.f32.mrf.mxu0
      %v1484 = vadd.f32 0.0, %v1483
      %1485 = vmatmul.f32.gmra.mxu0 %v1374
      %v1486 = vpop.f32.mrf.mxu0
      %v1487 = vadd.f32 0.0, %v1486
      %1488 = vmatmul.f32.gmra.mxu0 %v1377
      %v1489 = vpop.f32.mrf.mxu0
      %v1490 = vadd.f32 0.0, %v1489
      %1491 = vmatmul.f32.gmra.mxu0 %v1380
      %v1492 = vpop.f32.mrf.mxu0
      %v1493 = vadd.f32 0.0, %v1492
      %1494 = vmatmul.f32.gmra.mxu0 %v1383
      %v1495 = vpop.f32.mrf.mxu0
      %v1496 = vadd.f32 0.0, %v1495
      %1497 = vmatmul.f32.gmra.mxu0 %v1386
      %v1498 = vpop.f32.mrf.mxu0
      %v1499 = vadd.f32 0.0, %v1498
      %1500 = vmatmul.f32.gmra.mxu0 %v1389
      %v1501 = vpop.f32.mrf.mxu0
      %v1502 = vadd.f32 0.0, %v1501
      %1503 = vmatmul.f32.gmra.mxu0 %v1392
      %v1504 = vpop.f32.mrf.mxu0
      %v1505 = vadd.f32 0.0, %v1504
      %1506 = vmatmul.f32.gmra.mxu0 %v1395
      %v1507 = vpop.f32.mrf.mxu0
      %v1508 = vadd.f32 0.0, %v1507
      %1509 = vmatmul.f32.gmra.mxu0 %v1398
      %v1510 = vpop.f32.mrf.mxu0
      %v1511 = vadd.f32 0.0, %v1510
      %1512 = vmatmul.f32.gmra.mxu0 %v1401
      %v1513 = vpop.f32.mrf.mxu0
      %v1514 = vadd.f32 0.0, %v1513
      %1515 = vmatmul.f32.gmra.mxu0 %v1404
      %v1516 = vpop.f32.mrf.mxu0
      %v1517 = vadd.f32 0.0, %v1516
      %1518 = vmatmul.f32.gmra.mxu0 %v1407
      %v1519 = vpop.f32.mrf.mxu0
      %v1520 = vadd.f32 0.0, %v1519
      %1521 = vmatmul.f32.gmra.mxu0 %v1410
      %v1522 = vpop.f32.mrf.mxu0
      %v1523 = vadd.f32 0.0, %v1522
      %1524 = vmatmul.f32.gmra.mxu0 %v1413
      %v1525 = vpop.f32.mrf.mxu0
      %v1526 = vadd.f32 0.0, %v1525
      %1527 = vmatmul.f32.gmra.mxu0 %v1416
      %v1528 = vpop.f32.mrf.mxu0
      %v1529 = vadd.f32 0.0, %v1528
      %1530 = vmatmul.f32.gmra.mxu0 %v1419
      %v1531 = vpop.f32.mrf.mxu0
      %v1532 = vadd.f32 0.0, %v1531
      %1533 = vmatmul.f32.gmra.mxu0 %v1422
      %v1534 = vpop.f32.mrf.mxu0
      %v1535 = vadd.f32 0.0, %v1534
      %1536 = vmatmul.f32.gmra.mxu0 %v1425
      %v1537 = vpop.f32.mrf.mxu0
      %v1538 = vadd.f32 0.0, %v1537
      %1539 = vmatmul.f32.gmra.mxu0 %v1428
      %v1540 = vpop.f32.mrf.mxu0
      %v1541 = vadd.f32 0.0, %v1540
      %1542 = vmatmul.f32.gmra.mxu0 %v1431
      %v1543 = vpop.f32.mrf.mxu0
      %v1544 = vadd.f32 0.0, %v1543
      %1545 = vmatmul.f32.gmra.mxu0 %v1434
      %v1546 = vpop.f32.mrf.mxu0
      %v1547 = vadd.f32 0.0, %v1546
      %1548 = vmatmul.f32.gmra.mxu0 %v1437
      %v1549 = vpop.f32.mrf.mxu0
      %v1550 = vadd.f32 0.0, %v1549
      %1551 = vmatmul.f32.gmra.mxu0 %v1440
      %v1552 = vpop.f32.mrf.mxu0
      %v1553 = vadd.f32 0.0, %v1552
      %1554 = vmatmul.f32.gmra.mxu0 %v1443
      %v1555 = vpop.f32.mrf.mxu0
      %v1556 = vadd.f32 0.0, %v1555
      %1557 = vdwg.mxu0
      %v1558 = vadd.f32 %v1217, %v1463
      %v1559 = vadd.f32 %v1220, %v1466
      %v1560 = vadd.f32 %v1223, %v1469
      %v1561 = vadd.f32 %v1226, %v1472
      %v1562 = vadd.f32 %v1229, %v1475
      %v1563 = vadd.f32 %v1232, %v1478
      %v1564 = vadd.f32 %v1235, %v1481
      %v1565 = vadd.f32 %v1238, %v1484
      %v1566 = vadd.f32 %v1241, %v1487
      %v1567 = vadd.f32 %v1244, %v1490
      %v1568 = vadd.f32 %v1247, %v1493
      %v1569 = vadd.f32 %v1250, %v1496
      %v1570 = vadd.f32 %v1253, %v1499
      %v1571 = vadd.f32 %v1256, %v1502
      %v1572 = vadd.f32 %v1259, %v1505
      %v1573 = vadd.f32 %v1262, %v1508
      %v1574 = vadd.f32 %v1265, %v1511
      %v1575 = vadd.f32 %v1268, %v1514
      %v1576 = vadd.f32 %v1271, %v1517
      %v1577 = vadd.f32 %v1274, %v1520
      %v1578 = vadd.f32 %v1277, %v1523
      %v1579 = vadd.f32 %v1280, %v1526
      %v1580 = vadd.f32 %v1283, %v1529
      %v1581 = vadd.f32 %v1286, %v1532
      %v1582 = vadd.f32 %v1289, %v1535
      %v1583 = vadd.f32 %v1292, %v1538
      %v1584 = vadd.f32 %v1295, %v1541
      %v1585 = vadd.f32 %v1298, %v1544
      %v1586 = vadd.f32 %v1301, %v1547
      %v1587 = vadd.f32 %v1304, %v1550
      %v1588 = vadd.f32 %v1307, %v1553
      %v1589 = vadd.f32 %v1310, %v1556
      %v1590 = vsel %vm204, %v1558, 0.0
      %v1591 = vsel %vm204, %v1559, 0.0
      %v1592 = vadd.f32 %v1590, %v1591
      %v1593 = vsel %vm204, %v1560, 0.0
      %v1594 = vadd.f32 %v1592, %v1593
      %v1595 = vsel %vm204, %v1561, 0.0
      %v1596 = vadd.f32 %v1594, %v1595
      %v1597 = vsel %vm204, %v1562, 0.0
      %v1598 = vadd.f32 %v1596, %v1597
      %v1599 = vsel %vm204, %v1563, 0.0
      %v1600 = vadd.f32 %v1598, %v1599
      %v1601 = vsel %vm204, %v1564, 0.0
      %v1602 = vadd.f32 %v1600, %v1601
      %v1603 = vsel %vm204, %v1565, 0.0
      %v1604 = vadd.f32 %v1602, %v1603
      %v1605 = vsel %vm204, %v1566, 0.0
      %v1606 = vadd.f32 %v1604, %v1605
      %v1607 = vsel %vm204, %v1567, 0.0
      %v1608 = vadd.f32 %v1606, %v1607
      %v1609 = vsel %vm204, %v1568, 0.0
      %v1610 = vadd.f32 %v1608, %v1609
      %v1611 = vsel %vm204, %v1569, 0.0
      %v1612 = vadd.f32 %v1610, %v1611
      %v1613 = vsel %vm204, %v1570, 0.0
      %v1614 = vadd.f32 %v1612, %v1613
      %v1615 = vsel %vm204, %v1571, 0.0
      %v1616 = vadd.f32 %v1614, %v1615
      %v1617 = vsel %vm204, %v1572, 0.0
      %v1618 = vadd.f32 %v1616, %v1617
      %v1619 = vsel %vm204, %v1573, 0.0
      %v1620 = vadd.f32 %v1618, %v1619
      %v1621 = vsel %vm204, %v1574, 0.0
      %v1622 = vadd.f32 %v1620, %v1621
      %v1623 = vsel %vm204, %v1575, 0.0
      %v1624 = vadd.f32 %v1622, %v1623
      %v1625 = vsel %vm204, %v1576, 0.0
      %v1626 = vadd.f32 %v1624, %v1625
      %v1627 = vsel %vm204, %v1577, 0.0
      %v1628 = vadd.f32 %v1626, %v1627
      %v1629 = vsel %vm204, %v1578, 0.0
      %v1630 = vadd.f32 %v1628, %v1629
      %v1631 = vsel %vm204, %v1579, 0.0
      %v1632 = vadd.f32 %v1630, %v1631
      %v1633 = vsel %vm204, %v1580, 0.0
      %v1634 = vadd.f32 %v1632, %v1633
      %v1635 = vsel %vm204, %v1581, 0.0
      %v1636 = vadd.f32 %v1634, %v1635
      %v1637 = vsel %vm204, %v1582, 0.0
      %v1638 = vadd.f32 %v1636, %v1637
      %v1639 = vsel %vm204, %v1583, 0.0
      %v1640 = vadd.f32 %v1638, %v1639
      %v1641 = vsel %vm204, %v1584, 0.0
      %v1642 = vadd.f32 %v1640, %v1641
      %v1643 = vsel %vm204, %v1585, 0.0
      %v1644 = vadd.f32 %v1642, %v1643
      %v1645 = vsel %vm204, %v1586, 0.0
      %v1646 = vadd.f32 %v1644, %v1645
      %v1647 = vsel %vm204, %v1587, 0.0
      %v1648 = vadd.f32 %v1646, %v1647
      %v1649 = vsel %vm204, %v1588, 0.0
      %v1650 = vadd.f32 %v1648, %v1649
      %v1651 = vsel %vm204, %v1589, 0.0
      %v1652 = vadd.f32 %v1650, %v1651
      %v1653 = vrot.slane %v1652, 4
      %v1654 = vadd.f32 %v1652, %v1653
      %v1655 = vrot.slane %v1654, 2
      %v1656 = vadd.f32 %v1654, %v1655
      %v1657 = vrot.slane %v1656, 1
      %v1658 = vadd.f32 %v1656, %v1657
      %v1659 = vmul.f32 %v1658, 0.00390625
      %v1660 = vmul.f32 %v1558, %v1558
      %v1661 = vmul.f32 %v1559, %v1559
      %v1662 = vmul.f32 %v1560, %v1560
      %v1663 = vmul.f32 %v1561, %v1561
      %v1664 = vmul.f32 %v1562, %v1562
      %v1665 = vmul.f32 %v1563, %v1563
      %v1666 = vmul.f32 %v1564, %v1564
      %v1667 = vmul.f32 %v1565, %v1565
      %v1668 = vmul.f32 %v1566, %v1566
      %v1669 = vmul.f32 %v1567, %v1567
      %v1670 = vmul.f32 %v1568, %v1568
      %v1671 = vmul.f32 %v1569, %v1569
      %v1672 = vmul.f32 %v1570, %v1570
      %v1673 = vmul.f32 %v1571, %v1571
      %v1674 = vmul.f32 %v1572, %v1572
      %v1675 = vmul.f32 %v1573, %v1573
      %v1676 = vmul.f32 %v1574, %v1574
      %v1677 = vmul.f32 %v1575, %v1575
      %v1678 = vmul.f32 %v1576, %v1576
      %v1679 = vmul.f32 %v1577, %v1577
      %v1680 = vmul.f32 %v1578, %v1578
      %v1681 = vmul.f32 %v1579, %v1579
      %v1682 = vmul.f32 %v1580, %v1580
      %v1683 = vmul.f32 %v1581, %v1581
      %v1684 = vmul.f32 %v1582, %v1582
      %v1685 = vmul.f32 %v1583, %v1583
      %v1686 = vmul.f32 %v1584, %v1584
      %v1687 = vmul.f32 %v1585, %v1585
      %v1688 = vmul.f32 %v1586, %v1586
      %v1689 = vmul.f32 %v1587, %v1587
      %v1690 = vmul.f32 %v1588, %v1588
      %v1691 = vmul.f32 %v1589, %v1589
      %v1692 = vsel %vm204, %v1660, 0.0
      %v1693 = vsel %vm204, %v1661, 0.0
      %v1694 = vadd.f32 %v1692, %v1693
      %v1695 = vsel %vm204, %v1662, 0.0
      %v1696 = vadd.f32 %v1694, %v1695
      %v1697 = vsel %vm204, %v1663, 0.0
      %v1698 = vadd.f32 %v1696, %v1697
      %v1699 = vsel %vm204, %v1664, 0.0
      %v1700 = vadd.f32 %v1698, %v1699
      %v1701 = vsel %vm204, %v1665, 0.0
      %v1702 = vadd.f32 %v1700, %v1701
      %v1703 = vsel %vm204, %v1666, 0.0
      %v1704 = vadd.f32 %v1702, %v1703
      %v1705 = vsel %vm204, %v1667, 0.0
      %v1706 = vadd.f32 %v1704, %v1705
      %v1707 = vsel %vm204, %v1668, 0.0
      %v1708 = vadd.f32 %v1706, %v1707
      %v1709 = vsel %vm204, %v1669, 0.0
      %v1710 = vadd.f32 %v1708, %v1709
      %v1711 = vsel %vm204, %v1670, 0.0
      %v1712 = vadd.f32 %v1710, %v1711
      %v1713 = vsel %vm204, %v1671, 0.0
      %v1714 = vadd.f32 %v1712, %v1713
      %v1715 = vsel %vm204, %v1672, 0.0
      %v1716 = vadd.f32 %v1714, %v1715
      %v1717 = vsel %vm204, %v1673, 0.0
      %v1718 = vadd.f32 %v1716, %v1717
      %v1719 = vsel %vm204, %v1674, 0.0
      %v1720 = vadd.f32 %v1718, %v1719
      %v1721 = vsel %vm204, %v1675, 0.0
      %v1722 = vadd.f32 %v1720, %v1721
      %v1723 = vsel %vm204, %v1676, 0.0
      %v1724 = vadd.f32 %v1722, %v1723
      %v1725 = vsel %vm204, %v1677, 0.0
      %v1726 = vadd.f32 %v1724, %v1725
      %v1727 = vsel %vm204, %v1678, 0.0
      %v1728 = vadd.f32 %v1726, %v1727
      %v1729 = vsel %vm204, %v1679, 0.0
      %v1730 = vadd.f32 %v1728, %v1729
      %v1731 = vsel %vm204, %v1680, 0.0
      %v1732 = vadd.f32 %v1730, %v1731
      %v1733 = vsel %vm204, %v1681, 0.0
      %v1734 = vadd.f32 %v1732, %v1733
      %v1735 = vsel %vm204, %v1682, 0.0
      %v1736 = vadd.f32 %v1734, %v1735
      %v1737 = vsel %vm204, %v1683, 0.0
      %v1738 = vadd.f32 %v1736, %v1737
      %v1739 = vsel %vm204, %v1684, 0.0
      %v1740 = vadd.f32 %v1738, %v1739
      %v1741 = vsel %vm204, %v1685, 0.0
      %v1742 = vadd.f32 %v1740, %v1741
      %v1743 = vsel %vm204, %v1686, 0.0
      %v1744 = vadd.f32 %v1742, %v1743
      %v1745 = vsel %vm204, %v1687, 0.0
      %v1746 = vadd.f32 %v1744, %v1745
      %v1747 = vsel %vm204, %v1688, 0.0
      %v1748 = vadd.f32 %v1746, %v1747
      %v1749 = vsel %vm204, %v1689, 0.0
      %v1750 = vadd.f32 %v1748, %v1749
      %v1751 = vsel %vm204, %v1690, 0.0
      %v1752 = vadd.f32 %v1750, %v1751
      %v1753 = vsel %vm204, %v1691, 0.0
      %v1754 = vadd.f32 %v1752, %v1753
      %v1755 = vrot.slane %v1754, 4
      %v1756 = vadd.f32 %v1754, %v1755
      %v1757 = vrot.slane %v1756, 2
      %v1758 = vadd.f32 %v1756, %v1757
      %v1759 = vrot.slane %v1758, 1
      %v1760 = vadd.f32 %v1758, %v1759
      %v1761 = vmul.f32 %v1760, 0.00390625
      %v1762 = vmul.f32 %v1659, %v1659
      %v1763 = vsub.f32 %v1761, %v1762
      %v1764 = vmax.f32 %v1763, 0.0
      %v1765 = vsub.f32 %v1558, %v1659
      %v1766 = vsub.f32 %v1559, %v1659
      %v1767 = vsub.f32 %v1560, %v1659
      %v1768 = vsub.f32 %v1561, %v1659
      %v1769 = vsub.f32 %v1562, %v1659
      %v1770 = vsub.f32 %v1563, %v1659
      %v1771 = vsub.f32 %v1564, %v1659
      %v1772 = vsub.f32 %v1565, %v1659
      %v1773 = vsub.f32 %v1566, %v1659
      %v1774 = vsub.f32 %v1567, %v1659
      %v1775 = vsub.f32 %v1568, %v1659
      %v1776 = vsub.f32 %v1569, %v1659
      %v1777 = vsub.f32 %v1570, %v1659
      %v1778 = vsub.f32 %v1571, %v1659
      %v1779 = vsub.f32 %v1572, %v1659
      %v1780 = vsub.f32 %v1573, %v1659
      %v1781 = vsub.f32 %v1574, %v1659
      %v1782 = vsub.f32 %v1575, %v1659
      %v1783 = vsub.f32 %v1576, %v1659
      %v1784 = vsub.f32 %v1577, %v1659
      %v1785 = vsub.f32 %v1578, %v1659
      %v1786 = vsub.f32 %v1579, %v1659
      %v1787 = vsub.f32 %v1580, %v1659
      %v1788 = vsub.f32 %v1581, %v1659
      %v1789 = vsub.f32 %v1582, %v1659
      %v1790 = vsub.f32 %v1583, %v1659
      %v1791 = vsub.f32 %v1584, %v1659
      %v1792 = vsub.f32 %v1585, %v1659
      %v1793 = vsub.f32 %v1586, %v1659
      %v1794 = vsub.f32 %v1587, %v1659
      %v1795 = vsub.f32 %v1588, %v1659
      %v1796 = vsub.f32 %v1589, %v1659
      %v1797 = vadd.f32 %v1764, 1e-05
      %v1798 = vrsqrt.pop %v1797
      %v1799 = vmul.f32 %v1798, %v1797
      %v1800 = vmul.f32 %v1799, %v1798
      %v1801 = vmul.f32 0.5, %v1800
      %v1802 = vsub.f32 1.5, %v1801
      %v1803 = vmul.f32 %v1798, %v1802
      %vm1804 = vweird.f32 %v1797
      %vm1805 = vweird.f32 %v1798
      %vm1806 = vmor %vm1804, %vm1805
      %v1807 = vsel %vm1806, %v1798, %v1803
      %v1808 = vmul.f32 %v1765, %v1807
      %v1809 = vmul.f32 %v1766, %v1807
      %v1810 = vmul.f32 %v1767, %v1807
      %v1811 = vmul.f32 %v1768, %v1807
      %v1812 = vmul.f32 %v1769, %v1807
      %v1813 = vmul.f32 %v1770, %v1807
      %v1814 = vmul.f32 %v1771, %v1807
      %v1815 = vmul.f32 %v1772, %v1807
      %v1816 = vmul.f32 %v1773, %v1807
      %v1817 = vmul.f32 %v1774, %v1807
      %v1818 = vmul.f32 %v1775, %v1807
      %v1819 = vmul.f32 %v1776, %v1807
      %v1820 = vmul.f32 %v1777, %v1807
      %v1821 = vmul.f32 %v1778, %v1807
      %v1822 = vmul.f32 %v1779, %v1807
      %v1823 = vmul.f32 %v1780, %v1807
      %v1824 = vmul.f32 %v1781, %v1807
      %v1825 = vmul.f32 %v1782, %v1807
      %v1826 = vmul.f32 %v1783, %v1807
      %v1827 = vmul.f32 %v1784, %v1807
      %v1828 = vmul.f32 %v1785, %v1807
      %v1829 = vmul.f32 %v1786, %v1807
      %v1830 = vmul.f32 %v1787, %v1807
      %v1831 = vmul.f32 %v1788, %v1807
      %v1832 = vmul.f32 %v1789, %v1807
      %v1833 = vmul.f32 %v1790, %v1807
      %v1834 = vmul.f32 %v1791, %v1807
      %v1835 = vmul.f32 %v1792, %v1807
      %v1836 = vmul.f32 %v1793, %v1807
      %v1837 = vmul.f32 %v1794, %v1807
      %v1838 = vmul.f32 %v1795, %v1807
      %v1839 = vmul.f32 %v1796, %v1807
      %v1840 = vmax.f32 %v1808, 0.0
      %v1841 = vmax.f32 %v1809, 0.0
      %v1842 = vmax.f32 %v1810, 0.0
      %v1843 = vmax.f32 %v1811, 0.0
      %v1844 = vmax.f32 %v1812, 0.0
      %v1845 = vmax.f32 %v1813, 0.0
      %v1846 = vmax.f32 %v1814, 0.0
      %v1847 = vmax.f32 %v1815, 0.0
      %v1848 = vmax.f32 %v1816, 0.0
      %v1849 = vmax.f32 %v1817, 0.0
      %v1850 = vmax.f32 %v1818, 0.0
      %v1851 = vmax.f32 %v1819, 0.0
      %v1852 = vmax.f32 %v1820, 0.0
      %v1853 = vmax.f32 %v1821, 0.0
      %v1854 = vmax.f32 %v1822, 0.0
      %v1855 = vmax.f32 %v1823, 0.0
      %v1856 = vmax.f32 %v1824, 0.0
      %v1857 = vmax.f32 %v1825, 0.0
      %v1858 = vmax.f32 %v1826, 0.0
      %v1859 = vmax.f32 %v1827, 0.0
      %v1860 = vmax.f32 %v1828, 0.0
      %v1861 = vmax.f32 %v1829, 0.0
      %v1862 = vmax.f32 %v1830, 0.0
      %v1863 = vmax.f32 %v1831, 0.0
      %v1864 = vmax.f32 %v1832, 0.0
      %v1865 = vmax.f32 %v1833, 0.0
      %v1866 = vmax.f32 %v1834, 0.0
      %v1867 = vmax.f32 %v1835, 0.0
      %v1868 = vmax.f32 %v1836, 0.0
      %v1869 = vmax.f32 %v1837, 0.0
      %v1870 = vmax.f32 %v1838, 0.0
      %v1871 = vmax.f32 %v1839, 0.0
      %1872 = vst.msk [vmem:[%s203 + $0x1] sm:$0xff] %vm204, %v1840
      %1873 = vst.msk [vmem:[%s203 + $0x9] sm:$0xff] %vm204, %v1841
      %1874 = vst.msk [vmem:[%s203 + $0x19] sm:$0xff] %vm204, %v1842
      %1875 = vst.msk [vmem:[%s203 + $0x21] sm:$0xff] %vm204, %v1843
      %1876 = vst.msk [vmem:[%s203 + $0x31] sm:$0xff] %vm204, %v1844
      %1877 = vst.msk [vmem:[%s203 + $0x39] sm:$0xff] %vm204, %v1845
      %1878 = vst.msk [vmem:[%s203 + $0x49] sm:$0xff] %vm204, %v1846
      %1879 = vst.msk [vmem:[%s203 + $0x51] sm:$0xff] %vm204, %v1847
      %1880 = vst.msk [vmem:[%s203 + $0x61] sm:$0xff] %vm204, %v1848
      %1881 = vst.msk [vmem:[%s203 + $0x69] sm:$0xff] %vm204, %v1849
      %1882 = vst.msk [vmem:[%s203 + $0x79] sm:$0xff] %vm204, %v1850
      %1883 = vst.msk [vmem:[%s203 + $0x81] sm:$0xff] %vm204, %v1851
      %1884 = vst.msk [vmem:[%s203 + $0x91] sm:$0xff] %vm204, %v1852
      %1885 = vst.msk [vmem:[%s203 + $0x99] sm:$0xff] %vm204, %v1853
      %1886 = vst.msk [vmem:[%s203 + $0xa9] sm:$0xff] %vm204, %v1854
      %1887 = vst.msk [vmem:[%s203 + $0xb1] sm:$0xff] %vm204, %v1855
      %1888 = vst.msk [vmem:[%s203 + $0xc1] sm:$0xff] %vm204, %v1856
      %1889 = vst.msk [vmem:[%s203 + $0xc9] sm:$0xff] %vm204, %v1857
      %1890 = vst.msk [vmem:[%s203 + $0xd9] sm:$0xff] %vm204, %v1858
      %1891 = vst.msk [vmem:[%s203 + $0xe1] sm:$0xff] %vm204, %v1859
      %1892 = vst.msk [vmem:[%s203 + $0xf1] sm:$0xff] %vm204, %v1860
      %1893 = vst.msk [vmem:[%s203 + $0xf9] sm:$0xff] %vm204, %v1861
      %1894 = vst.msk [vmem:[%s203 + $0x109] sm:$0xff] %vm204, %v1862
      %1895 = vst.msk [vmem:[%s203 + $0x111] sm:$0xff] %vm204, %v1863
      %1896 = vst.msk [vmem:[%s203 + $0x121] sm:$0xff] %vm204, %v1864
      %1897 = vst.msk [vmem:[%s203 + $0x129] sm:$0xff] %vm204, %v1865
      %1898 = vst.msk [vmem:[%s203 + $0x139] sm:$0xff] %vm204, %v1866
      %1899 = vst.msk [vmem:[%s203 + $0x141] sm:$0xff] %vm204, %v1867
      %1900 = vst.msk [vmem:[%s203 + $0x151] sm:$0xff] %vm204, %v1868
      %1901 = vst.msk [vmem:[%s203 + $0x159] sm:$0xff] %vm204, %v1869
      %1902 = vst.msk [vmem:[%s203 + $0x169] sm:$0xff] %vm204, %v1870
      %1903 = vst.msk [vmem:[%s203 + $0x171] sm:$0xff] %vm204, %v1871
      %1904 = vst.msk [vmem:[#allocation2 + $0x1] sm:$0xff] %vm204, %v1842
      %1905 = vst.msk [vmem:[#allocation2 + $0x9] sm:$0xff] %vm204, %v1843
      %1906 = vst.msk [vmem:[%s239 + $0x1] sm:$0xff] %vm204, %v1868
      %1907 = vst.msk [vmem:[%s239 + $0x9] sm:$0xff] %vm204, %v1869
      %v1908 = vld [vmem:[#allocation2 + $0x2] sm:$0x1]
      %v1909 = vld [vmem:[#allocation2 + $0x1a] sm:$0x1]
      %v1910 = vld [vmem:[#allocation2 + $0x32] sm:$0x1]
      %v1911 = vld [vmem:[#allocation2 + $0x4a] sm:$0x1]
      %v1912 = vld [vmem:[#allocation2 + $0x62] sm:$0x1]
      %v1913 = vld [vmem:[#allocation2 + $0x7a] sm:$0x1]
      %v1914 = vld [vmem:[#allocation2 + $0x92] sm:$0x1]
      %v1915 = vld [vmem:[#allocation2 + $0xaa] sm:$0x1]
      %v1916 = vld [vmem:[#allocation2 + $0xc2] sm:$0x1]
      %v1917 = vld [vmem:[#allocation2 + $0xda] sm:$0x1]
      %v1918 = vld [vmem:[#allocation2 + $0xf2] sm:$0x1]
      %v1919 = vld [vmem:[#allocation2 + $0x10a] sm:$0x1]
      %v1920 = vld [vmem:[#allocation2 + $0x122] sm:$0x1]
      %v1921 = vld [vmem:[#allocation2 + $0x13a] sm:$0x1]
      %v1922 = vld [vmem:[#allocation2 + $0x152] sm:$0x1]
      %v1923 = vld [vmem:[#allocation2 + $0x16a] sm:$0x1]
      %v1924 = vld [vmem:[#allocation2 + $0x182] sm:$0x1]
      %v1925 = vld [vmem:[#allocation2 + $0x19a] sm:$0x1]
      %1926 = vst.msk [vmem:[#allocation2] sm:$0x1] %vm260, %v1908
      %1927 = vst.msk [vmem:[#allocation2 + $0x18] sm:$0x1] %vm260, %v1909
      %1928 = vst.msk [vmem:[#allocation2 + $0x30] sm:$0x1] %vm260, %v1910
      %1929 = vst.msk [vmem:[#allocation2 + $0x48] sm:$0x1] %vm260, %v1911
      %1930 = vst.msk [vmem:[#allocation2 + $0x60] sm:$0x1] %vm260, %v1912
      %1931 = vst.msk [vmem:[#allocation2 + $0x78] sm:$0x1] %vm260, %v1913
      %1932 = vst.msk [vmem:[#allocation2 + $0x90] sm:$0x1] %vm260, %v1914
      %1933 = vst.msk [vmem:[#allocation2 + $0xa8] sm:$0x1] %vm260, %v1915
      %1934 = vst.msk [vmem:[#allocation2 + $0xc0] sm:$0x1] %vm260, %v1916
      %1935 = vst.msk [vmem:[#allocation2 + $0xd8] sm:$0x1] %vm260, %v1917
      %1936 = vst.msk [vmem:[#allocation2 + $0xf0] sm:$0x1] %vm260, %v1918
      %1937 = vst.msk [vmem:[#allocation2 + $0x108] sm:$0x1] %vm260, %v1919
      %1938 = vst.msk [vmem:[#allocation2 + $0x120] sm:$0x1] %vm260, %v1920
      %1939 = vst.msk [vmem:[#allocation2 + $0x138] sm:$0x1] %vm260, %v1921
      %1940 = vst.msk [vmem:[#allocation2 + $0x150] sm:$0x1] %vm260, %v1922
      %1941 = vst.msk [vmem:[#allocation2 + $0x168] sm:$0x1] %vm260, %v1923
      %1942 = vst.msk [vmem:[#allocation2 + $0x180] sm:$0x1] %vm260, %v1924
      %1943 = vst.msk [vmem:[#allocation2 + $0x198] sm:$0x1] %vm260, %v1925
      %v1944 = vld [vmem:[#allocation2 + $0xf] sm:$0x1]
      %v1945 = vld [vmem:[#allocation2 + $0x27] sm:$0x1]
      %v1946 = vld [vmem:[#allocation2 + $0x3f] sm:$0x1]
      %v1947 = vld [vmem:[#allocation2 + $0x57] sm:$0x1]
      %v1948 = vld [vmem:[#allocation2 + $0x6f] sm:$0x1]
      %v1949 = vld [vmem:[#allocation2 + $0x87] sm:$0x1]
      %v1950 = vld [vmem:[#allocation2 + $0x9f] sm:$0x1]
      %v1951 = vld [vmem:[#allocation2 + $0xb7] sm:$0x1]
      %v1952 = vld [vmem:[#allocation2 + $0xcf] sm:$0x1]
      %v1953 = vld [vmem:[#allocation2 + $0xe7] sm:$0x1]
      %v1954 = vld [vmem:[#allocation2 + $0xff] sm:$0x1]
      %v1955 = vld [vmem:[#allocation2 + $0x117] sm:$0x1]
      %v1956 = vld [vmem:[#allocation2 + $0x12f] sm:$0x1]
      %v1957 = vld [vmem:[#allocation2 + $0x147] sm:$0x1]
      %v1958 = vld [vmem:[#allocation2 + $0x15f] sm:$0x1]
      %v1959 = vld [vmem:[#allocation2 + $0x177] sm:$0x1]
      %v1960 = vld [vmem:[#allocation2 + $0x18f] sm:$0x1]
      %v1961 = vld [vmem:[#allocation2 + $0x1a7] sm:$0x1]
      %1962 = vst.msk [vmem:[#allocation2 + $0x11] sm:$0x1] %vm260, %v1944
      %1963 = vst.msk [vmem:[#allocation2 + $0x29] sm:$0x1] %vm260, %v1945
      %1964 = vst.msk [vmem:[#allocation2 + $0x41] sm:$0x1] %vm260, %v1946
      %1965 = vst.msk [vmem:[#allocation2 + $0x59] sm:$0x1] %vm260, %v1947
      %1966 = vst.msk [vmem:[#allocation2 + $0x71] sm:$0x1] %vm260, %v1948
      %1967 = vst.msk [vmem:[#allocation2 + $0x89] sm:$0x1] %vm260, %v1949
      %1968 = vst.msk [vmem:[#allocation2 + $0xa1] sm:$0x1] %vm260, %v1950
      %1969 = vst.msk [vmem:[#allocation2 + $0xb9] sm:$0x1] %vm260, %v1951
      %1970 = vst.msk [vmem:[#allocation2 + $0xd1] sm:$0x1] %vm260, %v1952
      %1971 = vst.msk [vmem:[#allocation2 + $0xe9] sm:$0x1] %vm260, %v1953
      %1972 = vst.msk [vmem:[#allocation2 + $0x101] sm:$0x1] %vm260, %v1954
      %1973 = vst.msk [vmem:[#allocation2 + $0x119] sm:$0x1] %vm260, %v1955
      %1974 = vst.msk [vmem:[#allocation2 + $0x131] sm:$0x1] %vm260, %v1956
      %1975 = vst.msk [vmem:[#allocation2 + $0x149] sm:$0x1] %vm260, %v1957
      %1976 = vst.msk [vmem:[#allocation2 + $0x161] sm:$0x1] %vm260, %v1958
      %1977 = vst.msk [vmem:[#allocation2 + $0x179] sm:$0x1] %vm260, %v1959
      %1978 = vst.msk [vmem:[#allocation2 + $0x191] sm:$0x1] %vm260, %v1960
      %1979 = vst.msk [vmem:[#allocation2 + $0x1a9] sm:$0x1] %vm260, %v1961
      %v1980 = vld [vmem:[#allocation2] sm:$0xff]
      %v1981 = vld [vmem:[#allocation2 + $0x8] sm:$0xff]
      %v1982 = vld [vmem:[#allocation2 + $0x18] sm:$0xff]
      %v1983 = vld [vmem:[#allocation2 + $0x20] sm:$0xff]
      %v1984 = vld [vmem:[#allocation2 + $0x30] sm:$0xff]
      %v1985 = vld [vmem:[#allocation2 + $0x38] sm:$0xff]
      %v1986 = vld [vmem:[#allocation2 + $0x48] sm:$0xff]
      %v1987 = vld [vmem:[#allocation2 + $0x50] sm:$0xff]
      %v1988 = vld [vmem:[#allocation2 + $0x60] sm:$0xff]
      %v1989 = vld [vmem:[#allocation2 + $0x68] sm:$0xff]
      %v1990 = vld [vmem:[#allocation2 + $0x78] sm:$0xff]
      %v1991 = vld [vmem:[#allocation2 + $0x80] sm:$0xff]
      %v1992 = vld [vmem:[#allocation2 + $0x90] sm:$0xff]
      %v1993 = vld [vmem:[#allocation2 + $0x98] sm:$0xff]
      %v1994 = vld [vmem:[#allocation2 + $0xa8] sm:$0xff]
      %v1995 = vld [vmem:[#allocation2 + $0xb0] sm:$0xff]
      %v1996 = vld [vmem:[#allocation2 + $0xc0] sm:$0xff]
      %v1997 = vld [vmem:[#allocation2 + $0xc8] sm:$0xff]
      %v1998 = vld [vmem:[#allocation2 + $0xd8] sm:$0xff]
      %v1999 = vld [vmem:[#allocation2 + $0xe0] sm:$0xff]
      %v2000 = vld [vmem:[#allocation2 + $0xf0] sm:$0xff]
      %v2001 = vld [vmem:[#allocation2 + $0xf8] sm:$0xff]
      %v2002 = vld [vmem:[#allocation2 + $0x108] sm:$0xff]
      %v2003 = vld [vmem:[#allocation2 + $0x110] sm:$0xff]
      %v2004 = vld [vmem:[#allocation2 + $0x120] sm:$0xff]
      %v2005 = vld [vmem:[#allocation2 + $0x128] sm:$0xff]
      %v2006 = vld [vmem:[#allocation2 + $0x138] sm:$0xff]
      %v2007 = vld [vmem:[#allocation2 + $0x140] sm:$0xff]
      %v2008 = vld [vmem:[#allocation2 + $0x150] sm:$0xff]
      %v2009 = vld [vmem:[#allocation2 + $0x158] sm:$0xff]
      %v2010 = vld [vmem:[#allocation2 + $0x168] sm:$0xff]
      %v2011 = vld [vmem:[#allocation2 + $0x170] sm:$0xff]
      %v2012 = vld [vmem:[#allocation2 + $0x180] sm:$0xff]
      %v2013 = vld [vmem:[#allocation2 + $0x188] sm:$0xff]
      %v2014 = vld [vmem:[#allocation2 + $0x198] sm:$0xff]
      %v2015 = vld [vmem:[#allocation2 + $0x1a0] sm:$0xff]
      %2016 = vst.msk [vmem:[#allocation3] sm:$0xff] %vm204, %v1980
      %2017 = vst.msk [vmem:[#allocation3 + $0x8] sm:$0xff] %vm204, %v1981
      %2018 = vst.msk [vmem:[#allocation3 + $0x10] sm:$0xff] %vm204, %v1982
      %2019 = vst.msk [vmem:[#allocation3 + $0x18] sm:$0xff] %vm204, %v1983
      %2020 = vst.msk [vmem:[#allocation3 + $0x20] sm:$0xff] %vm204, %v1984
      %2021 = vst.msk [vmem:[#allocation3 + $0x28] sm:$0xff] %vm204, %v1985
      %2022 = vst.msk [vmem:[#allocation3 + $0x30] sm:$0xff] %vm204, %v1986
      %2023 = vst.msk [vmem:[#allocation3 + $0x38] sm:$0xff] %vm204, %v1987
      %2024 = vst.msk [vmem:[#allocation3 + $0x40] sm:$0xff] %vm204, %v1988
      %2025 = vst.msk [vmem:[#allocation3 + $0x48] sm:$0xff] %vm204, %v1989
      %2026 = vst.msk [vmem:[#allocation3 + $0x50] sm:$0xff] %vm204, %v1990
      %2027 = vst.msk [vmem:[#allocation3 + $0x58] sm:$0xff] %vm204, %v1991
      %2028 = vst.msk [vmem:[#allocation3 + $0x60] sm:$0xff] %vm204, %v1992
      %2029 = vst.msk [vmem:[#allocation3 + $0x68] sm:$0xff] %vm204, %v1993
      %2030 = vst.msk [vmem:[#allocation3 + $0x70] sm:$0xff] %vm204, %v1994
      %2031 = vst.msk [vmem:[#allocation3 + $0x78] sm:$0xff] %vm204, %v1995
      %2032 = vst.msk [vmem:[#allocation3 + $0x80] sm:$0xff] %vm204, %v1996
      %2033 = vst.msk [vmem:[#allocation3 + $0x88] sm:$0xff] %vm204, %v1997
      %2034 = vst.msk [vmem:[#allocation3 + $0x90] sm:$0xff] %vm204, %v1998
      %2035 = vst.msk [vmem:[#allocation3 + $0x98] sm:$0xff] %vm204, %v1999
      %2036 = vst.msk [vmem:[#allocation3 + $0xa0] sm:$0xff] %vm204, %v2000
      %2037 = vst.msk [vmem:[#allocation3 + $0xa8] sm:$0xff] %vm204, %v2001
      %2038 = vst.msk [vmem:[#allocation3 + $0xb0] sm:$0xff] %vm204, %v2002
      %2039 = vst.msk [vmem:[#allocation3 + $0xb8] sm:$0xff] %vm204, %v2003
      %2040 = vst.msk [vmem:[#allocation3 + $0xc0] sm:$0xff] %vm204, %v2004
      %2041 = vst.msk [vmem:[#allocation3 + $0xc8] sm:$0xff] %vm204, %v2005
      %2042 = vst.msk [vmem:[#allocation3 + $0xd0] sm:$0xff] %vm204, %v2006
      %2043 = vst.msk [vmem:[#allocation3 + $0xd8] sm:$0xff] %vm204, %v2007
      %2044 = vst.msk [vmem:[#allocation3 + $0xe0] sm:$0xff] %vm204, %v2008
      %2045 = vst.msk [vmem:[#allocation3 + $0xe8] sm:$0xff] %vm204, %v2009
      %2046 = vst.msk [vmem:[#allocation3 + $0xf0] sm:$0xff] %vm204, %v2010
      %2047 = vst.msk [vmem:[#allocation3 + $0xf8] sm:$0xff] %vm204, %v2011
      %2048 = vst.msk [vmem:[#allocation3 + $0x100] sm:$0xff] %vm204, %v2012
      %2049 = vst.msk [vmem:[#allocation3 + $0x108] sm:$0xff] %vm204, %v2013
      %2050 = vst.msk [vmem:[#allocation3 + $0x110] sm:$0xff] %vm204, %v2014
      %2051 = vst.msk [vmem:[#allocation3 + $0x118] sm:$0xff] %vm204, %v2015
      %v2052 = vld [vmem:[#allocation2 + $0x1] sm:$0xff]
      %v2053 = vld [vmem:[#allocation2 + $0x9] sm:$0xff]
      %v2054 = vld [vmem:[#allocation2 + $0x19] sm:$0xff]
      %v2055 = vld [vmem:[#allocation2 + $0x21] sm:$0xff]
      %v2056 = vld [vmem:[#allocation2 + $0x31] sm:$0xff]
      %v2057 = vld [vmem:[#allocation2 + $0x39] sm:$0xff]
      %v2058 = vld [vmem:[#allocation2 + $0x49] sm:$0xff]
      %v2059 = vld [vmem:[#allocation2 + $0x51] sm:$0xff]
      %v2060 = vld [vmem:[#allocation2 + $0x61] sm:$0xff]
      %v2061 = vld [vmem:[#allocation2 + $0x69] sm:$0xff]
      %v2062 = vld [vmem:[#allocation2 + $0x79] sm:$0xff]
      %v2063 = vld [vmem:[#allocation2 + $0x81] sm:$0xff]
      %v2064 = vld [vmem:[#allocation2 + $0x91] sm:$0xff]
      %v2065 = vld [vmem:[#allocation2 + $0x99] sm:$0xff]
      %v2066 = vld [vmem:[#allocation2 + $0xa9] sm:$0xff]
      %v2067 = vld [vmem:[#allocation2 + $0xb1] sm:$0xff]
      %v2068 = vld [vmem:[#allocation2 + $0xc1] sm:$0xff]
      %v2069 = vld [vmem:[#allocation2 + $0xc9] sm:$0xff]
      %v2070 = vld [vmem:[#allocation2 + $0xd9] sm:$0xff]
      %v2071 = vld [vmem:[#allocation2 + $0xe1] sm:$0xff]
      %v2072 = vld [vmem:[#allocation2 + $0xf1] sm:$0xff]
      %v2073 = vld [vmem:[#allocation2 + $0xf9] sm:$0xff]
      %v2074 = vld [vmem:[#allocation2 + $0x109] sm:$0xff]
      %v2075 = vld [vmem:[#allocation2 + $0x111] sm:$0xff]
      %v2076 = vld [vmem:[#allocation2 + $0x121] sm:$0xff]
      %v2077 = vld [vmem:[#allocation2 + $0x129] sm:$0xff]
      %v2078 = vld [vmem:[#allocation2 + $0x139] sm:$0xff]
      %v2079 = vld [vmem:[#allocation2 + $0x141] sm:$0xff]
      %v2080 = vld [vmem:[#allocation2 + $0x151] sm:$0xff]
      %v2081 = vld [vmem:[#allocation2 + $0x159] sm:$0xff]
      %v2082 = vld [vmem:[#allocation2 + $0x169] sm:$0xff]
      %v2083 = vld [vmem:[#allocation2 + $0x171] sm:$0xff]
      %v2084 = vld [vmem:[#allocation2 + $0x181] sm:$0xff]
      %v2085 = vld [vmem:[#allocation2 + $0x189] sm:$0xff]
      %v2086 = vld [vmem:[#allocation2 + $0x199] sm:$0xff]
      %v2087 = vld [vmem:[#allocation2 + $0x1a1] sm:$0xff]
      %2124 = vrot.lane.b32.xlu0 %v2052, 8
      %v2125 = vpop.permute.xlu0 %2124
      %2126 = vrot.lane.b32.xlu0 %v2053, 8
      %v2127 = vpop.permute.xlu0 %2126
      %2128 = vrot.lane.b32.xlu0 %v2054, 8
      %v2129 = vpop.permute.xlu0 %2128
      %2130 = vrot.lane.b32.xlu0 %v2055, 8
      %v2131 = vpop.permute.xlu0 %2130
      %2132 = vrot.lane.b32.xlu0 %v2056, 8
      %v2133 = vpop.permute.xlu0 %2132
      %2134 = vrot.lane.b32.xlu0 %v2057, 8
      %v2135 = vpop.permute.xlu0 %2134
      %2136 = vrot.lane.b32.xlu0 %v2058, 8
      %v2137 = vpop.permute.xlu0 %2136
      %2138 = vrot.lane.b32.xlu0 %v2059, 8
      %v2139 = vpop.permute.xlu0 %2138
      %2140 = vrot.lane.b32.xlu0 %v2060, 8
      %v2141 = vpop.permute.xlu0 %2140
      %2142 = vrot.lane.b32.xlu0 %v2061, 8
      %v2143 = vpop.permute.xlu0 %2142
      %2144 = vrot.lane.b32.xlu0 %v2062, 8
      %v2145 = vpop.permute.xlu0 %2144
      %2146 = vrot.lane.b32.xlu0 %v2063, 8
      %v2147 = vpop.permute.xlu0 %2146
      %2148 = vrot.lane.b32.xlu0 %v2064, 8
      %v2149 = vpop.permute.xlu0 %2148
      %2150 = vrot.lane.b32.xlu0 %v2065, 8
      %v2151 = vpop.permute.xlu0 %2150
      %2152 = vrot.lane.b32.xlu0 %v2066, 8
      %v2153 = vpop.permute.xlu0 %2152
      %2154 = vrot.lane.b32.xlu0 %v2067, 8
      %v2155 = vpop.permute.xlu0 %2154
      %2156 = vrot.lane.b32.xlu0 %v2068, 8
      %v2157 = vpop.permute.xlu0 %2156
      %2158 = vrot.lane.b32.xlu0 %v2069, 8
      %v2159 = vpop.permute.xlu0 %2158
      %2160 = vrot.lane.b32.xlu0 %v2070, 8
      %v2161 = vpop.permute.xlu0 %2160
      %2162 = vrot.lane.b32.xlu0 %v2071, 8
      %v2163 = vpop.permute.xlu0 %2162
      %2164 = vrot.lane.b32.xlu0 %v2072, 8
      %v2165 = vpop.permute.xlu0 %2164
      %2166 = vrot.lane.b32.xlu0 %v2073, 8
      %v2167 = vpop.permute.xlu0 %2166
      %2168 = vrot.lane.b32.xlu0 %v2074, 8
      %v2169 = vpop.permute.xlu0 %2168
      %2170 = vrot.lane.b32.xlu0 %v2075, 8
      %v2171 = vpop.permute.xlu0 %2170
      %2172 = vrot.lane.b32.xlu0 %v2076, 8
      %v2173 = vpop.permute.xlu0 %2172
      %2174 = vrot.lane.b32.xlu0 %v2077, 8
      %v2175 = vpop.permute.xlu0 %2174
      %2176 = vrot.lane.b32.xlu0 %v2078, 8
      %v2177 = vpop.permute.xlu0 %2176
      %2178 = vrot.lane.b32.xlu0 %v2079, 8
      %v2179 = vpop.permute.xlu0 %2178
      %2180 = vrot.lane.b32.xlu0 %v2080, 8
      %v2181 = vpop.permute.xlu0 %2180
      %2182 = vrot.lane.b32.xlu0 %v2081, 8
      %v2183 = vpop.permute.xlu0 %2182
      %2184 = vrot.lane.b32.xlu0 %v2082, 8
      %v2185 = vpop.permute.xlu0 %2184
      %2186 = vrot.lane.b32.xlu0 %v2083, 8
      %v2187 = vpop.permute.xlu0 %2186
      %2188 = vrot.lane.b32.xlu0 %v2084, 8
      %v2189 = vpop.permute.xlu0 %2188
      %2190 = vrot.lane.b32.xlu0 %v2085, 8
      %v2191 = vpop.permute.xlu0 %2190
      %2192 = vrot.lane.b32.xlu0 %v2086, 8
      %v2193 = vpop.permute.xlu0 %2192
      %2194 = vrot.lane.b32.xlu0 %v2087, 8
      %v2195 = vpop.permute.xlu0 %2194
      %2232 = vst.msk [vmem:[#allocation3] sm:$0xff] %vm567, %v2125
      %2233 = vst.msk [vmem:[#allocation3 + $0x8] sm:$0xff] %vm567, %v2127
      %2234 = vst.msk [vmem:[#allocation3 + $0x10] sm:$0xff] %vm567, %v2129
      %2235 = vst.msk [vmem:[#allocation3 + $0x18] sm:$0xff] %vm567, %v2131
      %2236 = vst.msk [vmem:[#allocation3 + $0x20] sm:$0xff] %vm567, %v2133
      %2237 = vst.msk [vmem:[#allocation3 + $0x28] sm:$0xff] %vm567, %v2135
      %2238 = vst.msk [vmem:[#allocation3 + $0x30] sm:$0xff] %vm567, %v2137
      %2239 = vst.msk [vmem:[#allocation3 + $0x38] sm:$0xff] %vm567, %v2139
      %2240 = vst.msk [vmem:[#allocation3 + $0x40] sm:$0xff] %vm567, %v2141
      %2241 = vst.msk [vmem:[#allocation3 + $0x48] sm:$0xff] %vm567, %v2143
      %2242 = vst.msk [vmem:[#allocation3 + $0x50] sm:$0xff] %vm567, %v2145
      %2243 = vst.msk [vmem:[#allocation3 + $0x58] sm:$0xff] %vm567, %v2147
      %2244 = vst.msk [vmem:[#allocation3 + $0x60] sm:$0xff] %vm567, %v2149
      %2245 = vst.msk [vmem:[#allocation3 + $0x68] sm:$0xff] %vm567, %v2151
      %2246 = vst.msk [vmem:[#allocation3 + $0x70] sm:$0xff] %vm567, %v2153
      %2247 = vst.msk [vmem:[#allocation3 + $0x78] sm:$0xff] %vm567, %v2155
      %2248 = vst.msk [vmem:[#allocation3 + $0x80] sm:$0xff] %vm567, %v2157
      %2249 = vst.msk [vmem:[#allocation3 + $0x88] sm:$0xff] %vm567, %v2159
      %2250 = vst.msk [vmem:[#allocation3 + $0x90] sm:$0xff] %vm567, %v2161
      %2251 = vst.msk [vmem:[#allocation3 + $0x98] sm:$0xff] %vm567, %v2163
      %2252 = vst.msk [vmem:[#allocation3 + $0xa0] sm:$0xff] %vm567, %v2165
      %2253 = vst.msk [vmem:[#allocation3 + $0xa8] sm:$0xff] %vm567, %v2167
      %2254 = vst.msk [vmem:[#allocation3 + $0xb0] sm:$0xff] %vm567, %v2169
      %2255 = vst.msk [vmem:[#allocation3 + $0xb8] sm:$0xff] %vm567, %v2171
      %2256 = vst.msk [vmem:[#allocation3 + $0xc0] sm:$0xff] %vm567, %v2173
      %2257 = vst.msk [vmem:[#allocation3 + $0xc8] sm:$0xff] %vm567, %v2175
      %2258 = vst.msk [vmem:[#allocation3 + $0xd0] sm:$0xff] %vm567, %v2177
      %2259 = vst.msk [vmem:[#allocation3 + $0xd8] sm:$0xff] %vm567, %v2179
      %2260 = vst.msk [vmem:[#allocation3 + $0xe0] sm:$0xff] %vm567, %v2181
      %2261 = vst.msk [vmem:[#allocation3 + $0xe8] sm:$0xff] %vm567, %v2183
      %2262 = vst.msk [vmem:[#allocation3 + $0xf0] sm:$0xff] %vm567, %v2185
      %2263 = vst.msk [vmem:[#allocation3 + $0xf8] sm:$0xff] %vm567, %v2187
      %2264 = vst.msk [vmem:[#allocation3 + $0x100] sm:$0xff] %vm567, %v2189
      %2265 = vst.msk [vmem:[#allocation3 + $0x108] sm:$0xff] %vm567, %v2191
      %2266 = vst.msk [vmem:[#allocation3 + $0x110] sm:$0xff] %vm567, %v2193
      %2267 = vst.msk [vmem:[#allocation3 + $0x118] sm:$0xff] %vm567, %v2195
      %v2268 = vld [vmem:[#allocation2 + $0x2] sm:$0xff]
      %v2269 = vld [vmem:[#allocation2 + $0xa] sm:$0xff]
      %v2270 = vld [vmem:[#allocation2 + $0x1a] sm:$0xff]
      %v2271 = vld [vmem:[#allocation2 + $0x22] sm:$0xff]
      %v2272 = vld [vmem:[#allocation2 + $0x32] sm:$0xff]
      %v2273 = vld [vmem:[#allocation2 + $0x3a] sm:$0xff]
      %v2274 = vld [vmem:[#allocation2 + $0x4a] sm:$0xff]
      %v2275 = vld [vmem:[#allocation2 + $0x52] sm:$0xff]
      %v2276 = vld [vmem:[#allocation2 + $0x62] sm:$0xff]
      %v2277 = vld [vmem:[#allocation2 + $0x6a] sm:$0xff]
      %v2278 = vld [vmem:[#allocation2 + $0x7a] sm:$0xff]
      %v2279 = vld [vmem:[#allocation2 + $0x82] sm:$0xff]
      %v2280 = vld [vmem:[#allocation2 + $0x92] sm:$0xff]
      %v2281 = vld [vmem:[#allocation2 + $0x9a] sm:$0xff]
      %v2282 = vld [vmem:[#allocation2 + $0xaa] sm:$0xff]
      %v2283 = vld [vmem:[#allocation2 + $0xb2] sm:$0xff]
      %v2284 = vld [vmem:[#allocation2 + $0xc2] sm:$0xff]
      %v2285 = vld [vmem:[#allocation2 + $0xca] sm:$0xff]
      %v2286 = vld [vmem:[#allocation2 + $0xda] sm:$0xff]
      %v2287 = vld [vmem:[#allocation2 + $0xe2] sm:$0xff]
      %v2288 = vld [vmem:[#allocation2 + $0xf2] sm:$0xff]
      %v2289 = vld [vmem:[#allocation2 + $0xfa] sm:$0xff]
      %v2290 = vld [vmem:[#allocation2 + $0x10a] sm:$0xff]
      %v2291 = vld [vmem:[#allocation2 + $0x112] sm:$0xff]
      %v2292 = vld [vmem:[#allocation2 + $0x122] sm:$0xff]
      %v2293 = vld [vmem:[#allocation2 + $0x12a] sm:$0xff]
      %v2294 = vld [vmem:[#allocation2 + $0x13a] sm:$0xff]
      %v2295 = vld [vmem:[#allocation2 + $0x142] sm:$0xff]
      %v2296 = vld [vmem:[#allocation2 + $0x152] sm:$0xff]
      %v2297 = vld [vmem:[#allocation2 + $0x15a] sm:$0xff]
      %v2298 = vld [vmem:[#allocation2 + $0x16a] sm:$0xff]
      %v2299 = vld [vmem:[#allocation2 + $0x172] sm:$0xff]
      %v2300 = vld [vmem:[#allocation2 + $0x182] sm:$0xff]
      %v2301 = vld [vmem:[#allocation2 + $0x18a] sm:$0xff]
      %v2302 = vld [vmem:[#allocation2 + $0x19a] sm:$0xff]
      %v2303 = vld [vmem:[#allocation2 + $0x1a2] sm:$0xff]
      %2340 = vrot.lane.b32.xlu0 %v2268, 16
      %v2341 = vpop.permute.xlu0 %2340
      %2342 = vrot.lane.b32.xlu0 %v2269, 16
      %v2343 = vpop.permute.xlu0 %2342
      %2344 = vrot.lane.b32.xlu0 %v2270, 16
      %v2345 = vpop.permute.xlu0 %2344
      %2346 = vrot.lane.b32.xlu0 %v2271, 16
      %v2347 = vpop.permute.xlu0 %2346
      %2348 = vrot.lane.b32.xlu0 %v2272, 16
      %v2349 = vpop.permute.xlu0 %2348
      %2350 = vrot.lane.b32.xlu0 %v2273, 16
      %v2351 = vpop.permute.xlu0 %2350
      %2352 = vrot.lane.b32.xlu0 %v2274, 16
      %v2353 = vpop.permute.xlu0 %2352
      %2354 = vrot.lane.b32.xlu0 %v2275, 16
      %v2355 = vpop.permute.xlu0 %2354
      %2356 = vrot.lane.b32.xlu0 %v2276, 16
      %v2357 = vpop.permute.xlu0 %2356
      %2358 = vrot.lane.b32.xlu0 %v2277, 16
      %v2359 = vpop.permute.xlu0 %2358
      %2360 = vrot.lane.b32.xlu0 %v2278, 16
      %v2361 = vpop.permute.xlu0 %2360
      %2362 = vrot.lane.b32.xlu0 %v2279, 16
      %v2363 = vpop.permute.xlu0 %2362
      %2364 = vrot.lane.b32.xlu0 %v2280, 16
      %v2365 = vpop.permute.xlu0 %2364
      %2366 = vrot.lane.b32.xlu0 %v2281, 16
      %v2367 = vpop.permute.xlu0 %2366
      %2368 = vrot.lane.b32.xlu0 %v2282, 16
      %v2369 = vpop.permute.xlu0 %2368
      %2370 = vrot.lane.b32.xlu0 %v2283, 16
      %v2371 = vpop.permute.xlu0 %2370
      %2372 = vrot.lane.b32.xlu0 %v2284, 16
      %v2373 = vpop.permute.xlu0 %2372
      %2374 = vrot.lane.b32.xlu0 %v2285, 16
      %v2375 = vpop.permute.xlu0 %2374
      %2376 = vrot.lane.b32.xlu0 %v2286, 16
      %v2377 = vpop.permute.xlu0 %2376
      %2378 = vrot.lane.b32.xlu0 %v2287, 16
      %v2379 = vpop.permute.xlu0 %2378
      %2380 = vrot.lane.b32.xlu0 %v2288, 16
      %v2381 = vpop.permute.xlu0 %2380
      %2382 = vrot.lane.b32.xlu0 %v2289, 16
      %v2383 = vpop.permute.xlu0 %2382
      %2384 = vrot.lane.b32.xlu0 %v2290, 16
      %v2385 = vpop.permute.xlu0 %2384
      %2386 = vrot.lane.b32.xlu0 %v2291, 16
      %v2387 = vpop.permute.xlu0 %2386
      %2388 = vrot.lane.b32.xlu0 %v2292, 16
      %v2389 = vpop.permute.xlu0 %2388
      %2390 = vrot.lane.b32.xlu0 %v2293, 16
      %v2391 = vpop.permute.xlu0 %2390
      %2392 = vrot.lane.b32.xlu0 %v2294, 16
      %v2393 = vpop.permute.xlu0 %2392
      %2394 = vrot.lane.b32.xlu0 %v2295, 16
      %v2395 = vpop.permute.xlu0 %2394
      %2396 = vrot.lane.b32.xlu0 %v2296, 16
      %v2397 = vpop.permute.xlu0 %2396
      %2398 = vrot.lane.b32.xlu0 %v2297, 16
      %v2399 = vpop.permute.xlu0 %2398
      %2400 = vrot.lane.b32.xlu0 %v2298, 16
      %v2401 = vpop.permute.xlu0 %2400
      %2402 = vrot.lane.b32.xlu0 %v2299, 16
      %v2403 = vpop.permute.xlu0 %2402
      %2404 = vrot.lane.b32.xlu0 %v2300, 16
      %v2405 = vpop.permute.xlu0 %2404
      %2406 = vrot.lane.b32.xlu0 %v2301, 16
      %v2407 = vpop.permute.xlu0 %2406
      %2408 = vrot.lane.b32.xlu0 %v2302, 16
      %v2409 = vpop.permute.xlu0 %2408
      %2410 = vrot.lane.b32.xlu0 %v2303, 16
      %v2411 = vpop.permute.xlu0 %2410
      %2448 = vst.msk [vmem:[#allocation3] sm:$0xff] %vm784, %v2341
      %2449 = vst.msk [vmem:[#allocation3 + $0x8] sm:$0xff] %vm784, %v2343
      %2450 = vst.msk [vmem:[#allocation3 + $0x10] sm:$0xff] %vm784, %v2345
      %2451 = vst.msk [vmem:[#allocation3 + $0x18] sm:$0xff] %vm784, %v2347
      %2452 = vst.msk [vmem:[#allocation3 + $0x20] sm:$0xff] %vm784, %v2349
      %2453 = vst.msk [vmem:[#allocation3 + $0x28] sm:$0xff] %vm784, %v2351
      %2454 = vst.msk [vmem:[#allocation3 + $0x30] sm:$0xff] %vm784, %v2353
      %2455 = vst.msk [vmem:[#allocation3 + $0x38] sm:$0xff] %vm784, %v2355
      %2456 = vst.msk [vmem:[#allocation3 + $0x40] sm:$0xff] %vm784, %v2357
      %2457 = vst.msk [vmem:[#allocation3 + $0x48] sm:$0xff] %vm784, %v2359
      %2458 = vst.msk [vmem:[#allocation3 + $0x50] sm:$0xff] %vm784, %v2361
      %2459 = vst.msk [vmem:[#allocation3 + $0x58] sm:$0xff] %vm784, %v2363
      %2460 = vst.msk [vmem:[#allocation3 + $0x60] sm:$0xff] %vm784, %v2365
      %2461 = vst.msk [vmem:[#allocation3 + $0x68] sm:$0xff] %vm784, %v2367
      %2462 = vst.msk [vmem:[#allocation3 + $0x70] sm:$0xff] %vm784, %v2369
      %2463 = vst.msk [vmem:[#allocation3 + $0x78] sm:$0xff] %vm784, %v2371
      %2464 = vst.msk [vmem:[#allocation3 + $0x80] sm:$0xff] %vm784, %v2373
      %2465 = vst.msk [vmem:[#allocation3 + $0x88] sm:$0xff] %vm784, %v2375
      %2466 = vst.msk [vmem:[#allocation3 + $0x90] sm:$0xff] %vm784, %v2377
      %2467 = vst.msk [vmem:[#allocation3 + $0x98] sm:$0xff] %vm784, %v2379
      %2468 = vst.msk [vmem:[#allocation3 + $0xa0] sm:$0xff] %vm784, %v2381
      %2469 = vst.msk [vmem:[#allocation3 + $0xa8] sm:$0xff] %vm784, %v2383
      %2470 = vst.msk [vmem:[#allocation3 + $0xb0] sm:$0xff] %vm784, %v2385
      %2471 = vst.msk [vmem:[#allocation3 + $0xb8] sm:$0xff] %vm784, %v2387
      %2472 = vst.msk [vmem:[#allocation3 + $0xc0] sm:$0xff] %vm784, %v2389
      %2473 = vst.msk [vmem:[#allocation3 + $0xc8] sm:$0xff] %vm784, %v2391
      %2474 = vst.msk [vmem:[#allocation3 + $0xd0] sm:$0xff] %vm784, %v2393
      %2475 = vst.msk [vmem:[#allocation3 + $0xd8] sm:$0xff] %vm784, %v2395
      %2476 = vst.msk [vmem:[#allocation3 + $0xe0] sm:$0xff] %vm784, %v2397
      %2477 = vst.msk [vmem:[#allocation3 + $0xe8] sm:$0xff] %vm784, %v2399
      %2478 = vst.msk [vmem:[#allocation3 + $0xf0] sm:$0xff] %vm784, %v2401
      %2479 = vst.msk [vmem:[#allocation3 + $0xf8] sm:$0xff] %vm784, %v2403
      %2480 = vst.msk [vmem:[#allocation3 + $0x100] sm:$0xff] %vm784, %v2405
      %2481 = vst.msk [vmem:[#allocation3 + $0x108] sm:$0xff] %vm784, %v2407
      %2482 = vst.msk [vmem:[#allocation3 + $0x110] sm:$0xff] %vm784, %v2409
      %2483 = vst.msk [vmem:[#allocation3 + $0x118] sm:$0xff] %vm784, %v2411
      %v2484 = vld [vmem:[#allocation3] sm:$0xff]
      %v2485 = vld [vmem:[#allocation3 + $0x8] sm:$0xff]
      %v2486 = vld [vmem:[#allocation3 + $0x10] sm:$0xff]
      %v2487 = vld [vmem:[#allocation3 + $0x18] sm:$0xff]
      %v2488 = vld [vmem:[#allocation3 + $0x20] sm:$0xff]
      %v2489 = vld [vmem:[#allocation3 + $0x28] sm:$0xff]
      %v2490 = vld [vmem:[#allocation3 + $0x30] sm:$0xff]
      %v2491 = vld [vmem:[#allocation3 + $0x38] sm:$0xff]
      %v2492 = vld [vmem:[#allocation3 + $0x40] sm:$0xff]
      %v2493 = vld [vmem:[#allocation3 + $0x48] sm:$0xff]
      %v2494 = vld [vmem:[#allocation3 + $0x50] sm:$0xff]
      %v2495 = vld [vmem:[#allocation3 + $0x58] sm:$0xff]
      %v2496 = vld [vmem:[#allocation3 + $0x60] sm:$0xff]
      %v2497 = vld [vmem:[#allocation3 + $0x68] sm:$0xff]
      %v2498 = vld [vmem:[#allocation3 + $0x70] sm:$0xff]
      %v2499 = vld [vmem:[#allocation3 + $0x78] sm:$0xff]
      %v2500 = vld [vmem:[#allocation3 + $0x80] sm:$0xff]
      %v2501 = vld [vmem:[#allocation3 + $0x88] sm:$0xff]
      %v2502 = vld [vmem:[#allocation3 + $0x90] sm:$0xff]
      %v2503 = vld [vmem:[#allocation3 + $0x98] sm:$0xff]
      %v2504 = vld [vmem:[#allocation3 + $0xa0] sm:$0xff]
      %v2505 = vld [vmem:[#allocation3 + $0xa8] sm:$0xff]
      %v2506 = vld [vmem:[#allocation3 + $0xb0] sm:$0xff]
      %v2507 = vld [vmem:[#allocation3 + $0xb8] sm:$0xff]
      %v2508 = vld [vmem:[#allocation3 + $0xc0] sm:$0xff]
      %v2509 = vld [vmem:[#allocation3 + $0xc8] sm:$0xff]
      %v2510 = vld [vmem:[#allocation3 + $0xd0] sm:$0xff]
      %v2511 = vld [vmem:[#allocation3 + $0xd8] sm:$0xff]
      %v2512 = vld [vmem:[#allocation3 + $0xe0] sm:$0xff]
      %v2513 = vld [vmem:[#allocation3 + $0xe8] sm:$0xff]
      %v2514 = vld [vmem:[#allocation3 + $0xf0] sm:$0xff]
      %v2515 = vld [vmem:[#allocation3 + $0xf8] sm:$0xff]
      %v2516 = vld [vmem:[%s2] sm:$0xff]
      %v2517 = vld [vmem:[%s2 + $0x8] sm:$0xff]
      %v2518 = vld [vmem:[%s2 + $0x10] sm:$0xff]
      %v2519 = vld [vmem:[%s856] sm:$0xff]
      %v2520 = vld [vmem:[%s856 + $0x8] sm:$0xff]
      %v2521 = vld [vmem:[%s856 + $0x10] sm:$0xff]
      %v2522 = vld [vmem:[%s856 + $0x18] sm:$0xff]
      %v2523 = vld [vmem:[%s856 + $0x20] sm:$0xff]
      %v2524 = vld [vmem:[%s856 + $0x28] sm:$0xff]
      %v2525 = vld [vmem:[%s856 + $0x30] sm:$0xff]
      %v2526 = vld [vmem:[%s856 + $0x38] sm:$0xff]
      %v2527 = vld [vmem:[%s856 + $0x40] sm:$0xff]
      %v2528 = vld [vmem:[%s856 + $0x48] sm:$0xff]
      %v2529 = vld [vmem:[%s856 + $0x50] sm:$0xff]
      %v2530 = vld [vmem:[%s856 + $0x58] sm:$0xff]
      %v2531 = vld [vmem:[%s856 + $0x60] sm:$0xff]
      %v2532 = vld [vmem:[%s856 + $0x68] sm:$0xff]
      %v2533 = vld [vmem:[%s856 + $0x70] sm:$0xff]
      %v2534 = vld [vmem:[%s856 + $0x78] sm:$0xff]
      %v2535 = vld [vmem:[%s856 + $0x80] sm:$0xff]
      %v2536 = vld [vmem:[%s856 + $0x88] sm:$0xff]
      %v2537 = vld [vmem:[%s856 + $0x90] sm:$0xff]
      %v2538 = vld [vmem:[%s856 + $0x98] sm:$0xff]
      %v2539 = vld [vmem:[%s856 + $0xa0] sm:$0xff]
      %v2540 = vld [vmem:[%s856 + $0xa8] sm:$0xff]
      %v2541 = vld [vmem:[%s856 + $0xb0] sm:$0xff]
      %v2542 = vld [vmem:[%s856 + $0xb8] sm:$0xff]
      %v2543 = vld [vmem:[%s856 + $0xc0] sm:$0xff]
      %v2544 = vld [vmem:[%s856 + $0xc8] sm:$0xff]
      %v2545 = vld [vmem:[%s856 + $0xd0] sm:$0xff]
      %v2546 = vld [vmem:[%s856 + $0xd8] sm:$0xff]
      %v2547 = vld [vmem:[%s856 + $0xe0] sm:$0xff]
      %v2548 = vld [vmem:[%s856 + $0xe8] sm:$0xff]
      %v2549 = vld [vmem:[%s856 + $0xf0] sm:$0xff]
      %v2550 = vld [vmem:[%s856 + $0xf8] sm:$0xff]
      %s2551 = scalar_lea.vmem %s2, 24
      %v2552 = vld [vmem:[%s2551] sm:$0xff]
      %v2553 = vld [vmem:[%s2551 + $0x8] sm:$0xff]
      %v2554 = vld [vmem:[%s2551 + $0x10] sm:$0xff]
      %v2556 = vsel %vm893, %v2519, 0
      %v2559 = vsel %vm893, %v2520, 0
      %v2562 = vsel %vm893, %v2521, 0
      %v2565 = vsel %vm893, %v2522, 0
      %v2568 = vsel %vm893, %v2523, 0
      %v2571 = vsel %vm893, %v2524, 0
      %v2574 = vsel %vm893, %v2525, 0
      %v2577 = vsel %vm893, %v2526, 0
      %v2580 = vsel %vm893, %v2527, 0
      %v2583 = vsel %vm893, %v2528, 0
      %v2586 = vsel %vm893, %v2529, 0
      %v2589 = vsel %vm893, %v2530, 0
      %v2592 = vsel %vm893, %v2531, 0
      %v2595 = vsel %vm893, %v2532, 0
      %v2598 = vsel %vm893, %v2533, 0
      %v2601 = vsel %vm893, %v2534, 0
      %v2604 = vsel %vm893, %v2535, 0
      %v2607 = vsel %vm893, %v2536, 0
      %v2610 = vsel %vm893, %v2537, 0
      %v2613 = vsel %vm893, %v2538, 0
      %v2616 = vsel %vm893, %v2539, 0
      %v2619 = vsel %vm893, %v2540, 0
      %v2622 = vsel %vm893, %v2541, 0
      %v2625 = vsel %vm893, %v2542, 0
      %v2628 = vsel %vm893, %v2543, 0
      %v2631 = vsel %vm893, %v2544, 0
      %v2634 = vsel %vm893, %v2545, 0
      %v2637 = vsel %vm893, %v2546, 0
      %v2640 = vsel %vm893, %v2547, 0
      %v2643 = vsel %vm893, %v2548, 0
      %v2646 = vsel %vm893, %v2549, 0
      %v2649 = vsel %vm893, %v2550, 0
      %2651 = vmatpush.msra.mxu0 0.0
      %2652 = vmatpush.msra.mxu0 0.0
      %2653 = vmatpush.msra.mxu0 0.0
      %2654 = vmatpush.msra.mxu0 0.0
      %2655 = vmatpush.msra.mxu0 0.0
      %2656 = vmatpush.msra.mxu0 0.0
      %2657 = vmatpush.msra.mxu0 0.0
      %2658 = vmatpush.msra.mxu0 0.0
      %2659 = vmatpush.msra.mxu0 0.0
      %2660 = vmatpush.msra.mxu0 0.0
      %2661 = vmatpush.msra.mxu0 0.0
      %2662 = vmatpush.msra.mxu0 0.0
      %2663 = vmatpush.msra.mxu0 0.0
      %2664 = vmatpush.msra.mxu0 %v2554
      %2665 = vmatpush.msra.mxu0 %v2553
      %2666 = vmatpush.msra.mxu0 %v2552
      %2667 = vmatmul.f32.gmra.mxu0 %v2556
      %v2668 = vpop.f32.mrf.mxu0
      %v2669 = vadd.f32 0.0, %v2668
      %2670 = vmatmul.f32.gmra.mxu0 %v2559
      %v2671 = vpop.f32.mrf.mxu0
      %v2672 = vadd.f32 0.0, %v2671
      %2673 = vmatmul.f32.gmra.mxu0 %v2562
      %v2674 = vpop.f32.mrf.mxu0
      %v2675 = vadd.f32 0.0, %v2674
      %2676 = vmatmul.f32.gmra.mxu0 %v2565
      %v2677 = vpop.f32.mrf.mxu0
      %v2678 = vadd.f32 0.0, %v2677
      %2679 = vmatmul.f32.gmra.mxu0 %v2568
      %v2680 = vpop.f32.mrf.mxu0
      %v2681 = vadd.f32 0.0, %v2680
      %2682 = vmatmul.f32.gmra.mxu0 %v2571
      %v2683 = vpop.f32.mrf.mxu0
      %v2684 = vadd.f32 0.0, %v2683
      %2685 = vmatmul.f32.gmra.mxu0 %v2574
      %v2686 = vpop.f32.mrf.mxu0
      %v2687 = vadd.f32 0.0, %v2686
      %2688 = vmatmul.f32.gmra.mxu0 %v2577
      %v2689 = vpop.f32.mrf.mxu0
      %v2690 = vadd.f32 0.0, %v2689
      %2691 = vmatmul.f32.gmra.mxu0 %v2580
      %v2692 = vpop.f32.mrf.mxu0
      %v2693 = vadd.f32 0.0, %v2692
      %2694 = vmatmul.f32.gmra.mxu0 %v2583
      %v2695 = vpop.f32.mrf.mxu0
      %v2696 = vadd.f32 0.0, %v2695
      %2697 = vmatmul.f32.gmra.mxu0 %v2586
      %v2698 = vpop.f32.mrf.mxu0
      %v2699 = vadd.f32 0.0, %v2698
      %2700 = vmatmul.f32.gmra.mxu0 %v2589
      %v2701 = vpop.f32.mrf.mxu0
      %v2702 = vadd.f32 0.0, %v2701
      %2703 = vmatmul.f32.gmra.mxu0 %v2592
      %v2704 = vpop.f32.mrf.mxu0
      %v2705 = vadd.f32 0.0, %v2704
      %2706 = vmatmul.f32.gmra.mxu0 %v2595
      %v2707 = vpop.f32.mrf.mxu0
      %v2708 = vadd.f32 0.0, %v2707
      %2709 = vmatmul.f32.gmra.mxu0 %v2598
      %v2710 = vpop.f32.mrf.mxu0
      %v2711 = vadd.f32 0.0, %v2710
      %2712 = vmatmul.f32.gmra.mxu0 %v2601
      %v2713 = vpop.f32.mrf.mxu0
      %v2714 = vadd.f32 0.0, %v2713
      %2715 = vmatmul.f32.gmra.mxu0 %v2604
      %v2716 = vpop.f32.mrf.mxu0
      %v2717 = vadd.f32 0.0, %v2716
      %2718 = vmatmul.f32.gmra.mxu0 %v2607
      %v2719 = vpop.f32.mrf.mxu0
      %v2720 = vadd.f32 0.0, %v2719
      %2721 = vmatmul.f32.gmra.mxu0 %v2610
      %v2722 = vpop.f32.mrf.mxu0
      %v2723 = vadd.f32 0.0, %v2722
      %2724 = vmatmul.f32.gmra.mxu0 %v2613
      %v2725 = vpop.f32.mrf.mxu0
      %v2726 = vadd.f32 0.0, %v2725
      %2727 = vmatmul.f32.gmra.mxu0 %v2616
      %v2728 = vpop.f32.mrf.mxu0
      %v2729 = vadd.f32 0.0, %v2728
      %2730 = vmatmul.f32.gmra.mxu0 %v2619
      %v2731 = vpop.f32.mrf.mxu0
      %v2732 = vadd.f32 0.0, %v2731
      %2733 = vmatmul.f32.gmra.mxu0 %v2622
      %v2734 = vpop.f32.mrf.mxu0
      %v2735 = vadd.f32 0.0, %v2734
      %2736 = vmatmul.f32.gmra.mxu0 %v2625
      %v2737 = vpop.f32.mrf.mxu0
      %v2738 = vadd.f32 0.0, %v2737
      %2739 = vmatmul.f32.gmra.mxu0 %v2628
      %v2740 = vpop.f32.mrf.mxu0
      %v2741 = vadd.f32 0.0, %v2740
      %2742 = vmatmul.f32.gmra.mxu0 %v2631
      %v2743 = vpop.f32.mrf.mxu0
      %v2744 = vadd.f32 0.0, %v2743
      %2745 = vmatmul.f32.gmra.mxu0 %v2634
      %v2746 = vpop.f32.mrf.mxu0
      %v2747 = vadd.f32 0.0, %v2746
      %2748 = vmatmul.f32.gmra.mxu0 %v2637
      %v2749 = vpop.f32.mrf.mxu0
      %v2750 = vadd.f32 0.0, %v2749
      %2751 = vmatmul.f32.gmra.mxu0 %v2640
      %v2752 = vpop.f32.mrf.mxu0
      %v2753 = vadd.f32 0.0, %v2752
      %2754 = vmatmul.f32.gmra.mxu0 %v2643
      %v2755 = vpop.f32.mrf.mxu0
      %v2756 = vadd.f32 0.0, %v2755
      %2757 = vmatmul.f32.gmra.mxu0 %v2646
      %v2758 = vpop.f32.mrf.mxu0
      %v2759 = vadd.f32 0.0, %v2758
      %2760 = vmatmul.f32.gmra.mxu0 %v2649
      %v2761 = vpop.f32.mrf.mxu0
      %v2762 = vadd.f32 0.0, %v2761
      %2763 = vdwg.mxu0
      %v2765 = vsel %vm893, %v2484, 0
      %v2768 = vsel %vm893, %v2485, 0
      %v2771 = vsel %vm893, %v2486, 0
      %v2774 = vsel %vm893, %v2487, 0
      %v2777 = vsel %vm893, %v2488, 0
      %v2780 = vsel %vm893, %v2489, 0
      %v2783 = vsel %vm893, %v2490, 0
      %v2786 = vsel %vm893, %v2491, 0
      %v2789 = vsel %vm893, %v2492, 0
      %v2792 = vsel %vm893, %v2493, 0
      %v2795 = vsel %vm893, %v2494, 0
      %v2798 = vsel %vm893, %v2495, 0
      %v2801 = vsel %vm893, %v2496, 0
      %v2804 = vsel %vm893, %v2497, 0
      %v2807 = vsel %vm893, %v2498, 0
      %v2810 = vsel %vm893, %v2499, 0
      %v2813 = vsel %vm893, %v2500, 0
      %v2816 = vsel %vm893, %v2501, 0
      %v2819 = vsel %vm893, %v2502, 0
      %v2822 = vsel %vm893, %v2503, 0
      %v2825 = vsel %vm893, %v2504, 0
      %v2828 = vsel %vm893, %v2505, 0
      %v2831 = vsel %vm893, %v2506, 0
      %v2834 = vsel %vm893, %v2507, 0
      %v2837 = vsel %vm893, %v2508, 0
      %v2840 = vsel %vm893, %v2509, 0
      %v2843 = vsel %vm893, %v2510, 0
      %v2846 = vsel %vm893, %v2511, 0
      %v2849 = vsel %vm893, %v2512, 0
      %v2852 = vsel %vm893, %v2513, 0
      %v2855 = vsel %vm893, %v2514, 0
      %v2858 = vsel %vm893, %v2515, 0
      %2860 = vmatpush.msra.mxu0 0.0
      %2861 = vmatpush.msra.mxu0 0.0
      %2862 = vmatpush.msra.mxu0 0.0
      %2863 = vmatpush.msra.mxu0 0.0
      %2864 = vmatpush.msra.mxu0 0.0
      %2865 = vmatpush.msra.mxu0 0.0
      %2866 = vmatpush.msra.mxu0 0.0
      %2867 = vmatpush.msra.mxu0 0.0
      %2868 = vmatpush.msra.mxu0 0.0
      %2869 = vmatpush.msra.mxu0 0.0
      %2870 = vmatpush.msra.mxu0 0.0
      %2871 = vmatpush.msra.mxu0 0.0
      %2872 = vmatpush.msra.mxu0 0.0
      %2873 = vmatpush.msra.mxu0 %v2518
      %2874 = vmatpush.msra.mxu0 %v2517
      %2875 = vmatpush.msra.mxu0 %v2516
      %2876 = vmatmul.f32.gmra.mxu0 %v2765
      %v2877 = vpop.f32.mrf.mxu0
      %v2878 = vadd.f32 %v2669, %v2877
      %2879 = vmatmul.f32.gmra.mxu0 %v2768
      %v2880 = vpop.f32.mrf.mxu0
      %v2881 = vadd.f32 %v2672, %v2880
      %2882 = vmatmul.f32.gmra.mxu0 %v2771
      %v2883 = vpop.f32.mrf.mxu0
      %v2884 = vadd.f32 %v2675, %v2883
      %2885 = vmatmul.f32.gmra.mxu0 %v2774
      %v2886 = vpop.f32.mrf.mxu0
      %v2887 = vadd.f32 %v2678, %v2886
      %2888 = vmatmul.f32.gmra.mxu0 %v2777
      %v2889 = vpop.f32.mrf.mxu0
      %v2890 = vadd.f32 %v2681, %v2889
      %2891 = vmatmul.f32.gmra.mxu0 %v2780
      %v2892 = vpop.f32.mrf.mxu0
      %v2893 = vadd.f32 %v2684, %v2892
      %2894 = vmatmul.f32.gmra.mxu0 %v2783
      %v2895 = vpop.f32.mrf.mxu0
      %v2896 = vadd.f32 %v2687, %v2895
      %2897 = vmatmul.f32.gmra.mxu0 %v2786
      %v2898 = vpop.f32.mrf.mxu0
      %v2899 = vadd.f32 %v2690, %v2898
      %2900 = vmatmul.f32.gmra.mxu0 %v2789
      %v2901 = vpop.f32.mrf.mxu0
      %v2902 = vadd.f32 %v2693, %v2901
      %2903 = vmatmul.f32.gmra.mxu0 %v2792
      %v2904 = vpop.f32.mrf.mxu0
      %v2905 = vadd.f32 %v2696, %v2904
      %2906 = vmatmul.f32.gmra.mxu0 %v2795
      %v2907 = vpop.f32.mrf.mxu0
      %v2908 = vadd.f32 %v2699, %v2907
      %2909 = vmatmul.f32.gmra.mxu0 %v2798
      %v2910 = vpop.f32.mrf.mxu0
      %v2911 = vadd.f32 %v2702, %v2910
      %2912 = vmatmul.f32.gmra.mxu0 %v2801
      %v2913 = vpop.f32.mrf.mxu0
      %v2914 = vadd.f32 %v2705, %v2913
      %2915 = vmatmul.f32.gmra.mxu0 %v2804
      %v2916 = vpop.f32.mrf.mxu0
      %v2917 = vadd.f32 %v2708, %v2916
      %2918 = vmatmul.f32.gmra.mxu0 %v2807
      %v2919 = vpop.f32.mrf.mxu0
      %v2920 = vadd.f32 %v2711, %v2919
      %2921 = vmatmul.f32.gmra.mxu0 %v2810
      %v2922 = vpop.f32.mrf.mxu0
      %v2923 = vadd.f32 %v2714, %v2922
      %2924 = vmatmul.f32.gmra.mxu0 %v2813
      %v2925 = vpop.f32.mrf.mxu0
      %v2926 = vadd.f32 %v2717, %v2925
      %2927 = vmatmul.f32.gmra.mxu0 %v2816
      %v2928 = vpop.f32.mrf.mxu0
      %v2929 = vadd.f32 %v2720, %v2928
      %2930 = vmatmul.f32.gmra.mxu0 %v2819
      %v2931 = vpop.f32.mrf.mxu0
      %v2932 = vadd.f32 %v2723, %v2931
      %2933 = vmatmul.f32.gmra.mxu0 %v2822
      %v2934 = vpop.f32.mrf.mxu0
      %v2935 = vadd.f32 %v2726, %v2934
      %2936 = vmatmul.f32.gmra.mxu0 %v2825
      %v2937 = vpop.f32.mrf.mxu0
      %v2938 = vadd.f32 %v2729, %v2937
      %2939 = vmatmul.f32.gmra.mxu0 %v2828
      %v2940 = vpop.f32.mrf.mxu0
      %v2941 = vadd.f32 %v2732, %v2940
      %2942 = vmatmul.f32.gmra.mxu0 %v2831
      %v2943 = vpop.f32.mrf.mxu0
      %v2944 = vadd.f32 %v2735, %v2943
      %2945 = vmatmul.f32.gmra.mxu0 %v2834
      %v2946 = vpop.f32.mrf.mxu0
      %v2947 = vadd.f32 %v2738, %v2946
      %2948 = vmatmul.f32.gmra.mxu0 %v2837
      %v2949 = vpop.f32.mrf.mxu0
      %v2950 = vadd.f32 %v2741, %v2949
      %2951 = vmatmul.f32.gmra.mxu0 %v2840
      %v2952 = vpop.f32.mrf.mxu0
      %v2953 = vadd.f32 %v2744, %v2952
      %2954 = vmatmul.f32.gmra.mxu0 %v2843
      %v2955 = vpop.f32.mrf.mxu0
      %v2956 = vadd.f32 %v2747, %v2955
      %2957 = vmatmul.f32.gmra.mxu0 %v2846
      %v2958 = vpop.f32.mrf.mxu0
      %v2959 = vadd.f32 %v2750, %v2958
      %2960 = vmatmul.f32.gmra.mxu0 %v2849
      %v2961 = vpop.f32.mrf.mxu0
      %v2962 = vadd.f32 %v2753, %v2961
      %2963 = vmatmul.f32.gmra.mxu0 %v2852
      %v2964 = vpop.f32.mrf.mxu0
      %v2965 = vadd.f32 %v2756, %v2964
      %2966 = vmatmul.f32.gmra.mxu0 %v2855
      %v2967 = vpop.f32.mrf.mxu0
      %v2968 = vadd.f32 %v2759, %v2967
      %2969 = vmatmul.f32.gmra.mxu0 %v2858
      %v2970 = vpop.f32.mrf.mxu0
      %v2971 = vadd.f32 %v2762, %v2970
      %2972 = vdwg.mxu0
      %v2973 = vld [vmem:[%s1312] sm:$0xff]
      %v2974 = vld [vmem:[%s1312 + $0x8] sm:$0xff]
      %v2975 = vld [vmem:[%s1312 + $0x10] sm:$0xff]
      %v2976 = vld [vmem:[%s1312 + $0x18] sm:$0xff]
      %v2977 = vld [vmem:[%s1312 + $0x20] sm:$0xff]
      %v2978 = vld [vmem:[%s1312 + $0x28] sm:$0xff]
      %v2979 = vld [vmem:[%s1312 + $0x30] sm:$0xff]
      %v2980 = vld [vmem:[%s1312 + $0x38] sm:$0xff]
      %v2981 = vld [vmem:[%s1312 + $0x40] sm:$0xff]
      %v2982 = vld [vmem:[%s1312 + $0x48] sm:$0xff]
      %v2983 = vld [vmem:[%s1312 + $0x50] sm:$0xff]
      %v2984 = vld [vmem:[%s1312 + $0x58] sm:$0xff]
      %v2985 = vld [vmem:[%s1312 + $0x60] sm:$0xff]
      %v2986 = vld [vmem:[%s1312 + $0x68] sm:$0xff]
      %v2987 = vld [vmem:[%s1312 + $0x70] sm:$0xff]
      %v2988 = vld [vmem:[%s1312 + $0x78] sm:$0xff]
      %v2989 = vld [vmem:[%s1312 + $0x80] sm:$0xff]
      %v2990 = vld [vmem:[%s1312 + $0x88] sm:$0xff]
      %v2991 = vld [vmem:[%s1312 + $0x90] sm:$0xff]
      %v2992 = vld [vmem:[%s1312 + $0x98] sm:$0xff]
      %v2993 = vld [vmem:[%s1312 + $0xa0] sm:$0xff]
      %v2994 = vld [vmem:[%s1312 + $0xa8] sm:$0xff]
      %v2995 = vld [vmem:[%s1312 + $0xb0] sm:$0xff]
      %v2996 = vld [vmem:[%s1312 + $0xb8] sm:$0xff]
      %v2997 = vld [vmem:[%s1312 + $0xc0] sm:$0xff]
      %v2998 = vld [vmem:[%s1312 + $0xc8] sm:$0xff]
      %v2999 = vld [vmem:[%s1312 + $0xd0] sm:$0xff]
      %v3000 = vld [vmem:[%s1312 + $0xd8] sm:$0xff]
      %v3001 = vld [vmem:[%s1312 + $0xe0] sm:$0xff]
      %v3002 = vld [vmem:[%s1312 + $0xe8] sm:$0xff]
      %v3003 = vld [vmem:[%s1312 + $0xf0] sm:$0xff]
      %v3004 = vld [vmem:[%s1312 + $0xf8] sm:$0xff]
      %s3005 = scalar_lea.vmem %s2, 48
      %v3006 = vld [vmem:[%s3005] sm:$0xff]
      %v3007 = vld [vmem:[%s3005 + $0x8] sm:$0xff]
      %v3008 = vld [vmem:[%s3005 + $0x10] sm:$0xff]
      %v3010 = vsel %vm893, %v2973, 0
      %v3013 = vsel %vm893, %v2974, 0
      %v3016 = vsel %vm893, %v2975, 0
      %v3019 = vsel %vm893, %v2976, 0
      %v3022 = vsel %vm893, %v2977, 0
      %v3025 = vsel %vm893, %v2978, 0
      %v3028 = vsel %vm893, %v2979, 0
      %v3031 = vsel %vm893, %v2980, 0
      %v3034 = vsel %vm893, %v2981, 0
      %v3037 = vsel %vm893, %v2982, 0
      %v3040 = vsel %vm893, %v2983, 0
      %v3043 = vsel %vm893, %v2984, 0
      %v3046 = vsel %vm893, %v2985, 0
      %v3049 = vsel %vm893, %v2986, 0
      %v3052 = vsel %vm893, %v2987, 0
      %v3055 = vsel %vm893, %v2988, 0
      %v3058 = vsel %vm893, %v2989, 0
      %v3061 = vsel %vm893, %v2990, 0
      %v3064 = vsel %vm893, %v2991, 0
      %v3067 = vsel %vm893, %v2992, 0
      %v3070 = vsel %vm893, %v2993, 0
      %v3073 = vsel %vm893, %v2994, 0
      %v3076 = vsel %vm893, %v2995, 0
      %v3079 = vsel %vm893, %v2996, 0
      %v3082 = vsel %vm893, %v2997, 0
      %v3085 = vsel %vm893, %v2998, 0
      %v3088 = vsel %vm893, %v2999, 0
      %v3091 = vsel %vm893, %v3000, 0
      %v3094 = vsel %vm893, %v3001, 0
      %v3097 = vsel %vm893, %v3002, 0
      %v3100 = vsel %vm893, %v3003, 0
      %v3103 = vsel %vm893, %v3004, 0
      %3105 = vmatpush.msra.mxu0 0.0
      %3106 = vmatpush.msra.mxu0 0.0
      %3107 = vmatpush.msra.mxu0 0.0
      %3108 = vmatpush.msra.mxu0 0.0
      %3109 = vmatpush.msra.mxu0 0.0
      %3110 = vmatpush.msra.mxu0 0.0
      %3111 = vmatpush.msra.mxu0 0.0
      %3112 = vmatpush.msra.mxu0 0.0
      %3113 = vmatpush.msra.mxu0 0.0
      %3114 = vmatpush.msra.mxu0 0.0
      %3115 = vmatpush.msra.mxu0 0.0
      %3116 = vmatpush.msra.mxu0 0.0
      %3117 = vmatpush.msra.mxu0 0.0
      %3118 = vmatpush.msra.mxu0 %v3008
      %3119 = vmatpush.msra.mxu0 %v3007
      %3120 = vmatpush.msra.mxu0 %v3006
      %3121 = vmatmul.f32.gmra.mxu0 %v3010
      %v3122 = vpop.f32.mrf.mxu0
      %v3123 = vadd.f32 0.0, %v3122
      %3124 = vmatmul.f32.gmra.mxu0 %v3013
      %v3125 = vpop.f32.mrf.mxu0
      %v3126 = vadd.f32 0.0, %v3125
      %3127 = vmatmul.f32.gmra.mxu0 %v3016
      %v3128 = vpop.f32.mrf.mxu0
      %v3129 = vadd.f32 0.0, %v3128
      %3130 = vmatmul.f32.gmra.mxu0 %v3019
      %v3131 = vpop.f32.mrf.mxu0
      %v3132 = vadd.f32 0.0, %v3131
      %3133 = vmatmul.f32.gmra.mxu0 %v3022
      %v3134 = vpop.f32.mrf.mxu0
      %v3135 = vadd.f32 0.0, %v3134
      %3136 = vmatmul.f32.gmra.mxu0 %v3025
      %v3137 = vpop.f32.mrf.mxu0
      %v3138 = vadd.f32 0.0, %v3137
      %3139 = vmatmul.f32.gmra.mxu0 %v3028
      %v3140 = vpop.f32.mrf.mxu0
      %v3141 = vadd.f32 0.0, %v3140
      %3142 = vmatmul.f32.gmra.mxu0 %v3031
      %v3143 = vpop.f32.mrf.mxu0
      %v3144 = vadd.f32 0.0, %v3143
      %3145 = vmatmul.f32.gmra.mxu0 %v3034
      %v3146 = vpop.f32.mrf.mxu0
      %v3147 = vadd.f32 0.0, %v3146
      %3148 = vmatmul.f32.gmra.mxu0 %v3037
      %v3149 = vpop.f32.mrf.mxu0
      %v3150 = vadd.f32 0.0, %v3149
      %3151 = vmatmul.f32.gmra.mxu0 %v3040
      %v3152 = vpop.f32.mrf.mxu0
      %v3153 = vadd.f32 0.0, %v3152
      %3154 = vmatmul.f32.gmra.mxu0 %v3043
      %v3155 = vpop.f32.mrf.mxu0
      %v3156 = vadd.f32 0.0, %v3155
      %3157 = vmatmul.f32.gmra.mxu0 %v3046
      %v3158 = vpop.f32.mrf.mxu0
      %v3159 = vadd.f32 0.0, %v3158
      %3160 = vmatmul.f32.gmra.mxu0 %v3049
      %v3161 = vpop.f32.mrf.mxu0
      %v3162 = vadd.f32 0.0, %v3161
      %3163 = vmatmul.f32.gmra.mxu0 %v3052
      %v3164 = vpop.f32.mrf.mxu0
      %v3165 = vadd.f32 0.0, %v3164
      %3166 = vmatmul.f32.gmra.mxu0 %v3055
      %v3167 = vpop.f32.mrf.mxu0
      %v3168 = vadd.f32 0.0, %v3167
      %3169 = vmatmul.f32.gmra.mxu0 %v3058
      %v3170 = vpop.f32.mrf.mxu0
      %v3171 = vadd.f32 0.0, %v3170
      %3172 = vmatmul.f32.gmra.mxu0 %v3061
      %v3173 = vpop.f32.mrf.mxu0
      %v3174 = vadd.f32 0.0, %v3173
      %3175 = vmatmul.f32.gmra.mxu0 %v3064
      %v3176 = vpop.f32.mrf.mxu0
      %v3177 = vadd.f32 0.0, %v3176
      %3178 = vmatmul.f32.gmra.mxu0 %v3067
      %v3179 = vpop.f32.mrf.mxu0
      %v3180 = vadd.f32 0.0, %v3179
      %3181 = vmatmul.f32.gmra.mxu0 %v3070
      %v3182 = vpop.f32.mrf.mxu0
      %v3183 = vadd.f32 0.0, %v3182
      %3184 = vmatmul.f32.gmra.mxu0 %v3073
      %v3185 = vpop.f32.mrf.mxu0
      %v3186 = vadd.f32 0.0, %v3185
      %3187 = vmatmul.f32.gmra.mxu0 %v3076
      %v3188 = vpop.f32.mrf.mxu0
      %v3189 = vadd.f32 0.0, %v3188
      %3190 = vmatmul.f32.gmra.mxu0 %v3079
      %v3191 = vpop.f32.mrf.mxu0
      %v3192 = vadd.f32 0.0, %v3191
      %3193 = vmatmul.f32.gmra.mxu0 %v3082
      %v3194 = vpop.f32.mrf.mxu0
      %v3195 = vadd.f32 0.0, %v3194
      %3196 = vmatmul.f32.gmra.mxu0 %v3085
      %v3197 = vpop.f32.mrf.mxu0
      %v3198 = vadd.f32 0.0, %v3197
      %3199 = vmatmul.f32.gmra.mxu0 %v3088
      %v3200 = vpop.f32.mrf.mxu0
      %v3201 = vadd.f32 0.0, %v3200
      %3202 = vmatmul.f32.gmra.mxu0 %v3091
      %v3203 = vpop.f32.mrf.mxu0
      %v3204 = vadd.f32 0.0, %v3203
      %3205 = vmatmul.f32.gmra.mxu0 %v3094
      %v3206 = vpop.f32.mrf.mxu0
      %v3207 = vadd.f32 0.0, %v3206
      %3208 = vmatmul.f32.gmra.mxu0 %v3097
      %v3209 = vpop.f32.mrf.mxu0
      %v3210 = vadd.f32 0.0, %v3209
      %3211 = vmatmul.f32.gmra.mxu0 %v3100
      %v3212 = vpop.f32.mrf.mxu0
      %v3213 = vadd.f32 0.0, %v3212
      %3214 = vmatmul.f32.gmra.mxu0 %v3103
      %v3215 = vpop.f32.mrf.mxu0
      %v3216 = vadd.f32 0.0, %v3215
      %3217 = vdwg.mxu0
      %v3218 = vadd.f32 %v2878, %v3123
      %v3219 = vadd.f32 %v2881, %v3126
      %v3220 = vadd.f32 %v2884, %v3129
      %v3221 = vadd.f32 %v2887, %v3132
      %v3222 = vadd.f32 %v2890, %v3135
      %v3223 = vadd.f32 %v2893, %v3138
      %v3224 = vadd.f32 %v2896, %v3141
      %v3225 = vadd.f32 %v2899, %v3144
      %v3226 = vadd.f32 %v2902, %v3147
      %v3227 = vadd.f32 %v2905, %v3150
      %v3228 = vadd.f32 %v2908, %v3153
      %v3229 = vadd.f32 %v2911, %v3156
      %v3230 = vadd.f32 %v2914, %v3159
      %v3231 = vadd.f32 %v2917, %v3162
      %v3232 = vadd.f32 %v2920, %v3165
      %v3233 = vadd.f32 %v2923, %v3168
      %v3234 = vadd.f32 %v2926, %v3171
      %v3235 = vadd.f32 %v2929, %v3174
      %v3236 = vadd.f32 %v2932, %v3177
      %v3237 = vadd.f32 %v2935, %v3180
      %v3238 = vadd.f32 %v2938, %v3183
      %v3239 = vadd.f32 %v2941, %v3186
      %v3240 = vadd.f32 %v2944, %v3189
      %v3241 = vadd.f32 %v2947, %v3192
      %v3242 = vadd.f32 %v2950, %v3195
      %v3243 = vadd.f32 %v2953, %v3198
      %v3244 = vadd.f32 %v2956, %v3201
      %v3245 = vadd.f32 %v2959, %v3204
      %v3246 = vadd.f32 %v2962, %v3207
      %v3247 = vadd.f32 %v2965, %v3210
      %v3248 = vadd.f32 %v2968, %v3213
      %v3249 = vadd.f32 %v2971, %v3216
      %v3250 = vsel %vm204, %v3218, 0.0
      %v3251 = vsel %vm204, %v3219, 0.0
      %v3252 = vadd.f32 %v3250, %v3251
      %v3253 = vsel %vm204, %v3220, 0.0
      %v3254 = vadd.f32 %v3252, %v3253
      %v3255 = vsel %vm204, %v3221, 0.0
      %v3256 = vadd.f32 %v3254, %v3255
      %v3257 = vsel %vm204, %v3222, 0.0
      %v3258 = vadd.f32 %v3256, %v3257
      %v3259 = vsel %vm204, %v3223, 0.0
      %v3260 = vadd.f32 %v3258, %v3259
      %v3261 = vsel %vm204, %v3224, 0.0
      %v3262 = vadd.f32 %v3260, %v3261
      %v3263 = vsel %vm204, %v3225, 0.0
      %v3264 = vadd.f32 %v3262, %v3263
      %v3265 = vsel %vm204, %v3226, 0.0
      %v3266 = vadd.f32 %v3264, %v3265
      %v3267 = vsel %vm204, %v3227, 0.0
      %v3268 = vadd.f32 %v3266, %v3267
      %v3269 = vsel %vm204, %v3228, 0.0
      %v3270 = vadd.f32 %v3268, %v3269
      %v3271 = vsel %vm204, %v3229, 0.0
      %v3272 = vadd.f32 %v3270, %v3271
      %v3273 = vsel %vm204, %v3230, 0.0
      %v3274 = vadd.f32 %v3272, %v3273
      %v3275 = vsel %vm204, %v3231, 0.0
      %v3276 = vadd.f32 %v3274, %v3275
      %v3277 = vsel %vm204, %v3232, 0.0
      %v3278 = vadd.f32 %v3276, %v3277
      %v3279 = vsel %vm204, %v3233, 0.0
      %v3280 = vadd.f32 %v3278, %v3279
      %v3281 = vsel %vm204, %v3234, 0.0
      %v3282 = vadd.f32 %v3280, %v3281
      %v3283 = vsel %vm204, %v3235, 0.0
      %v3284 = vadd.f32 %v3282, %v3283
      %v3285 = vsel %vm204, %v3236, 0.0
      %v3286 = vadd.f32 %v3284, %v3285
      %v3287 = vsel %vm204, %v3237, 0.0
      %v3288 = vadd.f32 %v3286, %v3287
      %v3289 = vsel %vm204, %v3238, 0.0
      %v3290 = vadd.f32 %v3288, %v3289
      %v3291 = vsel %vm204, %v3239, 0.0
      %v3292 = vadd.f32 %v3290, %v3291
      %v3293 = vsel %vm204, %v3240, 0.0
      %v3294 = vadd.f32 %v3292, %v3293
      %v3295 = vsel %vm204, %v3241, 0.0
      %v3296 = vadd.f32 %v3294, %v3295
      %v3297 = vsel %vm204, %v3242, 0.0
      %v3298 = vadd.f32 %v3296, %v3297
      %v3299 = vsel %vm204, %v3243, 0.0
      %v3300 = vadd.f32 %v3298, %v3299
      %v3301 = vsel %vm204, %v3244, 0.0
      %v3302 = vadd.f32 %v3300, %v3301
      %v3303 = vsel %vm204, %v3245, 0.0
      %v3304 = vadd.f32 %v3302, %v3303
      %v3305 = vsel %vm204, %v3246, 0.0
      %v3306 = vadd.f32 %v3304, %v3305
      %v3307 = vsel %vm204, %v3247, 0.0
      %v3308 = vadd.f32 %v3306, %v3307
      %v3309 = vsel %vm204, %v3248, 0.0
      %v3310 = vadd.f32 %v3308, %v3309
      %v3311 = vsel %vm204, %v3249, 0.0
      %v3312 = vadd.f32 %v3310, %v3311
      %v3313 = vrot.slane %v3312, 4
      %v3314 = vadd.f32 %v3312, %v3313
      %v3315 = vrot.slane %v3314, 2
      %v3316 = vadd.f32 %v3314, %v3315
      %v3317 = vrot.slane %v3316, 1
      %v3318 = vadd.f32 %v3316, %v3317
      %v3319 = vmul.f32 %v3318, 0.00390625
      %v3320 = vmul.f32 %v3218, %v3218
      %v3321 = vmul.f32 %v3219, %v3219
      %v3322 = vmul.f32 %v3220, %v3220
      %v3323 = vmul.f32 %v3221, %v3221
      %v3324 = vmul.f32 %v3222, %v3222
      %v3325 = vmul.f32 %v3223, %v3223
      %v3326 = vmul.f32 %v3224, %v3224
      %v3327 = vmul.f32 %v3225, %v3225
      %v3328 = vmul.f32 %v3226, %v3226
      %v3329 = vmul.f32 %v3227, %v3227
      %v3330 = vmul.f32 %v3228, %v3228
      %v3331 = vmul.f32 %v3229, %v3229
      %v3332 = vmul.f32 %v3230, %v3230
      %v3333 = vmul.f32 %v3231, %v3231
      %v3334 = vmul.f32 %v3232, %v3232
      %v3335 = vmul.f32 %v3233, %v3233
      %v3336 = vmul.f32 %v3234, %v3234
      %v3337 = vmul.f32 %v3235, %v3235
      %v3338 = vmul.f32 %v3236, %v3236
      %v3339 = vmul.f32 %v3237, %v3237
      %v3340 = vmul.f32 %v3238, %v3238
      %v3341 = vmul.f32 %v3239, %v3239
      %v3342 = vmul.f32 %v3240, %v3240
      %v3343 = vmul.f32 %v3241, %v3241
      %v3344 = vmul.f32 %v3242, %v3242
      %v3345 = vmul.f32 %v3243, %v3243
      %v3346 = vmul.f32 %v3244, %v3244
      %v3347 = vmul.f32 %v3245, %v3245
      %v3348 = vmul.f32 %v3246, %v3246
      %v3349 = vmul.f32 %v3247, %v3247
      %v3350 = vmul.f32 %v3248, %v3248
      %v3351 = vmul.f32 %v3249, %v3249
      %v3352 = vsel %vm204, %v3320, 0.0
      %v3353 = vsel %vm204, %v3321, 0.0
      %v3354 = vadd.f32 %v3352, %v3353
      %v3355 = vsel %vm204, %v3322, 0.0
      %v3356 = vadd.f32 %v3354, %v3355
      %v3357 = vsel %vm204, %v3323, 0.0
      %v3358 = vadd.f32 %v3356, %v3357
      %v3359 = vsel %vm204, %v3324, 0.0
      %v3360 = vadd.f32 %v3358, %v3359
      %v3361 = vsel %vm204, %v3325, 0.0
      %v3362 = vadd.f32 %v3360, %v3361
      %v3363 = vsel %vm204, %v3326, 0.0
      %v3364 = vadd.f32 %v3362, %v3363
      %v3365 = vsel %vm204, %v3327, 0.0
      %v3366 = vadd.f32 %v3364, %v3365
      %v3367 = vsel %vm204, %v3328, 0.0
      %v3368 = vadd.f32 %v3366, %v3367
      %v3369 = vsel %vm204, %v3329, 0.0
      %v3370 = vadd.f32 %v3368, %v3369
      %v3371 = vsel %vm204, %v3330, 0.0
      %v3372 = vadd.f32 %v3370, %v3371
      %v3373 = vsel %vm204, %v3331, 0.0
      %v3374 = vadd.f32 %v3372, %v3373
      %v3375 = vsel %vm204, %v3332, 0.0
      %v3376 = vadd.f32 %v3374, %v3375
      %v3377 = vsel %vm204, %v3333, 0.0
      %v3378 = vadd.f32 %v3376, %v3377
      %v3379 = vsel %vm204, %v3334, 0.0
      %v3380 = vadd.f32 %v3378, %v3379
      %v3381 = vsel %vm204, %v3335, 0.0
      %v3382 = vadd.f32 %v3380, %v3381
      %v3383 = vsel %vm204, %v3336, 0.0
      %v3384 = vadd.f32 %v3382, %v3383
      %v3385 = vsel %vm204, %v3337, 0.0
      %v3386 = vadd.f32 %v3384, %v3385
      %v3387 = vsel %vm204, %v3338, 0.0
      %v3388 = vadd.f32 %v3386, %v3387
      %v3389 = vsel %vm204, %v3339, 0.0
      %v3390 = vadd.f32 %v3388, %v3389
      %v3391 = vsel %vm204, %v3340, 0.0
      %v3392 = vadd.f32 %v3390, %v3391
      %v3393 = vsel %vm204, %v3341, 0.0
      %v3394 = vadd.f32 %v3392, %v3393
      %v3395 = vsel %vm204, %v3342, 0.0
      %v3396 = vadd.f32 %v3394, %v3395
      %v3397 = vsel %vm204, %v3343, 0.0
      %v3398 = vadd.f32 %v3396, %v3397
      %v3399 = vsel %vm204, %v3344, 0.0
      %v3400 = vadd.f32 %v3398, %v3399
      %v3401 = vsel %vm204, %v3345, 0.0
      %v3402 = vadd.f32 %v3400, %v3401
      %v3403 = vsel %vm204, %v3346, 0.0
      %v3404 = vadd.f32 %v3402, %v3403
      %v3405 = vsel %vm204, %v3347, 0.0
      %v3406 = vadd.f32 %v3404, %v3405
      %v3407 = vsel %vm204, %v3348, 0.0
      %v3408 = vadd.f32 %v3406, %v3407
      %v3409 = vsel %vm204, %v3349, 0.0
      %v3410 = vadd.f32 %v3408, %v3409
      %v3411 = vsel %vm204, %v3350, 0.0
      %v3412 = vadd.f32 %v3410, %v3411
      %v3413 = vsel %vm204, %v3351, 0.0
      %v3414 = vadd.f32 %v3412, %v3413
      %v3415 = vrot.slane %v3414, 4
      %v3416 = vadd.f32 %v3414, %v3415
      %v3417 = vrot.slane %v3416, 2
      %v3418 = vadd.f32 %v3416, %v3417
      %v3419 = vrot.slane %v3418, 1
      %v3420 = vadd.f32 %v3418, %v3419
      %v3421 = vmul.f32 %v3420, 0.00390625
      %v3422 = vmul.f32 %v3319, %v3319
      %v3423 = vsub.f32 %v3421, %v3422
      %v3424 = vmax.f32 %v3423, 0.0
      %v3425 = vsub.f32 %v3218, %v3319
      %v3426 = vsub.f32 %v3219, %v3319
      %v3427 = vsub.f32 %v3220, %v3319
      %v3428 = vsub.f32 %v3221, %v3319
      %v3429 = vsub.f32 %v3222, %v3319
      %v3430 = vsub.f32 %v3223, %v3319
      %v3431 = vsub.f32 %v3224, %v3319
      %v3432 = vsub.f32 %v3225, %v3319
      %v3433 = vsub.f32 %v3226, %v3319
      %v3434 = vsub.f32 %v3227, %v3319
      %v3435 = vsub.f32 %v3228, %v3319
      %v3436 = vsub.f32 %v3229, %v3319
      %v3437 = vsub.f32 %v3230, %v3319
      %v3438 = vsub.f32 %v3231, %v3319
      %v3439 = vsub.f32 %v3232, %v3319
      %v3440 = vsub.f32 %v3233, %v3319
      %v3441 = vsub.f32 %v3234, %v3319
      %v3442 = vsub.f32 %v3235, %v3319
      %v3443 = vsub.f32 %v3236, %v3319
      %v3444 = vsub.f32 %v3237, %v3319
      %v3445 = vsub.f32 %v3238, %v3319
      %v3446 = vsub.f32 %v3239, %v3319
      %v3447 = vsub.f32 %v3240, %v3319
      %v3448 = vsub.f32 %v3241, %v3319
      %v3449 = vsub.f32 %v3242, %v3319
      %v3450 = vsub.f32 %v3243, %v3319
      %v3451 = vsub.f32 %v3244, %v3319
      %v3452 = vsub.f32 %v3245, %v3319
      %v3453 = vsub.f32 %v3246, %v3319
      %v3454 = vsub.f32 %v3247, %v3319
      %v3455 = vsub.f32 %v3248, %v3319
      %v3456 = vsub.f32 %v3249, %v3319
      %v3457 = vadd.f32 %v3424, 1e-05
      %v3458 = vrsqrt.pop %v3457
      %v3459 = vmul.f32 %v3458, %v3457
      %v3460 = vmul.f32 %v3459, %v3458
      %v3461 = vmul.f32 0.5, %v3460
      %v3462 = vsub.f32 1.5, %v3461
      %v3463 = vmul.f32 %v3458, %v3462
      %vm3464 = vweird.f32 %v3457
      %vm3465 = vweird.f32 %v3458
      %vm3466 = vmor %vm3464, %vm3465
      %v3467 = vsel %vm3466, %v3458, %v3463
      %v3468 = vmul.f32 %v3425, %v3467
      %v3469 = vmul.f32 %v3426, %v3467
      %v3470 = vmul.f32 %v3427, %v3467
      %v3471 = vmul.f32 %v3428, %v3467
      %v3472 = vmul.f32 %v3429, %v3467
      %v3473 = vmul.f32 %v3430, %v3467
      %v3474 = vmul.f32 %v3431, %v3467
      %v3475 = vmul.f32 %v3432, %v3467
      %v3476 = vmul.f32 %v3433, %v3467
      %v3477 = vmul.f32 %v3434, %v3467
      %v3478 = vmul.f32 %v3435, %v3467
      %v3479 = vmul.f32 %v3436, %v3467
      %v3480 = vmul.f32 %v3437, %v3467
      %v3481 = vmul.f32 %v3438, %v3467
      %v3482 = vmul.f32 %v3439, %v3467
      %v3483 = vmul.f32 %v3440, %v3467
      %v3484 = vmul.f32 %v3441, %v3467
      %v3485 = vmul.f32 %v3442, %v3467
      %v3486 = vmul.f32 %v3443, %v3467
      %v3487 = vmul.f32 %v3444, %v3467
      %v3488 = vmul.f32 %v3445, %v3467
      %v3489 = vmul.f32 %v3446, %v3467
      %v3490 = vmul.f32 %v3447, %v3467
      %v3491 = vmul.f32 %v3448, %v3467
      %v3492 = vmul.f32 %v3449, %v3467
      %v3493 = vmul.f32 %v3450, %v3467
      %v3494 = vmul.f32 %v3451, %v3467
      %v3495 = vmul.f32 %v3452, %v3467
      %v3496 = vmul.f32 %v3453, %v3467
      %v3497 = vmul.f32 %v3454, %v3467
      %v3498 = vmul.f32 %v3455, %v3467
      %v3499 = vmul.f32 %v3456, %v3467
      %v3500 = vld [vmem:[%s165] sm:$0xff]
      %v3501 = vld [vmem:[%s165 + $0x8] sm:$0xff]
      %v3502 = vld [vmem:[%s165 + $0x10] sm:$0xff]
      %v3503 = vld [vmem:[%s165 + $0x18] sm:$0xff]
      %v3504 = vld [vmem:[%s165 + $0x20] sm:$0xff]
      %v3505 = vld [vmem:[%s165 + $0x28] sm:$0xff]
      %v3506 = vld [vmem:[%s165 + $0x30] sm:$0xff]
      %v3507 = vld [vmem:[%s165 + $0x38] sm:$0xff]
      %v3508 = vld [vmem:[%s165 + $0x40] sm:$0xff]
      %v3509 = vld [vmem:[%s165 + $0x48] sm:$0xff]
      %v3510 = vld [vmem:[%s165 + $0x50] sm:$0xff]
      %v3511 = vld [vmem:[%s165 + $0x58] sm:$0xff]
      %v3512 = vld [vmem:[%s165 + $0x60] sm:$0xff]
      %v3513 = vld [vmem:[%s165 + $0x68] sm:$0xff]
      %v3514 = vld [vmem:[%s165 + $0x70] sm:$0xff]
      %v3515 = vld [vmem:[%s165 + $0x78] sm:$0xff]
      %v3516 = vld [vmem:[%s165 + $0x80] sm:$0xff]
      %v3517 = vld [vmem:[%s165 + $0x88] sm:$0xff]
      %v3518 = vld [vmem:[%s165 + $0x90] sm:$0xff]
      %v3519 = vld [vmem:[%s165 + $0x98] sm:$0xff]
      %v3520 = vld [vmem:[%s165 + $0xa0] sm:$0xff]
      %v3521 = vld [vmem:[%s165 + $0xa8] sm:$0xff]
      %v3522 = vld [vmem:[%s165 + $0xb0] sm:$0xff]
      %v3523 = vld [vmem:[%s165 + $0xb8] sm:$0xff]
      %v3524 = vld [vmem:[%s165 + $0xc0] sm:$0xff]
      %v3525 = vld [vmem:[%s165 + $0xc8] sm:$0xff]
      %v3526 = vld [vmem:[%s165 + $0xd0] sm:$0xff]
      %v3527 = vld [vmem:[%s165 + $0xd8] sm:$0xff]
      %v3528 = vld [vmem:[%s165 + $0xe0] sm:$0xff]
      %v3529 = vld [vmem:[%s165 + $0xe8] sm:$0xff]
      %v3530 = vld [vmem:[%s165 + $0xf0] sm:$0xff]
      %v3531 = vld [vmem:[%s165 + $0xf8] sm:$0xff]
      %v3532 = vadd.f32 %v3500, %v3468
      %v3533 = vadd.f32 %v3501, %v3469
      %v3534 = vadd.f32 %v3502, %v3470
      %v3535 = vadd.f32 %v3503, %v3471
      %v3536 = vadd.f32 %v3504, %v3472
      %v3537 = vadd.f32 %v3505, %v3473
      %v3538 = vadd.f32 %v3506, %v3474
      %v3539 = vadd.f32 %v3507, %v3475
      %v3540 = vadd.f32 %v3508, %v3476
      %v3541 = vadd.f32 %v3509, %v3477
      %v3542 = vadd.f32 %v3510, %v3478
      %v3543 = vadd.f32 %v3511, %v3479
      %v3544 = vadd.f32 %v3512, %v3480
      %v3545 = vadd.f32 %v3513, %v3481
      %v3546 = vadd.f32 %v3514, %v3482
      %v3547 = vadd.f32 %v3515, %v3483
      %v3548 = vadd.f32 %v3516, %v3484
      %v3549 = vadd.f32 %v3517, %v3485
      %v3550 = vadd.f32 %v3518, %v3486
      %v3551 = vadd.f32 %v3519, %v3487
      %v3552 = vadd.f32 %v3520, %v3488
      %v3553 = vadd.f32 %v3521, %v3489
      %v3554 = vadd.f32 %v3522, %v3490
      %v3555 = vadd.f32 %v3523, %v3491
      %v3556 = vadd.f32 %v3524, %v3492
      %v3557 = vadd.f32 %v3525, %v3493
      %v3558 = vadd.f32 %v3526, %v3494
      %v3559 = vadd.f32 %v3527, %v3495
      %v3560 = vadd.f32 %v3528, %v3496
      %v3561 = vadd.f32 %v3529, %v3497
      %v3562 = vadd.f32 %v3530, %v3498
      %v3563 = vadd.f32 %v3531, %v3499
      %3564 = vst.msk [vmem:[%s170] sm:$0xff] %vm204, %v3532
      %3565 = vst.msk [vmem:[%s170 + $0x8] sm:$0xff] %vm204, %v3533
      %3566 = vst.msk [vmem:[%s170 + $0x10] sm:$0xff] %vm204, %v3534
      %3567 = vst.msk [vmem:[%s170 + $0x18] sm:$0xff] %vm204, %v3535
      %3568 = vst.msk [vmem:[%s170 + $0x20] sm:$0xff] %vm204, %v3536
      %3569 = vst.msk [vmem:[%s170 + $0x28] sm:$0xff] %vm204, %v3537
      %3570 = vst.msk [vmem:[%s170 + $0x30] sm:$0xff] %vm204, %v3538
      %3571 = vst.msk [vmem:[%s170 + $0x38] sm:$0xff] %vm204, %v3539
      %3572 = vst.msk [vmem:[%s170 + $0x40] sm:$0xff] %vm204, %v3540
      %3573 = vst.msk [vmem:[%s170 + $0x48] sm:$0xff] %vm204, %v3541
      %3574 = vst.msk [vmem:[%s170 + $0x50] sm:$0xff] %vm204, %v3542
      %3575 = vst.msk [vmem:[%s170 + $0x58] sm:$0xff] %vm204, %v3543
      %3576 = vst.msk [vmem:[%s170 + $0x60] sm:$0xff] %vm204, %v3544
      %3577 = vst.msk [vmem:[%s170 + $0x68] sm:$0xff] %vm204, %v3545
      %3578 = vst.msk [vmem:[%s170 + $0x70] sm:$0xff] %vm204, %v3546
      %3579 = vst.msk [vmem:[%s170 + $0x78] sm:$0xff] %vm204, %v3547
      %3580 = vst.msk [vmem:[%s170 + $0x80] sm:$0xff] %vm204, %v3548
      %3581 = vst.msk [vmem:[%s170 + $0x88] sm:$0xff] %vm204, %v3549
      %3582 = vst.msk [vmem:[%s170 + $0x90] sm:$0xff] %vm204, %v3550
      %3583 = vst.msk [vmem:[%s170 + $0x98] sm:$0xff] %vm204, %v3551
      %3584 = vst.msk [vmem:[%s170 + $0xa0] sm:$0xff] %vm204, %v3552
      %3585 = vst.msk [vmem:[%s170 + $0xa8] sm:$0xff] %vm204, %v3553
      %3586 = vst.msk [vmem:[%s170 + $0xb0] sm:$0xff] %vm204, %v3554
      %3587 = vst.msk [vmem:[%s170 + $0xb8] sm:$0xff] %vm204, %v3555
      %3588 = vst.msk [vmem:[%s170 + $0xc0] sm:$0xff] %vm204, %v3556
      %3589 = vst.msk [vmem:[%s170 + $0xc8] sm:$0xff] %vm204, %v3557
      %3590 = vst.msk [vmem:[%s170 + $0xd0] sm:$0xff] %vm204, %v3558
      %3591 = vst.msk [vmem:[%s170 + $0xd8] sm:$0xff] %vm204, %v3559
      %3592 = vst.msk [vmem:[%s170 + $0xe0] sm:$0xff] %vm204, %v3560
      %3593 = vst.msk [vmem:[%s170 + $0xe8] sm:$0xff] %vm204, %v3561
      %3594 = vst.msk [vmem:[%s170 + $0xf0] sm:$0xff] %vm204, %v3562
      %3595 = vst.msk [vmem:[%s170 + $0xf8] sm:$0xff] %vm204, %v3563
      %p3596 = scmp.lt.s32.totalorder %s14, 1
      %s3597 = scalar_select %p3596, %s14, 1
      %s3598 = smul.addr %s3597, 32
      %s3599 = smul.addr %s3598, 8
      %s3600 = scalar_lea.vmem %s3, %s3599
      // Predicated region
      $region33: #{tpu_custom_call.1} parent=31 // pred_check
        %p3601 = pneg %p100
      $region34: #{tpu_custom_call.1} parent=31 // pred_check_branch
        %3603 = sbr.rel (%p3601) target = $region36
      $region35: #{tpu_custom_call.1} parent=31 // pred_region
        _
      $region36: #{tpu_custom_call.1} parent=31 // pred_fallthru
        _
    $region32: #{tpu_custom_call.1} parent=5 // pred_fallthru
      _
    %p3604 = scmp.le.s32.totalorder 2, %s9
    // Predicated region
    $region37: #{tpu_custom_call.1} parent=5 // pred_check
      %p3605 = pneg %p3604
    $region38: #{tpu_custom_call.1} parent=5 // pred_check_branch
      %3607 = sbr.rel (%p3605) target = $region40
    $region39: #{tpu_custom_call.1} parent=5 // pred_region
      %s3608 = ssub.s32 %s9, 2
      // Predicated region
      $region41: #{tpu_custom_call.1} parent=39 // pred_check
        %p3609 = pneg %p106
      $region42: #{tpu_custom_call.1} parent=39 // pred_check_branch
        %3611 = sbr.rel (%p3609) target = $region44
      $region43: #{tpu_custom_call.1} parent=39 // pred_region
        %p3612 = scmp.lt.s32.totalorder %s15, 1
        %s3613 = scalar_select %p3612, %s15, 1
        %s3614 = smul.addr %s3613, 32
        %s3615 = smul.addr %s3614, 8
        %s3616 = scalar_lea.vmem %s3, %s3615
      $region44: #{tpu_custom_call.1} parent=39 // pred_fallthru
        _
    $region40: #{tpu_custom_call.1} parent=5 // pred_fallthru
      _
  $region6: #{tpu_custom_call.1} parent=0 // loop_footer
    %s13 = sadd.s32 1, %s9
  $region7: #{tpu_custom_call.1} parent=0 // loop_footer_branch
    %8 = sbr.rel target = $region3
  $region8: #{tpu_custom_call.1} parent=0 // loop_exit
    _

</llo_original>
